<compile_context>
chip_gen: v7x
topology: tpu7x:2x2x1
jax: 0.10.0
libtpu: 0.0.40
codegen_flags: <defaults>
</compile_context>

<pallas_src>
import functools
import math

import jax
import jax.numpy as jnp
from jax.experimental import pallas as pl
from jax.experimental.pallas import tpu as pltpu

EPS = 1e-6
HALF_LOG_2PI = 0.5 * math.log(2.0 * math.pi)


def gaussian_nll_kernel(loc_ref, util_ref, scale_ref, out_ref,
                        acc_nd_ref, acc_c_ref, *, batch, dim):
    b = pl.program_id(1)

    @pl.when(b == 0)
    def _():
        acc_nd_ref[...] = jnp.zeros_like(acc_nd_ref)
        acc_c_ref[...] = jnp.zeros_like(acc_c_ref)

    loc = loc_ref[...]                       # [tB, tN]
    sc = scale_ref[...] + EPS                # [tB, tN]   (scale.unsqueeze(-1) + eps)
    u = util_ref[...]                        # [tB, tN, D]

    # Hoisted [tB, tN] terms in their native lanes=tile_n layout
    # (exact divide; only tB*tN reciprocals, not tB*tN*D).
    inv_two_var = 1.0 / (2.0 * sc * sc)                      # [tB, tN]
    const_bn = dim * (jnp.log(sc) + HALF_LOG_2PI)            # [tB, tN]

    # Hot-path [tB, tN, D] work: subtract, square, per-(b,n) weight, then a cheap
    # leading-axis (batch) sum.  NO cross-lane (axis=-1) reduce here — that is
    # deferred to the finalize block below, so it runs once per N tile instead of
    # once per B step (review item 1, option (a)).
    diff = u - loc[:, :, None]
    wsq = diff * diff * inv_two_var[:, :, None]              # [tB, tN, D]
    acc_nd_ref[...] += jnp.sum(wsq, axis=0)                  # [tN, D]
    acc_c_ref[...] += jnp.sum(const_bn, axis=0, keepdims=True)  # [1, tN]

    @pl.when(b == pl.num_programs(1) - 1)
    def _():
        # Single deferred cross-lane reduce per N tile, then fold mean over B and
        # the extra 1/D factor into one scale; write the lane-dense (1, tN) output.
        ssq = jnp.sum(acc_nd_ref[...], axis=-1)              # [tN]
        out_ref[...] = (ssq[None, :] + acc_c_ref[...]) * (1.0 / (batch * dim))


def _pick_tile(total, target, align):
    """Largest divisor of `total` that is <= target and a multiple of `align`,
    falling back to `total` itself (a full dim is always a legal block size)."""
    if total <= target:
        return total
    t = max(align, (target // align) * align)
    while t >= align:
        if total % t == 0:
            return t
        t -= align
    return total


def _vmem_capacity_bytes():
    """Per-TensorCore VMEM capacity; conservative (v7x) fallback if unqueryable."""
    try:
        info = pltpu.get_tpu_info()
        cap = getattr(info, "vmem_capacity_bytes", None)
        if cap:
            return int(cap)
    except Exception:
        pass
    return 64 << 20


def custom_gaussian_nll_loss(loc, utilities, scale, *,
                             tile_n=None, tile_b=None, util_buffers=None):
    """loc, scale: [B, N] f32; utilities: [B, N, D] f32. Returns [N] f32."""
    B, N = loc.shape
    D = utilities.shape[-1]
    assert utilities.shape == (B, N, D) and scale.shape == (B, N)

    vmem_cap = _vmem_capacity_bytes()
    big_vmem = vmem_cap >= (100 << 20)       # v5e/v6e: 128 MiB; v7x: 64 MiB per TC

    # Tile selection.
    if tile_n is None:
        # Lane-dense N tiles; keep >=2 tiles when possible so the "parallel" N axis
        # can shard across the 2 TensorCores on v7x (harmless on 1-TC chips).
        target = 512
        if N >= 256:
            target = min(target, max(128, ((N // 2) // 128) * 128))
        tile_n = _pick_tile(N, target, 128)
    if tile_b is None:
        # Utilities per-buffer budget: ~24 MiB on 128-MiB-VMEM chips (v5e/v6e) to
        # amortize per-step overhead; ~10 MiB on v7x so double buffers + the
        # (tile_n, D) accumulator stay well under 64 MiB.
        buf_budget = (24 << 20) if big_vmem else (10 << 20)
        elem_budget = buf_budget // 4                    # f32 elements per buffer
        tb_target = max(8, elem_budget // max(1, tile_n * D))
        tile_b = _pick_tile(B, tb_target, 8)

    assert N % tile_n == 0 and B % tile_b == 0
    # (8,128)-layout constraints on the last two dims of every block.
    assert tile_n % 128 == 0 or tile_n == N, "tile_n must be a multiple of 128 or equal N"
    assert tile_b % 8 == 0 or tile_b == B, "tile_b must be a multiple of 8 or equal B"

    grid = (N // tile_n, B // tile_b)                    # reduction (B) axis last

    # VMEM budget: buffered utilities blocks + double-buffered small blocks +
    # scratch accumulators + headroom, clamped generation-aware (<= ~0.8 * capacity:
    # ~102 MiB on v5e/v6e, ~51 MiB on v7x).
    nbuf = 2 if util_buffers is None else int(util_buffers)
    util_block = tile_b * tile_n * D * 4
    small_blocks = 2 * tile_b * tile_n * 4 + tile_n * 4  # loc + scale + out blocks
    scratch = tile_n * D * 4 + tile_n * 4                # acc_nd + acc_c
    need = nbuf * util_block + 2 * small_blocks + scratch + (4 << 20)
    vmem_limit = int(min(max(need, 16 << 20), int(0.8 * vmem_cap)))

    kernel = functools.partial(gaussian_nll_kernel, batch=B, dim=D)

    util_spec_kwargs = {}
    if util_buffers is not None:
        # Optional deeper pipelining (e.g. 3 on v7x once compute is off the hot path);
        # sweep 2 vs 3 and keep whichever measures faster.
        util_spec_kwargs["pipeline_mode"] = pl.Buffered(nbuf)
    util_spec = pl.BlockSpec((tile_b, tile_n, D), lambda n, b: (b, n, 0),
                             **util_spec_kwargs)

    out = pl.pallas_call(
        kernel,
        out_shape=jax.ShapeDtypeStruct((1, N), jnp.float32),
        grid_spec=pltpu.PrefetchScalarGridSpec(
            num_scalar_prefetch=0,
            grid=grid,
            in_specs=[
                pl.BlockSpec((tile_b, tile_n), lambda n, b: (b, n)),   # loc
                util_spec,                                             # utilities
                pl.BlockSpec((tile_b, tile_n), lambda n, b: (b, n)),   # scale
            ],
            out_specs=pl.BlockSpec((1, tile_n), lambda n, b: (0, n)),
            scratch_shapes=[
                pltpu.VMEM((tile_n, D), jnp.float32),   # deferred-reduce accumulator
                pltpu.VMEM((1, tile_n), jnp.float32),   # per-(n) constant-term accumulator
            ],
        ),
        compiler_params=pltpu.CompilerParams(
            dimension_semantics=("parallel", "arbitrary"),
            vmem_limit_bytes=vmem_limit,
        ),
    )(loc, utilities, scale)
    return out.reshape(N)


def reference_loss(loc, utilities, scale):
    """Pure-JAX reference mirroring the PyTorch module."""
    loc = loc[..., None]
    scale = scale[..., None] + EPS
    log_prob = (
        -0.5 * ((utilities - loc) / scale) ** 2
        - jnp.log(scale)
        - 0.5 * jnp.log(2.0 * jnp.pi)
    )
    log_p = jnp.sum(log_prob, axis=-1)
    loss = -jnp.mean(log_p, axis=0)
    return loss / utilities.shape[-1]


if __name__ == "__main__":
    key = jax.random.PRNGKey(0)
    k_loc, k_util, k_scale = jax.random.split(key, 3)

    B, N, D = 16, 256, 128
    loc = jax.random.normal(k_loc, (B, N), dtype=jnp.float32)
    utilities = jax.random.normal(k_util, (B, N, D), dtype=jnp.float32)
    # scale must be positive (Normal's stddev)
    scale = jnp.abs(jax.random.normal(k_scale, (B, N), dtype=jnp.float32)) + 0.5

    ref = reference_loss(loc, utilities, scale)

    # Auto-tiled path (N splits into 2 parallel tiles, single B step).
    out_auto = jax.block_until_ready(custom_gaussian_nll_loss(loc, utilities, scale))
    # Forced multi-tile path: grid = (2, 2) exercises the deferred-reduce accumulation
    # across multiple B steps plus the parallel N tiling.
    out_tiled = jax.block_until_ready(
        custom_gaussian_nll_loss(loc, utilities, scale, tile_n=128, tile_b=8)
    )

    assert out_auto.shape == (N,) and out_tiled.shape == (N,)
    assert jnp.allclose(out_auto, ref, rtol=1e-5, atol=1e-5), (out_auto, ref)
    assert jnp.allclose(out_tiled, ref, rtol=1e-5, atol=1e-5), (out_tiled, ref)

    print("KERNEL_OK")
</pallas_src>

<mosaic_0001>
module attributes {stable_mosaic.version = 11 : i64} {
  func.func @gaussian_nll_kernel(%arg0: i32, %arg1: i32, %arg2: memref<16x128xf32, #tpu.memory_space<vmem>>, %arg3: memref<16x128x128xf32, #tpu.memory_space<vmem>>, %arg4: memref<16x128xf32, #tpu.memory_space<vmem>>, %arg5: memref<1x128xf32, #tpu.memory_space<vmem>>, %arg6: memref<128x128xf32, #tpu.memory_space<vmem>>, %arg7: memref<1x128xf32, #tpu.memory_space<vmem>>) attributes {dimension_semantics = [#tpu.dimension_semantics<parallel>, #tpu.dimension_semantics<arbitrary>], iteration_bounds = array<i64: 2, 1>, scalar_prefetch = 0 : i64, scratch_operands = 2 : i64, tpu.core_type = #tpu.core_type<tc>, window_params = [{transform_indices = @transform_0, window_bounds = array<i64: 16, 128>}, {transform_indices = @transform_1, window_bounds = array<i64: 16, 128, 128>}, {transform_indices = @transform_2, window_bounds = array<i64: 16, 128>}, {transform_indices = @transform_3, window_bounds = array<i64: 1, 128>}]} {
    %c0_i32 = arith.constant 0 : i32
    %0 = arith.cmpi eq, %arg1, %c0_i32 : i32
    %1 = arith.extui %0 : i1 to i32
    %c0_i32_0 = arith.constant 0 : i32
    %2 = arith.cmpi ne, %1, %c0_i32_0 : i32
    scf.if %2 {
      %cst_23 = arith.constant 0.000000e+00 : f32
      %37 = vector.broadcast %cst_23 : f32 to vector<128x128xf32>
      %c0_24 = arith.constant 0 : index
      %c0_25 = arith.constant 0 : index
      %38 = vector.load %arg6[%c0_24, %c0_25] : memref<128x128xf32, #tpu.memory_space<vmem>>, vector<128x128xf32>
      tpu.vector_store %arg6[%c0_24, %c0_25], %37 {strides = array<i32>} : memref<128x128xf32, #tpu.memory_space<vmem>>, vector<128x128xf32>,
      %cst_26 = arith.constant 0.000000e+00 : f32
      %39 = vector.broadcast %cst_26 : f32 to vector<1x128xf32>
      %c0_27 = arith.constant 0 : index
      %c0_28 = arith.constant 0 : index
      %40 = vector.load %arg7[%c0_27, %c0_28] : memref<1x128xf32, #tpu.memory_space<vmem>>, vector<1x128xf32>
      tpu.vector_store %arg7[%c0_27, %c0_28], %39 {strides = array<i32>} : memref<1x128xf32, #tpu.memory_space<vmem>>, vector<1x128xf32>,
    } else {
    }
    %c0 = arith.constant 0 : index
    %c0_1 = arith.constant 0 : index
    %3 = vector.load %arg2[%c0, %c0_1] : memref<16x128xf32, #tpu.memory_space<vmem>>, vector<16x128xf32>
    %c0_2 = arith.constant 0 : index
    %c0_3 = arith.constant 0 : index
    %4 = vector.load %arg4[%c0_2, %c0_3] : memref<16x128xf32, #tpu.memory_space<vmem>>, vector<16x128xf32>
    %cst = arith.constant 9.99999997E-7 : f32
    %5 = vector.broadcast %cst : f32 to vector<16x128xf32>
    %6 = arith.addf %4, %5 : vector<16x128xf32>
    %c0_4 = arith.constant 0 : index
    %c0_5 = arith.constant 0 : index
    %c0_6 = arith.constant 0 : index
    %7 = vector.load %arg3[%c0_4, %c0_5, %c0_6] : memref<16x128x128xf32, #tpu.memory_space<vmem>>, vector<16x128x128xf32>
    %cst_7 = arith.constant 2.000000e+00 : f32
    %8 = vector.broadcast %cst_7 : f32 to vector<16x128xf32>
    %9 = arith.mulf %8, %6 : vector<16x128xf32>
    %10 = arith.mulf %9, %6 : vector<16x128xf32>
    %cst_8 = arith.constant 1.000000e+00 : f32
    %11 = vector.broadcast %cst_8 : f32 to vector<16x128xf32>
    %12 = arith.divf %11, %10 : vector<16x128xf32>
    %13 = math.log %6 : vector<16x128xf32>
    %cst_9 = arith.constant 0.918938517 : f32
    %14 = vector.broadcast %cst_9 : f32 to vector<16x128xf32>
    %15 = arith.addf %13, %14 : vector<16x128xf32>
    %cst_10 = arith.constant 1.280000e+02 : f32
    %16 = vector.broadcast %cst_10 : f32 to vector<16x128xf32>
    %17 = arith.mulf %16, %15 : vector<16x128xf32>
    %18 = vector.shape_cast %3 : vector<16x128xf32> to vector<16x128x1xf32>
    %19 = vector.broadcast %18 : vector<16x128x1xf32> to vector<16x128x128xf32>
    %20 = arith.subf %7, %19 : vector<16x128x128xf32>
    %21 = arith.mulf %20, %20 : vector<16x128x128xf32>
    %22 = vector.shape_cast %12 : vector<16x128xf32> to vector<16x128x1xf32>
    %23 = vector.broadcast %22 : vector<16x128x1xf32> to vector<16x128x128xf32>
    %24 = arith.mulf %21, %23 : vector<16x128x128xf32>
    %c0_11 = arith.constant 0 : index
    %c0_12 = arith.constant 0 : index
    %25 = vector.load %arg6[%c0_11, %c0_12] : memref<128x128xf32, #tpu.memory_space<vmem>>, vector<128x128xf32>
    %cst_13 = arith.constant dense<0.000000e+00> : vector<128x128xf32>
    %26 = vector.multi_reduction <add>, %24, %cst_13 [0] : vector<16x128x128xf32> to vector<128x128xf32>
    %27 = arith.addf %25, %26 : vector<128x128xf32>
    %c0_14 = arith.constant 0 : index
    %c0_15 = arith.constant 0 : index
    %28 = vector.load %arg6[%c0_14, %c0_15] : memref<128x128xf32, #tpu.memory_space<vmem>>, vector<128x128xf32>
    tpu.vector_store %arg6[%c0_14, %c0_15], %27 {strides = array<i32>} : memref<128x128xf32, #tpu.memory_space<vmem>>, vector<128x128xf32>,
    %c0_16 = arith.constant 0 : index
    %c0_17 = arith.constant 0 : index
    %29 = vector.load %arg7[%c0_16, %c0_17] : memref<1x128xf32, #tpu.memory_space<vmem>>, vector<1x128xf32>
    %cst_18 = arith.constant dense<0.000000e+00> : vector<128xf32>
    %30 = vector.multi_reduction <add>, %17, %cst_18 [0] : vector<16x128xf32> to vector<128xf32>
    %31 = vector.shape_cast %30 : vector<128xf32> to vector<1x128xf32>
    %32 = arith.addf %29, %31 : vector<1x128xf32>
    %c0_19 = arith.constant 0 : index
    %c0_20 = arith.constant 0 : index
    %33 = vector.load %arg7[%c0_19, %c0_20] : memref<1x128xf32, #tpu.memory_space<vmem>>, vector<1x128xf32>
    tpu.vector_store %arg7[%c0_19, %c0_20], %32 {strides = array<i32>} : memref<1x128xf32, #tpu.memory_space<vmem>>, vector<1x128xf32>,
    %c0_i32_21 = arith.constant 0 : i32
    %34 = arith.cmpi eq, %arg1, %c0_i32_21 : i32
    %35 = arith.extui %34 : i1 to i32
    %c0_i32_22 = arith.constant 0 : i32
    %36 = arith.cmpi ne, %35, %c0_i32_22 : i32
    scf.if %36 {
      %c0_23 = arith.constant 0 : index
      %c0_24 = arith.constant 0 : index
      %37 = vector.load %arg6[%c0_23, %c0_24] : memref<128x128xf32, #tpu.memory_space<vmem>>, vector<128x128xf32>
      %cst_25 = arith.constant dense<0.000000e+00> : vector<128xf32>
      %38 = vector.multi_reduction <add>, %37, %cst_25 [1] : vector<128x128xf32> to vector<128xf32>
      %39 = vector.shape_cast %38 : vector<128xf32> to vector<1x128xf32>
      %c0_26 = arith.constant 0 : index
      %c0_27 = arith.constant 0 : index
      %40 = vector.load %arg7[%c0_26, %c0_27] : memref<1x128xf32, #tpu.memory_space<vmem>>, vector<1x128xf32>
      %41 = arith.addf %39, %40 : vector<1x128xf32>
      %cst_28 = arith.constant 4.8828125E-4 : f32
      %42 = vector.broadcast %cst_28 : f32 to vector<1x128xf32>
      %43 = arith.mulf %41, %42 : vector<1x128xf32>
      %c0_29 = arith.constant 0 : index
      %c0_30 = arith.constant 0 : index
      %44 = vector.load %arg5[%c0_29, %c0_30] : memref<1x128xf32, #tpu.memory_space<vmem>>, vector<1x128xf32>
      tpu.vector_store %arg5[%c0_29, %c0_30], %43 {strides = array<i32>} : memref<1x128xf32, #tpu.memory_space<vmem>>, vector<1x128xf32>,
    } else {
    }
    return
  }
  func.func @transform_0(%arg0: i32, %arg1: i32) -> (i32, i32) {
    %c0_i32 = arith.constant 0 : i32
    return %arg1, %arg0 : i32, i32
  }
  func.func @transform_1(%arg0: i32, %arg1: i32) -> (i32, i32, i32) {
    %c0_i32 = arith.constant 0 : i32
    %c0_i32_0 = arith.constant 0 : i32
    return %arg1, %arg0, %c0_i32 : i32, i32, i32
  }
  func.func @transform_2(%arg0: i32, %arg1: i32) -> (i32, i32) {
    %c0_i32 = arith.constant 0 : i32
    return %arg1, %arg0 : i32, i32
  }
  func.func @transform_3(%arg0: i32, %arg1: i32) -> (i32, i32) {
    %c0_i32 = arith.constant 0 : i32
    %c0_i32_0 = arith.constant 0 : i32
    return %c0_i32, %arg0 : i32, i32
  }
}

</mosaic_0001>

<llo_original>
// kernel: tpu_custom_call.1
$region0: #{tpu_custom_call.1}
  #allocation0 [shape = 'u32[]', space=smem, size = 0x4, offset = 0x4, fixed_abs, tag = 'smem constant byte address 0x4 - core index']
  #allocation1 [shape = 'u32[144,128]{1,0:T(1,128)}', space=vmem, size = 0x12000, scoped, tag = 'internal scratch']
  #allocation2 [shape = 'f32[128,128]{1,0:T(8,128)}', space=vmem, size = 0x10000, scoped, tag = 'scratch operand']
  #allocation3 [shape = 'f32[1,128]{1,0:T(1,128)}', space=vmem, size = 0x200, scoped, tag = 'scratch operand']
  #allocation11 [shape = 's32[]', space=sflag, size = 0x4, offset = 0, fixed_abs, tag = 'sflag constant byte address 0x0 - dummy sync flag']
  %s0 = inlined_call_operand.hbm [shape: f32[16,256], index: 0, kind: input, shape index: {}]
  %s1 = inlined_call_operand.hbm [shape: f32[16,256,128], index: 1, kind: input, shape index: {}]
  %s2 = inlined_call_operand.hbm [shape: f32[16,256], index: 2, kind: input, shape index: {}]
  %s3 = inlined_call_operand.hbm [shape: f32[1,256], index: 3, kind: output, shape index: {}]
  %s4 = sld [smem:[#allocation0]]
  $region65: #{tpu_custom_call.1} parent=0
    _
  %s6 = ssub.s32 1, %s4
  %s7 = scalar_select 0, %s6, %s4
  $region1: #{tpu_custom_call.1} parent=0
    #allocation4 [shape = 'u8[16384]{0}', space=vmem, size = 0x4000, scoped, tag = 'input window, operand 0']
    #allocation5 [shape = 's32[2]{0}', space=sflag, size = 0x8, scoped, tag = 'scoped memory for tpu_custom_call.1']
    #allocation6 [shape = 's32[2]{0}', space=sflag, size = 0x8, scoped, tag = 'scoped memory for tpu_custom_call.1']
    #allocation7 [shape = 'u8[2097152]{0}', space=vmem, size = 0x200000, scoped, tag = 'input window, operand 1']
    #allocation8 [shape = 's32[2]{0}', space=sflag, size = 0x8, scoped, tag = 'scoped memory for tpu_custom_call.1']
    #allocation9 [shape = 'u8[16384]{0}', space=vmem, size = 0x4000, scoped, tag = 'input window, operand 2']
    #allocation10 [shape = 'u8[1024]{0}', space=vmem, size = 0x400, scoped, tag = 'output window, operand 0']
    %8 = vsyncpa [#allocation5], 0
    %s9 = scalar_lea.sflag [#allocation5], 1
    %10 = vsyncpa %s9, 0
    %11 = vsyncpa [#allocation8], 0
    %s12 = scalar_lea.sflag [#allocation8], 1
    %13 = vsyncpa %s12, 0
    %14 = vsyncpa [#allocation6], 0
    %s15 = scalar_lea.sflag [#allocation6], 1
    %16 = vsyncpa %s15, 0
    loop: start=0, step=1, limit=4
    $region2: #{tpu_custom_call.1} parent=1 // loop_pre_header
      _
    $region3: #{tpu_custom_call.1} parent=1 // loop_header
      %s18 = sphi 0, %s22
      %p19 = scmp.ge.s32.totalorder %s18, 4
      %s25 = sphi 0, %s37
      %s26 = sphi 0, %s33
      %s27 = sphi 0, %s25
      %s28 = sphi 0, %s26
      %s29 = sphi 0, %s27
      %s30 = sphi 0, %s28
      %s42 = sphi 0, %s44
      %s45 = sphi 0, %s42
      %s46 = sphi 0, %s45
      %s62 = sphi 0, %s46
      %s70 = sphi 0, %s72
      %s73 = sphi 0, %s70
      %s74 = sphi 0, %s73
      %s90 = sphi 0, %s74
      %s98 = sphi 0, %s100
      %s101 = sphi 0, %s98
      %s102 = sphi 0, %s101
      %s118 = sphi 0, %s102
      %s124 = sphi 0, %s126
      %s127 = sphi 0, %s124
      %s128 = sphi 0, %s127
      %s144 = sphi 0, %s128
    $region4: #{tpu_custom_call.1} parent=1 // loop_header_branch
      %21 = sbr.rel (%p19) target = $region8
    $region5: #{tpu_custom_call.1} parent=1 // loop_body
      %s23 = ssub.s32 %s18, 1
      %s24 = ssub.s32 %s18, 2
      %s31 = sadd.s32 1, %s26
      %p32 = scmp.ge.s32.totalorder %s31, 1
      %s33 = scalar_select %p32, 0, %s31
      %s34 = sadd.s32 1, %s25
      %s35 = scalar_select %p32, %s34, %s25
      %p36 = scmp.ge.s32.totalorder %s35, 2
      %s37 = scalar_select %p36, 0, %s35
      %s38 = ssub.s32 %s26, %s33
      %s39 = ssub.s32 %s25, %s37
      %s40 = sor.u32 %s38, %s39
      %p41 = scmp.eq.s32.totalorder %s40, 0
      %s43 = sadd.s32 %s42, 1
      %s44 = scalar_select %p41, %s42, %s43
      %p47 = pneg %p41
      %p48 = scmp.eq.s32.totalorder %s18, 1
      %p49 = por %p47, %p48
      %p50 = scmp.ne.s32.totalorder %s42, %s45
      %p51 = scmp.eq.s32.totalorder %s18, 0
      %p52 = por %p50, %p51
      %p53 = scmp.ne.s32.totalorder %s42, %s45
      %p54 = scmp.eq.s32.totalorder %s23, 1
      %p55 = por %p53, %p54
      %p56 = scmp.ne.s32.totalorder %s45, %s46
      %p57 = scmp.eq.s32.totalorder %s23, 0
      %p58 = por %p56, %p57
      %p59 = scmp.ne.s32.totalorder %s45, %s46
      %p60 = scmp.eq.s32.totalorder %s24, 1
      %p61 = por %p59, %p60
      %p63 = scmp.ne.s32.totalorder %s46, %s62
      %p64 = scmp.eq.s32.totalorder %s24, 0
      %p65 = por %p63, %p64
      %s66 = ssub.s32 %s26, %s33
      %s67 = ssub.s32 %s25, %s37
      %s68 = sor.u32 %s66, %s67
      %p69 = scmp.eq.s32.totalorder %s68, 0
      %s71 = sadd.s32 %s70, 1
      %s72 = scalar_select %p69, %s70, %s71
      %p75 = pneg %p69
      %p76 = scmp.eq.s32.totalorder %s18, 1
      %p77 = por %p75, %p76
      %p78 = scmp.ne.s32.totalorder %s70, %s73
      %p79 = scmp.eq.s32.totalorder %s18, 0
      %p80 = por %p78, %p79
      %p81 = scmp.ne.s32.totalorder %s70, %s73
      %p82 = scmp.eq.s32.totalorder %s23, 1
      %p83 = por %p81, %p82
      %p84 = scmp.ne.s32.totalorder %s73, %s74
      %p85 = scmp.eq.s32.totalorder %s23, 0
      %p86 = por %p84, %p85
      %p87 = scmp.ne.s32.totalorder %s73, %s74
      %p88 = scmp.eq.s32.totalorder %s24, 1
      %p89 = por %p87, %p88
      %p91 = scmp.ne.s32.totalorder %s74, %s90
      %p92 = scmp.eq.s32.totalorder %s24, 0
      %p93 = por %p91, %p92
      %s94 = ssub.s32 %s26, %s33
      %s95 = ssub.s32 %s25, %s37
      %s96 = sor.u32 %s94, %s95
      %p97 = scmp.eq.s32.totalorder %s96, 0
      %s99 = sadd.s32 %s98, 1
      %s100 = scalar_select %p97, %s98, %s99
      %p103 = pneg %p97
      %p104 = scmp.eq.s32.totalorder %s18, 1
      %p105 = por %p103, %p104
      %p106 = scmp.ne.s32.totalorder %s98, %s101
      %p107 = scmp.eq.s32.totalorder %s18, 0
      %p108 = por %p106, %p107
      %p109 = scmp.ne.s32.totalorder %s98, %s101
      %p110 = scmp.eq.s32.totalorder %s23, 1
      %p111 = por %p109, %p110
      %p112 = scmp.ne.s32.totalorder %s101, %s102
      %p113 = scmp.eq.s32.totalorder %s23, 0
      %p114 = por %p112, %p113
      %p115 = scmp.ne.s32.totalorder %s101, %s102
      %p116 = scmp.eq.s32.totalorder %s24, 1
      %p117 = por %p115, %p116
      %p119 = scmp.ne.s32.totalorder %s102, %s118
      %p120 = scmp.eq.s32.totalorder %s24, 0
      %p121 = por %p119, %p120
      %s122 = ssub.s32 %s25, %s37
      %p123 = scmp.eq.s32.totalorder %s122, 0
      %s125 = sadd.s32 %s124, 1
      %s126 = scalar_select %p123, %s124, %s125
      %p129 = pneg %p123
      %p130 = scmp.eq.s32.totalorder %s18, 1
      %p131 = por %p129, %p130
      %p132 = scmp.ne.s32.totalorder %s124, %s127
      %p133 = scmp.eq.s32.totalorder %s18, 0
      %p134 = por %p132, %p133
      %p135 = scmp.ne.s32.totalorder %s124, %s127
      %p136 = scmp.eq.s32.totalorder %s23, 1
      %p137 = por %p135, %p136
      %p138 = scmp.ne.s32.totalorder %s127, %s128
      %p139 = scmp.eq.s32.totalorder %s23, 0
      %p140 = por %p138, %p139
      %p141 = scmp.ne.s32.totalorder %s127, %s128
      %p142 = scmp.eq.s32.totalorder %s24, 1
      %p143 = por %p141, %p142
      %p145 = scmp.ne.s32.totalorder %s128, %s144
      %p146 = scmp.eq.s32.totalorder %s24, 0
      %p147 = por %p145, %p146
      %p148 = scmp.le.s32.totalorder 1, %s18
      %p149 = scmp.lt.s32.totalorder %s18, 3
      %p150 = pnand %p148, %p149
      %p151 = pneg %p150
      // Predicated region
      $region9: #{tpu_custom_call.1} parent=5 // pred_check
        _
      $region10: #{tpu_custom_call.1} parent=5 // pred_check_branch
        %153 = sbr.rel (%p150) target = $region12
      $region11: #{tpu_custom_call.1} parent=5 // pred_region
        %s154 = ssub.s32 %s18, 1
      $region12: #{tpu_custom_call.1} parent=5 // pred_fallthru
        _
      %p155 = scmp.lt.s32.totalorder %s18, 2
      // Predicated region
      $region13: #{tpu_custom_call.1} parent=5 // pred_check
        %p156 = pneg %p155
      $region14: #{tpu_custom_call.1} parent=5 // pred_check_branch
        %158 = sbr.rel (%p156) target = $region16
      $region15: #{tpu_custom_call.1} parent=5 // pred_region
        // Predicated region
        $region17: #{tpu_custom_call.1} parent=15 // pred_check
          %p159 = pneg %p52
        $region18: #{tpu_custom_call.1} parent=15 // pred_check_branch
          %161 = sbr.rel (%p159) target = $region20
        $region19: #{tpu_custom_call.1} parent=15 // pred_region
          %s162 = sand.u32 %s42, 1
          %s163 = scalar_lea.sflag [#allocation5], %s162
          %s164 = sand.u32 %s42, 1
          %s165 = smul.addr %s164, 16
          %s166 = scalar_lea.vmem [#allocation4], %s165
          %s167 = smul.u32 2, %s26
          %s169 = ssub.s32 256, 256
          %170 = vsyncadd %s163, %s169
          %s171 = smul.addr %s167, 2
          %s172 = sadd.s32 %s25, %s171
          %s173 = smul.addr %s172, 128
          %s174 = scalar_lea.hbm %s0, %s173
          %s175 = sshll.u32 %s166, 4
          %s176 = int_to_ptr.vmem [resolvable:$true] %s175
          %181 = dma.hbm_to_vmem [thread:$0]  %s174, 256, %s176, %s163, 256, 128, 8
        $region20: #{tpu_custom_call.1} parent=15 // pred_fallthru
          _
        // Predicated region
        $region21: #{tpu_custom_call.1} parent=15 // pred_check
          %p182 = pneg %p80
        $region22: #{tpu_custom_call.1} parent=15 // pred_check_branch
          %184 = sbr.rel (%p182) target = $region24
        $region23: #{tpu_custom_call.1} parent=15 // pred_region
          #allocation12 [shape = 'u32[6]{0}', space=smem, size = 0x18, scoped, tag = 'DMA stride descriptor']
          %s185 = sand.u32 %s18, 1
          %s186 = scalar_lea.sflag [#allocation8], %s185
          %s187 = sand.u32 %s70, 1
          %s188 = smul.addr %s187, 2048
          %s189 = scalar_lea.vmem [#allocation7], %s188
          %s190 = smul.u32 16, %s26
          %s191 = smul.u32 16, %s25
          %s193 = ssub.s32 32768, 32768
          %194 = vsyncadd %s186, %s193
          %s195 = smul.addr %s190, 32
          %s196 = sadd.s32 %s191, %s195
          %s197 = smul.addr %s196, 128
          %s198 = scalar_lea.hbm %s1, %s197
          %s200 = sshll.u32 1, 14
          %s201 = sxor.u32 4294967295, %s200
          %s203 = sld [smem:[#allocation0]]
          %s204 = sadd.s32 2, %s203
          %s206 = sshll.u32 7, 26
          %s207 = sxor.u32 4294967295, %s206
          %s208 = sand.u32 0, %s207
          %s209 = sshll.u32 %s204, 26
          %s210 = sor.u32 %s208, %s209
          %s211 = sshll.u32 %s189, 4
          %s212 = int_to_ptr.vmem [resolvable:$true] %s211
          %218 = sst [smem:[#allocation12]] 4096
          %s219 = scalar_lea.smem [#allocation12], 1
          %220 = sst [smem:[%s219]] 2048
          %s221 = scalar_lea.smem [#allocation12], 2
          %222 = sst [smem:[%s221]] 16
          %s223 = scalar_lea.smem [#allocation12], 3
          %224 = sst [smem:[%s223]] 128
          %s225 = scalar_lea.smem [#allocation12], 4
          %226 = sst [smem:[%s225]] 128
          %s227 = scalar_lea.smem [#allocation12], 5
          %228 = sst [smem:[%s227]] 8
          %230 = dma.general %s198, 32768, %s212, %s186, [#allocation11], [#allocation12], %s210, 0
        $region24: #{tpu_custom_call.1} parent=15 // pred_fallthru
          _
        // Predicated region
        $region25: #{tpu_custom_call.1} parent=15 // pred_check
          %p231 = pneg %p108
        $region26: #{tpu_custom_call.1} parent=15 // pred_check_branch
          %233 = sbr.rel (%p231) target = $region28
        $region27: #{tpu_custom_call.1} parent=15 // pred_region
          %s234 = sand.u32 %s18, 1
          %s235 = scalar_lea.sflag [#allocation8], %s234
          %s236 = sand.u32 %s98, 1
          %s237 = smul.addr %s236, 16
          %s238 = scalar_lea.vmem [#allocation9], %s237
          %s239 = smul.u32 2, %s26
          %s241 = ssub.s32 256, 256
          %242 = vsyncadd %s235, %s241
          %s243 = smul.addr %s239, 2
          %s244 = sadd.s32 %s25, %s243
          %s245 = smul.addr %s244, 128
          %s246 = scalar_lea.hbm %s2, %s245
          %s247 = sshll.u32 %s238, 4
          %s248 = int_to_ptr.vmem [resolvable:$true] %s247
          %253 = dma.hbm_to_vmem [thread:$0]  %s246, 256, %s248, %s235, 256, 128, 8
        $region28: #{tpu_custom_call.1} parent=15 // pred_fallthru
          _
      $region16: #{tpu_custom_call.1} parent=5 // pred_fallthru
        _
      %p254 = scmp.le.s32.totalorder 1, %s18
      %p255 = scmp.lt.s32.totalorder %s18, 3
      %p256 = pnand %p254, %p255
      %p257 = pneg %p256
      // Predicated region
      $region29: #{tpu_custom_call.1} parent=5 // pred_check
        _
      $region30: #{tpu_custom_call.1} parent=5 // pred_check_branch
        %259 = sbr.rel (%p256) target = $region32
      $region31: #{tpu_custom_call.1} parent=5 // pred_region
        %s260 = ssub.s32 %s18, 1
        %s261 = sand.u32 %s45, 1
        %s262 = scalar_lea.sflag [#allocation5], %s261
        %s263 = sand.u32 %s45, 1
        %s264 = smul.addr %s263, 16
        %s265 = scalar_lea.vmem [#allocation4], %s264
        // Predicated region
        $region33: #{tpu_custom_call.1} parent=31 // pred_check
          %p266 = pneg %p58
        $region34: #{tpu_custom_call.1} parent=31 // pred_check_branch
          %268 = sbr.rel (%p266) target = $region36
        $region35: #{tpu_custom_call.1} parent=31 // pred_region
          %269 = dma.done %s262, 256
        $region36: #{tpu_custom_call.1} parent=31 // pred_fallthru
          _
        %s270 = sand.u32 %s23, 1
        %s271 = scalar_lea.sflag [#allocation8], %s270
        %s272 = sand.u32 %s73, 1
        %s273 = smul.addr %s272, 2048
        %s274 = scalar_lea.vmem [#allocation7], %s273
        // Predicated region
        $region37: #{tpu_custom_call.1} parent=31 // pred_check
          %p275 = pneg %p86
        $region38: #{tpu_custom_call.1} parent=31 // pred_check_branch
          %277 = sbr.rel (%p275) target = $region40
        $region39: #{tpu_custom_call.1} parent=31 // pred_region
          %278 = dma.done %s271, 32768
        $region40: #{tpu_custom_call.1} parent=31 // pred_fallthru
          _
        %s279 = sand.u32 %s23, 1
        %s280 = scalar_lea.sflag [#allocation8], %s279
        %s281 = sand.u32 %s101, 1
        %s282 = smul.addr %s281, 16
        %s283 = scalar_lea.vmem [#allocation9], %s282
        // Predicated region
        $region41: #{tpu_custom_call.1} parent=31 // pred_check
          %p284 = pneg %p114
        $region42: #{tpu_custom_call.1} parent=31 // pred_check_branch
          %286 = sbr.rel (%p284) target = $region44
        $region43: #{tpu_custom_call.1} parent=31 // pred_region
          %287 = dma.done %s280, 256
        $region44: #{tpu_custom_call.1} parent=31 // pred_fallthru
          _
        %s288 = sand.u32 %s45, 1
        %s289 = scalar_lea.sflag [#allocation5], %s288
        %s290 = sand.u32 %s45, 1
        %s291 = smul.addr %s290, 16
        %s292 = scalar_lea.vmem [#allocation4], %s291
        %p293 = pneg %p58
        %p294 = pneg %p55
        %s295 = sand.u32 %s23, 1
        %s296 = scalar_lea.sflag [#allocation8], %s295
        %s297 = sand.u32 %s73, 1
        %s298 = smul.addr %s297, 2048
        %s299 = scalar_lea.vmem [#allocation7], %s298
        %p300 = pneg %p86
        %p301 = pneg %p83
        %s302 = sand.u32 %s23, 1
        %s303 = scalar_lea.sflag [#allocation8], %s302
        %s304 = sand.u32 %s101, 1
        %s305 = smul.addr %s304, 16
        %s306 = scalar_lea.vmem [#allocation9], %s305
        %p307 = pneg %p114
        %p308 = pneg %p111
        %p309 = pneg %p140
        %p310 = pneg %p137
        %s311 = sand.u32 %s127, 1
        %s312 = scalar_lea.sflag [#allocation6], %s311
        %s313 = sand.u32 %s127, 1
        %s314 = scalar_lea.vmem [#allocation10], %s313
        %s315 = smul.u32 2, %s28
        %s316 = smul.u32 16, %s28
        %s317 = smul.u32 16, %s27
        %s318 = smul.u32 2, %s28
        %p319 = scmp.eq.s32.totalorder %s28, 0
        // Predicated region
        $region45: #{tpu_custom_call.1} parent=31 // pred_check
          %p320 = pneg %p319
        $region46: #{tpu_custom_call.1} parent=31 // pred_check_branch
          %322 = sbr.rel (%p320) target = $region48
        $region47: #{tpu_custom_call.1} parent=31 // pred_region
          %323 = vst [vmem:[#allocation2] sm:$0xff] 0.0
          %324 = vst [vmem:[#allocation2 + $0x8] sm:$0xff] 0.0
          %325 = vst [vmem:[#allocation2 + $0x10] sm:$0xff] 0.0
          %326 = vst [vmem:[#allocation2 + $0x18] sm:$0xff] 0.0
          %327 = vst [vmem:[#allocation2 + $0x20] sm:$0xff] 0.0
          %328 = vst [vmem:[#allocation2 + $0x28] sm:$0xff] 0.0
          %329 = vst [vmem:[#allocation2 + $0x30] sm:$0xff] 0.0
          %330 = vst [vmem:[#allocation2 + $0x38] sm:$0xff] 0.0
          %331 = vst [vmem:[#allocation2 + $0x40] sm:$0xff] 0.0
          %332 = vst [vmem:[#allocation2 + $0x48] sm:$0xff] 0.0
          %333 = vst [vmem:[#allocation2 + $0x50] sm:$0xff] 0.0
          %334 = vst [vmem:[#allocation2 + $0x58] sm:$0xff] 0.0
          %335 = vst [vmem:[#allocation2 + $0x60] sm:$0xff] 0.0
          %336 = vst [vmem:[#allocation2 + $0x68] sm:$0xff] 0.0
          %337 = vst [vmem:[#allocation2 + $0x70] sm:$0xff] 0.0
          %338 = vst [vmem:[#allocation2 + $0x78] sm:$0xff] 0.0
          %339 = vst [vmem:[#allocation3] sm:$0x1] 0.0
        $region48: #{tpu_custom_call.1} parent=31 // pred_fallthru
          _
        %v340 = vld [vmem:[%s265] sm:$0xff]
        %v341 = vld [vmem:[%s265 + $0x8] sm:$0xff]
        %v342 = vld [vmem:[%s283] sm:$0xff]
        %v343 = vld [vmem:[%s283 + $0x8] sm:$0xff]
        %v344 = vadd.f32 %v342, 1e-06
        %v345 = vadd.f32 %v343, 1e-06
        %v346 = vld [vmem:[%s274] sm:$0xff]
        %v347 = vld [vmem:[%s274 + $0x8] sm:$0xff]
        %v348 = vld [vmem:[%s274 + $0x10] sm:$0xff]
        %v349 = vld [vmem:[%s274 + $0x18] sm:$0xff]
        %v350 = vld [vmem:[%s274 + $0x20] sm:$0xff]
        %v351 = vld [vmem:[%s274 + $0x28] sm:$0xff]
        %v352 = vld [vmem:[%s274 + $0x30] sm:$0xff]
        %v353 = vld [vmem:[%s274 + $0x38] sm:$0xff]
        %v354 = vld [vmem:[%s274 + $0x40] sm:$0xff]
        %v355 = vld [vmem:[%s274 + $0x48] sm:$0xff]
        %v356 = vld [vmem:[%s274 + $0x50] sm:$0xff]
        %v357 = vld [vmem:[%s274 + $0x58] sm:$0xff]
        %v358 = vld [vmem:[%s274 + $0x60] sm:$0xff]
        %v359 = vld [vmem:[%s274 + $0x68] sm:$0xff]
        %v360 = vld [vmem:[%s274 + $0x70] sm:$0xff]
        %v361 = vld [vmem:[%s274 + $0x78] sm:$0xff]
        %v362 = vld [vmem:[%s274 + $0x80] sm:$0xff]
        %v363 = vld [vmem:[%s274 + $0x88] sm:$0xff]
        %v364 = vld [vmem:[%s274 + $0x90] sm:$0xff]
        %v365 = vld [vmem:[%s274 + $0x98] sm:$0xff]
        %v366 = vld [vmem:[%s274 + $0xa0] sm:$0xff]
        %v367 = vld [vmem:[%s274 + $0xa8] sm:$0xff]
        %v368 = vld [vmem:[%s274 + $0xb0] sm:$0xff]
        %v369 = vld [vmem:[%s274 + $0xb8] sm:$0xff]
        %v370 = vld [vmem:[%s274 + $0xc0] sm:$0xff]
        %v371 = vld [vmem:[%s274 + $0xc8] sm:$0xff]
        %v372 = vld [vmem:[%s274 + $0xd0] sm:$0xff]
        %v373 = vld [vmem:[%s274 + $0xd8] sm:$0xff]
        %v374 = vld [vmem:[%s274 + $0xe0] sm:$0xff]
        %v375 = vld [vmem:[%s274 + $0xe8] sm:$0xff]
        %v376 = vld [vmem:[%s274 + $0xf0] sm:$0xff]
        %v377 = vld [vmem:[%s274 + $0xf8] sm:$0xff]
        %v378 = vld [vmem:[%s274 + $0x100] sm:$0xff]
        %v379 = vld [vmem:[%s274 + $0x108] sm:$0xff]
        %v380 = vld [vmem:[%s274 + $0x110] sm:$0xff]
        %v381 = vld [vmem:[%s274 + $0x118] sm:$0xff]
        %v382 = vld [vmem:[%s274 + $0x120] sm:$0xff]
        %v383 = vld [vmem:[%s274 + $0x128] sm:$0xff]
        %v384 = vld [vmem:[%s274 + $0x130] sm:$0xff]
        %v385 = vld [vmem:[%s274 + $0x138] sm:$0xff]
        %v386 = vld [vmem:[%s274 + $0x140] sm:$0xff]
        %v387 = vld [vmem:[%s274 + $0x148] sm:$0xff]
        %v388 = vld [vmem:[%s274 + $0x150] sm:$0xff]
        %v389 = vld [vmem:[%s274 + $0x158] sm:$0xff]
        %v390 = vld [vmem:[%s274 + $0x160] sm:$0xff]
        %v391 = vld [vmem:[%s274 + $0x168] sm:$0xff]
        %v392 = vld [vmem:[%s274 + $0x170] sm:$0xff]
        %v393 = vld [vmem:[%s274 + $0x178] sm:$0xff]
        %v394 = vld [vmem:[%s274 + $0x180] sm:$0xff]
        %v395 = vld [vmem:[%s274 + $0x188] sm:$0xff]
        %v396 = vld [vmem:[%s274 + $0x190] sm:$0xff]
        %v397 = vld [vmem:[%s274 + $0x198] sm:$0xff]
        %v398 = vld [vmem:[%s274 + $0x1a0] sm:$0xff]
        %v399 = vld [vmem:[%s274 + $0x1a8] sm:$0xff]
        %v400 = vld [vmem:[%s274 + $0x1b0] sm:$0xff]
        %v401 = vld [vmem:[%s274 + $0x1b8] sm:$0xff]
        %v402 = vld [vmem:[%s274 + $0x1c0] sm:$0xff]
        %v403 = vld [vmem:[%s274 + $0x1c8] sm:$0xff]
        %v404 = vld [vmem:[%s274 + $0x1d0] sm:$0xff]
        %v405 = vld [vmem:[%s274 + $0x1d8] sm:$0xff]
        %v406 = vld [vmem:[%s274 + $0x1e0] sm:$0xff]
        %v407 = vld [vmem:[%s274 + $0x1e8] sm:$0xff]
        %v408 = vld [vmem:[%s274 + $0x1f0] sm:$0xff]
        %v409 = vld [vmem:[%s274 + $0x1f8] sm:$0xff]
        %v410 = vld [vmem:[%s274 + $0x200] sm:$0xff]
        %v411 = vld [vmem:[%s274 + $0x208] sm:$0xff]
        %v412 = vld [vmem:[%s274 + $0x210] sm:$0xff]
        %v413 = vld [vmem:[%s274 + $0x218] sm:$0xff]
        %v414 = vld [vmem:[%s274 + $0x220] sm:$0xff]
        %v415 = vld [vmem:[%s274 + $0x228] sm:$0xff]
        %v416 = vld [vmem:[%s274 + $0x230] sm:$0xff]
        %v417 = vld [vmem:[%s274 + $0x238] sm:$0xff]
        %v418 = vld [vmem:[%s274 + $0x240] sm:$0xff]
        %v419 = vld [vmem:[%s274 + $0x248] sm:$0xff]
        %v420 = vld [vmem:[%s274 + $0x250] sm:$0xff]
        %v421 = vld [vmem:[%s274 + $0x258] sm:$0xff]
        %v422 = vld [vmem:[%s274 + $0x260] sm:$0xff]
        %v423 = vld [vmem:[%s274 + $0x268] sm:$0xff]
        %v424 = vld [vmem:[%s274 + $0x270] sm:$0xff]
        %v425 = vld [vmem:[%s274 + $0x278] sm:$0xff]
        %v426 = vld [vmem:[%s274 + $0x280] sm:$0xff]
        %v427 = vld [vmem:[%s274 + $0x288] sm:$0xff]
        %v428 = vld [vmem:[%s274 + $0x290] sm:$0xff]
        %v429 = vld [vmem:[%s274 + $0x298] sm:$0xff]
        %v430 = vld [vmem:[%s274 + $0x2a0] sm:$0xff]
        %v431 = vld [vmem:[%s274 + $0x2a8] sm:$0xff]
        %v432 = vld [vmem:[%s274 + $0x2b0] sm:$0xff]
        %v433 = vld [vmem:[%s274 + $0x2b8] sm:$0xff]
        %v434 = vld [vmem:[%s274 + $0x2c0] sm:$0xff]
        %v435 = vld [vmem:[%s274 + $0x2c8] sm:$0xff]
        %v436 = vld [vmem:[%s274 + $0x2d0] sm:$0xff]
        %v437 = vld [vmem:[%s274 + $0x2d8] sm:$0xff]
        %v438 = vld [vmem:[%s274 + $0x2e0] sm:$0xff]
        %v439 = vld [vmem:[%s274 + $0x2e8] sm:$0xff]
        %v440 = vld [vmem:[%s274 + $0x2f0] sm:$0xff]
        %v441 = vld [vmem:[%s274 + $0x2f8] sm:$0xff]
        %v442 = vld [vmem:[%s274 + $0x300] sm:$0xff]
        %v443 = vld [vmem:[%s274 + $0x308] sm:$0xff]
        %v444 = vld [vmem:[%s274 + $0x310] sm:$0xff]
        %v445 = vld [vmem:[%s274 + $0x318] sm:$0xff]
        %v446 = vld [vmem:[%s274 + $0x320] sm:$0xff]
        %v447 = vld [vmem:[%s274 + $0x328] sm:$0xff]
        %v448 = vld [vmem:[%s274 + $0x330] sm:$0xff]
        %v449 = vld [vmem:[%s274 + $0x338] sm:$0xff]
        %v450 = vld [vmem:[%s274 + $0x340] sm:$0xff]
        %v451 = vld [vmem:[%s274 + $0x348] sm:$0xff]
        %v452 = vld [vmem:[%s274 + $0x350] sm:$0xff]
        %v453 = vld [vmem:[%s274 + $0x358] sm:$0xff]
        %v454 = vld [vmem:[%s274 + $0x360] sm:$0xff]
        %v455 = vld [vmem:[%s274 + $0x368] sm:$0xff]
        %v456 = vld [vmem:[%s274 + $0x370] sm:$0xff]
        %v457 = vld [vmem:[%s274 + $0x378] sm:$0xff]
        %v458 = vld [vmem:[%s274 + $0x380] sm:$0xff]
        %v459 = vld [vmem:[%s274 + $0x388] sm:$0xff]
        %v460 = vld [vmem:[%s274 + $0x390] sm:$0xff]
        %v461 = vld [vmem:[%s274 + $0x398] sm:$0xff]
        %v462 = vld [vmem:[%s274 + $0x3a0] sm:$0xff]
        %v463 = vld [vmem:[%s274 + $0x3a8] sm:$0xff]
        %v464 = vld [vmem:[%s274 + $0x3b0] sm:$0xff]
        %v465 = vld [vmem:[%s274 + $0x3b8] sm:$0xff]
        %v466 = vld [vmem:[%s274 + $0x3c0] sm:$0xff]
        %v467 = vld [vmem:[%s274 + $0x3c8] sm:$0xff]
        %v468 = vld [vmem:[%s274 + $0x3d0] sm:$0xff]
        %v469 = vld [vmem:[%s274 + $0x3d8] sm:$0xff]
        %v470 = vld [vmem:[%s274 + $0x3e0] sm:$0xff]
        %v471 = vld [vmem:[%s274 + $0x3e8] sm:$0xff]
        %v472 = vld [vmem:[%s274 + $0x3f0] sm:$0xff]
        %v473 = vld [vmem:[%s274 + $0x3f8] sm:$0xff]
        %v474 = vld [vmem:[%s274 + $0x400] sm:$0xff]
        %v475 = vld [vmem:[%s274 + $0x408] sm:$0xff]
        %v476 = vld [vmem:[%s274 + $0x410] sm:$0xff]
        %v477 = vld [vmem:[%s274 + $0x418] sm:$0xff]
        %v478 = vld [vmem:[%s274 + $0x420] sm:$0xff]
        %v479 = vld [vmem:[%s274 + $0x428] sm:$0xff]
        %v480 = vld [vmem:[%s274 + $0x430] sm:$0xff]
        %v481 = vld [vmem:[%s274 + $0x438] sm:$0xff]
        %v482 = vld [vmem:[%s274 + $0x440] sm:$0xff]
        %v483 = vld [vmem:[%s274 + $0x448] sm:$0xff]
        %v484 = vld [vmem:[%s274 + $0x450] sm:$0xff]
        %v485 = vld [vmem:[%s274 + $0x458] sm:$0xff]
        %v486 = vld [vmem:[%s274 + $0x460] sm:$0xff]
        %v487 = vld [vmem:[%s274 + $0x468] sm:$0xff]
        %v488 = vld [vmem:[%s274 + $0x470] sm:$0xff]
        %v489 = vld [vmem:[%s274 + $0x478] sm:$0xff]
        %v490 = vld [vmem:[%s274 + $0x480] sm:$0xff]
        %v491 = vld [vmem:[%s274 + $0x488] sm:$0xff]
        %v492 = vld [vmem:[%s274 + $0x490] sm:$0xff]
        %v493 = vld [vmem:[%s274 + $0x498] sm:$0xff]
        %v494 = vld [vmem:[%s274 + $0x4a0] sm:$0xff]
        %v495 = vld [vmem:[%s274 + $0x4a8] sm:$0xff]
        %v496 = vld [vmem:[%s274 + $0x4b0] sm:$0xff]
        %v497 = vld [vmem:[%s274 + $0x4b8] sm:$0xff]
        %v498 = vld [vmem:[%s274 + $0x4c0] sm:$0xff]
        %v499 = vld [vmem:[%s274 + $0x4c8] sm:$0xff]
        %v500 = vld [vmem:[%s274 + $0x4d0] sm:$0xff]
        %v501 = vld [vmem:[%s274 + $0x4d8] sm:$0xff]
        %v502 = vld [vmem:[%s274 + $0x4e0] sm:$0xff]
        %v503 = vld [vmem:[%s274 + $0x4e8] sm:$0xff]
        %v504 = vld [vmem:[%s274 + $0x4f0] sm:$0xff]
        %v505 = vld [vmem:[%s274 + $0x4f8] sm:$0xff]
        %v506 = vld [vmem:[%s274 + $0x500] sm:$0xff]
        %v507 = vld [vmem:[%s274 + $0x508] sm:$0xff]
        %v508 = vld [vmem:[%s274 + $0x510] sm:$0xff]
        %v509 = vld [vmem:[%s274 + $0x518] sm:$0xff]
        %v510 = vld [vmem:[%s274 + $0x520] sm:$0xff]
        %v511 = vld [vmem:[%s274 + $0x528] sm:$0xff]
        %v512 = vld [vmem:[%s274 + $0x530] sm:$0xff]
        %v513 = vld [vmem:[%s274 + $0x538] sm:$0xff]
        %v514 = vld [vmem:[%s274 + $0x540] sm:$0xff]
        %v515 = vld [vmem:[%s274 + $0x548] sm:$0xff]
        %v516 = vld [vmem:[%s274 + $0x550] sm:$0xff]
        %v517 = vld [vmem:[%s274 + $0x558] sm:$0xff]
        %v518 = vld [vmem:[%s274 + $0x560] sm:$0xff]
        %v519 = vld [vmem:[%s274 + $0x568] sm:$0xff]
        %v520 = vld [vmem:[%s274 + $0x570] sm:$0xff]
        %v521 = vld [vmem:[%s274 + $0x578] sm:$0xff]
        %v522 = vld [vmem:[%s274 + $0x580] sm:$0xff]
        %v523 = vld [vmem:[%s274 + $0x588] sm:$0xff]
        %v524 = vld [vmem:[%s274 + $0x590] sm:$0xff]
        %v525 = vld [vmem:[%s274 + $0x598] sm:$0xff]
        %v526 = vld [vmem:[%s274 + $0x5a0] sm:$0xff]
        %v527 = vld [vmem:[%s274 + $0x5a8] sm:$0xff]
        %v528 = vld [vmem:[%s274 + $0x5b0] sm:$0xff]
        %v529 = vld [vmem:[%s274 + $0x5b8] sm:$0xff]
        %v530 = vld [vmem:[%s274 + $0x5c0] sm:$0xff]
        %v531 = vld [vmem:[%s274 + $0x5c8] sm:$0xff]
        %v532 = vld [vmem:[%s274 + $0x5d0] sm:$0xff]
        %v533 = vld [vmem:[%s274 + $0x5d8] sm:$0xff]
        %v534 = vld [vmem:[%s274 + $0x5e0] sm:$0xff]
        %v535 = vld [vmem:[%s274 + $0x5e8] sm:$0xff]
        %v536 = vld [vmem:[%s274 + $0x5f0] sm:$0xff]
        %v537 = vld [vmem:[%s274 + $0x5f8] sm:$0xff]
        %v538 = vld [vmem:[%s274 + $0x600] sm:$0xff]
        %v539 = vld [vmem:[%s274 + $0x608] sm:$0xff]
        %v540 = vld [vmem:[%s274 + $0x610] sm:$0xff]
        %v541 = vld [vmem:[%s274 + $0x618] sm:$0xff]
        %v542 = vld [vmem:[%s274 + $0x620] sm:$0xff]
        %v543 = vld [vmem:[%s274 + $0x628] sm:$0xff]
        %v544 = vld [vmem:[%s274 + $0x630] sm:$0xff]
        %v545 = vld [vmem:[%s274 + $0x638] sm:$0xff]
        %v546 = vld [vmem:[%s274 + $0x640] sm:$0xff]
        %v547 = vld [vmem:[%s274 + $0x648] sm:$0xff]
        %v548 = vld [vmem:[%s274 + $0x650] sm:$0xff]
        %v549 = vld [vmem:[%s274 + $0x658] sm:$0xff]
        %v550 = vld [vmem:[%s274 + $0x660] sm:$0xff]
        %v551 = vld [vmem:[%s274 + $0x668] sm:$0xff]
        %v552 = vld [vmem:[%s274 + $0x670] sm:$0xff]
        %v553 = vld [vmem:[%s274 + $0x678] sm:$0xff]
        %v554 = vld [vmem:[%s274 + $0x680] sm:$0xff]
        %v555 = vld [vmem:[%s274 + $0x688] sm:$0xff]
        %v556 = vld [vmem:[%s274 + $0x690] sm:$0xff]
        %v557 = vld [vmem:[%s274 + $0x698] sm:$0xff]
        %v558 = vld [vmem:[%s274 + $0x6a0] sm:$0xff]
        %v559 = vld [vmem:[%s274 + $0x6a8] sm:$0xff]
        %v560 = vld [vmem:[%s274 + $0x6b0] sm:$0xff]
        %v561 = vld [vmem:[%s274 + $0x6b8] sm:$0xff]
        %v562 = vld [vmem:[%s274 + $0x6c0] sm:$0xff]
        %v563 = vld [vmem:[%s274 + $0x6c8] sm:$0xff]
        %v564 = vld [vmem:[%s274 + $0x6d0] sm:$0xff]
        %v565 = vld [vmem:[%s274 + $0x6d8] sm:$0xff]
        %v566 = vld [vmem:[%s274 + $0x6e0] sm:$0xff]
        %v567 = vld [vmem:[%s274 + $0x6e8] sm:$0xff]
        %v568 = vld [vmem:[%s274 + $0x6f0] sm:$0xff]
        %v569 = vld [vmem:[%s274 + $0x6f8] sm:$0xff]
        %v570 = vld [vmem:[%s274 + $0x700] sm:$0xff]
        %v571 = vld [vmem:[%s274 + $0x708] sm:$0xff]
        %v572 = vld [vmem:[%s274 + $0x710] sm:$0xff]
        %v573 = vld [vmem:[%s274 + $0x718] sm:$0xff]
        %v574 = vld [vmem:[%s274 + $0x720] sm:$0xff]
        %v575 = vld [vmem:[%s274 + $0x728] sm:$0xff]
        %v576 = vld [vmem:[%s274 + $0x730] sm:$0xff]
        %v577 = vld [vmem:[%s274 + $0x738] sm:$0xff]
        %v578 = vld [vmem:[%s274 + $0x740] sm:$0xff]
        %v579 = vld [vmem:[%s274 + $0x748] sm:$0xff]
        %v580 = vld [vmem:[%s274 + $0x750] sm:$0xff]
        %v581 = vld [vmem:[%s274 + $0x758] sm:$0xff]
        %v582 = vld [vmem:[%s274 + $0x760] sm:$0xff]
        %v583 = vld [vmem:[%s274 + $0x768] sm:$0xff]
        %v584 = vld [vmem:[%s274 + $0x770] sm:$0xff]
        %v585 = vld [vmem:[%s274 + $0x778] sm:$0xff]
        %v586 = vld [vmem:[%s274 + $0x780] sm:$0xff]
        %v587 = vld [vmem:[%s274 + $0x788] sm:$0xff]
        %v588 = vld [vmem:[%s274 + $0x790] sm:$0xff]
        %v589 = vld [vmem:[%s274 + $0x798] sm:$0xff]
        %v590 = vld [vmem:[%s274 + $0x7a0] sm:$0xff]
        %v591 = vld [vmem:[%s274 + $0x7a8] sm:$0xff]
        %v592 = vld [vmem:[%s274 + $0x7b0] sm:$0xff]
        %v593 = vld [vmem:[%s274 + $0x7b8] sm:$0xff]
        %v594 = vld [vmem:[%s274 + $0x7c0] sm:$0xff]
        %v595 = vld [vmem:[%s274 + $0x7c8] sm:$0xff]
        %v596 = vld [vmem:[%s274 + $0x7d0] sm:$0xff]
        %v597 = vld [vmem:[%s274 + $0x7d8] sm:$0xff]
        %v598 = vld [vmem:[%s274 + $0x7e0] sm:$0xff]
        %v599 = vld [vmem:[%s274 + $0x7e8] sm:$0xff]
        %v600 = vld [vmem:[%s274 + $0x7f0] sm:$0xff]
        %v601 = vld [vmem:[%s274 + $0x7f8] sm:$0xff]
        %v602 = vmul.f32 %v344, 2.0
        %v603 = vmul.f32 %v345, 2.0
        %v604 = vmul.f32 %v602, %v344
        %v605 = vmul.f32 %v603, %v345
        %v606 = vrcp.pop %v604
        %v607 = vmul.f32 1.0, %v606
        %v608 = vrcp.pop %v605
        %v609 = vmul.f32 1.0, %v608
        %v610 = vlog2.pop %v344
        %v611 = vmul.f32 %v610, 0.6931472
        %v612 = vlog2.pop %v345
        %v613 = vmul.f32 %v612, 0.6931472
        %v614 = vadd.f32 %v611, 0.9189385
        %v615 = vadd.f32 %v613, 0.9189385
        %v616 = vmul.f32 %v614, 128.0
        %v617 = vmul.f32 %v615, 128.0
        %v618 = vlaneseq
        %v619 = vshrl.u32 %v618, 7
        %v620 = vsub.s32 0, %v619
        %v621 = vrot.slane %v340, %v620
        %623 = vbcast.lane.b32.xlu0 %v621, 256
        %v624 = vpop.permute.xlu0 %623
        %s626 = sor.u32 256, 8
        %627 = vbcast.lane.b32.xlu0 %v621, %s626
        %v628 = vpop.permute.xlu0 %627
        %s630 = sor.u32 256, 16
        %631 = vbcast.lane.b32.xlu0 %v621, %s630
        %v632 = vpop.permute.xlu0 %631
        %s634 = sor.u32 256, 24
        %635 = vbcast.lane.b32.xlu0 %v621, %s634
        %v636 = vpop.permute.xlu0 %635
        %s638 = sor.u32 256, 32
        %639 = vbcast.lane.b32.xlu0 %v621, %s638
        %v640 = vpop.permute.xlu0 %639
        %s642 = sor.u32 256, 40
        %643 = vbcast.lane.b32.xlu0 %v621, %s642
        %v644 = vpop.permute.xlu0 %643
        %s646 = sor.u32 256, 48
        %647 = vbcast.lane.b32.xlu0 %v621, %s646
        %v648 = vpop.permute.xlu0 %647
        %s650 = sor.u32 256, 56
        %651 = vbcast.lane.b32.xlu0 %v621, %s650
        %v652 = vpop.permute.xlu0 %651
        %s654 = sor.u32 256, 64
        %655 = vbcast.lane.b32.xlu0 %v621, %s654
        %v656 = vpop.permute.xlu0 %655
        %s658 = sor.u32 256, 72
        %659 = vbcast.lane.b32.xlu0 %v621, %s658
        %v660 = vpop.permute.xlu0 %659
        %s662 = sor.u32 256, 80
        %663 = vbcast.lane.b32.xlu0 %v621, %s662
        %v664 = vpop.permute.xlu0 %663
        %s666 = sor.u32 256, 88
        %667 = vbcast.lane.b32.xlu0 %v621, %s666
        %v668 = vpop.permute.xlu0 %667
        %s670 = sor.u32 256, 96
        %671 = vbcast.lane.b32.xlu0 %v621, %s670
        %v672 = vpop.permute.xlu0 %671
        %s674 = sor.u32 256, 104
        %675 = vbcast.lane.b32.xlu0 %v621, %s674
        %v676 = vpop.permute.xlu0 %675
        %s678 = sor.u32 256, 112
        %679 = vbcast.lane.b32.xlu0 %v621, %s678
        %v680 = vpop.permute.xlu0 %679
        %s682 = sor.u32 256, 120
        %683 = vbcast.lane.b32.xlu0 %v621, %s682
        %v684 = vpop.permute.xlu0 %683
        %v685 = vlaneseq
        %v686 = vshrl.u32 %v685, 7
        %v687 = vsub.s32 1, %v686
        %v688 = vrot.slane %v340, %v687
        %690 = vbcast.lane.b32.xlu0 %v688, 256
        %v691 = vpop.permute.xlu0 %690
        %s693 = sor.u32 256, 8
        %694 = vbcast.lane.b32.xlu0 %v688, %s693
        %v695 = vpop.permute.xlu0 %694
        %s697 = sor.u32 256, 16
        %698 = vbcast.lane.b32.xlu0 %v688, %s697
        %v699 = vpop.permute.xlu0 %698
        %s701 = sor.u32 256, 24
        %702 = vbcast.lane.b32.xlu0 %v688, %s701
        %v703 = vpop.permute.xlu0 %702
        %s705 = sor.u32 256, 32
        %706 = vbcast.lane.b32.xlu0 %v688, %s705
        %v707 = vpop.permute.xlu0 %706
        %s709 = sor.u32 256, 40
        %710 = vbcast.lane.b32.xlu0 %v688, %s709
        %v711 = vpop.permute.xlu0 %710
        %s713 = sor.u32 256, 48
        %714 = vbcast.lane.b32.xlu0 %v688, %s713
        %v715 = vpop.permute.xlu0 %714
        %s717 = sor.u32 256, 56
        %718 = vbcast.lane.b32.xlu0 %v688, %s717
        %v719 = vpop.permute.xlu0 %718
        %s721 = sor.u32 256, 64
        %722 = vbcast.lane.b32.xlu0 %v688, %s721
        %v723 = vpop.permute.xlu0 %722
        %s725 = sor.u32 256, 72
        %726 = vbcast.lane.b32.xlu0 %v688, %s725
        %v727 = vpop.permute.xlu0 %726
        %s729 = sor.u32 256, 80
        %730 = vbcast.lane.b32.xlu0 %v688, %s729
        %v731 = vpop.permute.xlu0 %730
        %s733 = sor.u32 256, 88
        %734 = vbcast.lane.b32.xlu0 %v688, %s733
        %v735 = vpop.permute.xlu0 %734
        %s737 = sor.u32 256, 96
        %738 = vbcast.lane.b32.xlu0 %v688, %s737
        %v739 = vpop.permute.xlu0 %738
        %s741 = sor.u32 256, 104
        %742 = vbcast.lane.b32.xlu0 %v688, %s741
        %v743 = vpop.permute.xlu0 %742
        %s745 = sor.u32 256, 112
        %746 = vbcast.lane.b32.xlu0 %v688, %s745
        %v747 = vpop.permute.xlu0 %746
        %s749 = sor.u32 256, 120
        %750 = vbcast.lane.b32.xlu0 %v688, %s749
        %v751 = vpop.permute.xlu0 %750
        %v752 = vlaneseq
        %v753 = vshrl.u32 %v752, 7
        %v754 = vsub.s32 2, %v753
        %v755 = vrot.slane %v340, %v754
        %757 = vbcast.lane.b32.xlu0 %v755, 256
        %v758 = vpop.permute.xlu0 %757
        %s760 = sor.u32 256, 8
        %761 = vbcast.lane.b32.xlu0 %v755, %s760
        %v762 = vpop.permute.xlu0 %761
        %s764 = sor.u32 256, 16
        %765 = vbcast.lane.b32.xlu0 %v755, %s764
        %v766 = vpop.permute.xlu0 %765
        %s768 = sor.u32 256, 24
        %769 = vbcast.lane.b32.xlu0 %v755, %s768
        %v770 = vpop.permute.xlu0 %769
        %s772 = sor.u32 256, 32
        %773 = vbcast.lane.b32.xlu0 %v755, %s772
        %v774 = vpop.permute.xlu0 %773
        %s776 = sor.u32 256, 40
        %777 = vbcast.lane.b32.xlu0 %v755, %s776
        %v778 = vpop.permute.xlu0 %777
        %s780 = sor.u32 256, 48
        %781 = vbcast.lane.b32.xlu0 %v755, %s780
        %v782 = vpop.permute.xlu0 %781
        %s784 = sor.u32 256, 56
        %785 = vbcast.lane.b32.xlu0 %v755, %s784
        %v786 = vpop.permute.xlu0 %785
        %s788 = sor.u32 256, 64
        %789 = vbcast.lane.b32.xlu0 %v755, %s788
        %v790 = vpop.permute.xlu0 %789
        %s792 = sor.u32 256, 72
        %793 = vbcast.lane.b32.xlu0 %v755, %s792
        %v794 = vpop.permute.xlu0 %793
        %s796 = sor.u32 256, 80
        %797 = vbcast.lane.b32.xlu0 %v755, %s796
        %v798 = vpop.permute.xlu0 %797
        %s800 = sor.u32 256, 88
        %801 = vbcast.lane.b32.xlu0 %v755, %s800
        %v802 = vpop.permute.xlu0 %801
        %s804 = sor.u32 256, 96
        %805 = vbcast.lane.b32.xlu0 %v755, %s804
        %v806 = vpop.permute.xlu0 %805
        %s808 = sor.u32 256, 104
        %809 = vbcast.lane.b32.xlu0 %v755, %s808
        %v810 = vpop.permute.xlu0 %809
        %s812 = sor.u32 256, 112
        %813 = vbcast.lane.b32.xlu0 %v755, %s812
        %v814 = vpop.permute.xlu0 %813
        %s816 = sor.u32 256, 120
        %817 = vbcast.lane.b32.xlu0 %v755, %s816
        %v818 = vpop.permute.xlu0 %817
        %v819 = vlaneseq
        %v820 = vshrl.u32 %v819, 7
        %v821 = vsub.s32 3, %v820
        %v822 = vrot.slane %v340, %v821
        %824 = vbcast.lane.b32.xlu0 %v822, 256
        %v825 = vpop.permute.xlu0 %824
        %s827 = sor.u32 256, 8
        %828 = vbcast.lane.b32.xlu0 %v822, %s827
        %v829 = vpop.permute.xlu0 %828
        %s831 = sor.u32 256, 16
        %832 = vbcast.lane.b32.xlu0 %v822, %s831
        %v833 = vpop.permute.xlu0 %832
        %s835 = sor.u32 256, 24
        %836 = vbcast.lane.b32.xlu0 %v822, %s835
        %v837 = vpop.permute.xlu0 %836
        %s839 = sor.u32 256, 32
        %840 = vbcast.lane.b32.xlu0 %v822, %s839
        %v841 = vpop.permute.xlu0 %840
        %s843 = sor.u32 256, 40
        %844 = vbcast.lane.b32.xlu0 %v822, %s843
        %v845 = vpop.permute.xlu0 %844
        %s847 = sor.u32 256, 48
        %848 = vbcast.lane.b32.xlu0 %v822, %s847
        %v849 = vpop.permute.xlu0 %848
        %s851 = sor.u32 256, 56
        %852 = vbcast.lane.b32.xlu0 %v822, %s851
        %v853 = vpop.permute.xlu0 %852
        %s855 = sor.u32 256, 64
        %856 = vbcast.lane.b32.xlu0 %v822, %s855
        %v857 = vpop.permute.xlu0 %856
        %s859 = sor.u32 256, 72
        %860 = vbcast.lane.b32.xlu0 %v822, %s859
        %v861 = vpop.permute.xlu0 %860
        %s863 = sor.u32 256, 80
        %864 = vbcast.lane.b32.xlu0 %v822, %s863
        %v865 = vpop.permute.xlu0 %864
        %s867 = sor.u32 256, 88
        %868 = vbcast.lane.b32.xlu0 %v822, %s867
        %v869 = vpop.permute.xlu0 %868
        %s871 = sor.u32 256, 96
        %872 = vbcast.lane.b32.xlu0 %v822, %s871
        %v873 = vpop.permute.xlu0 %872
        %s875 = sor.u32 256, 104
        %876 = vbcast.lane.b32.xlu0 %v822, %s875
        %v877 = vpop.permute.xlu0 %876
        %s879 = sor.u32 256, 112
        %880 = vbcast.lane.b32.xlu0 %v822, %s879
        %v881 = vpop.permute.xlu0 %880
        %s883 = sor.u32 256, 120
        %884 = vbcast.lane.b32.xlu0 %v822, %s883
        %v885 = vpop.permute.xlu0 %884
        %v886 = vlaneseq
        %v887 = vshrl.u32 %v886, 7
        %v888 = vsub.s32 4, %v887
        %v889 = vrot.slane %v340, %v888
        %891 = vbcast.lane.b32.xlu0 %v889, 256
        %v892 = vpop.permute.xlu0 %891
        %s894 = sor.u32 256, 8
        %895 = vbcast.lane.b32.xlu0 %v889, %s894
        %v896 = vpop.permute.xlu0 %895
        %s898 = sor.u32 256, 16
        %899 = vbcast.lane.b32.xlu0 %v889, %s898
        %v900 = vpop.permute.xlu0 %899
        %s902 = sor.u32 256, 24
        %903 = vbcast.lane.b32.xlu0 %v889, %s902
        %v904 = vpop.permute.xlu0 %903
        %s906 = sor.u32 256, 32
        %907 = vbcast.lane.b32.xlu0 %v889, %s906
        %v908 = vpop.permute.xlu0 %907
        %s910 = sor.u32 256, 40
        %911 = vbcast.lane.b32.xlu0 %v889, %s910
        %v912 = vpop.permute.xlu0 %911
        %s914 = sor.u32 256, 48
        %915 = vbcast.lane.b32.xlu0 %v889, %s914
        %v916 = vpop.permute.xlu0 %915
        %s918 = sor.u32 256, 56
        %919 = vbcast.lane.b32.xlu0 %v889, %s918
        %v920 = vpop.permute.xlu0 %919
        %s922 = sor.u32 256, 64
        %923 = vbcast.lane.b32.xlu0 %v889, %s922
        %v924 = vpop.permute.xlu0 %923
        %s926 = sor.u32 256, 72
        %927 = vbcast.lane.b32.xlu0 %v889, %s926
        %v928 = vpop.permute.xlu0 %927
        %s930 = sor.u32 256, 80
        %931 = vbcast.lane.b32.xlu0 %v889, %s930
        %v932 = vpop.permute.xlu0 %931
        %s934 = sor.u32 256, 88
        %935 = vbcast.lane.b32.xlu0 %v889, %s934
        %v936 = vpop.permute.xlu0 %935
        %s938 = sor.u32 256, 96
        %939 = vbcast.lane.b32.xlu0 %v889, %s938
        %v940 = vpop.permute.xlu0 %939
        %s942 = sor.u32 256, 104
        %943 = vbcast.lane.b32.xlu0 %v889, %s942
        %v944 = vpop.permute.xlu0 %943
        %s946 = sor.u32 256, 112
        %947 = vbcast.lane.b32.xlu0 %v889, %s946
        %v948 = vpop.permute.xlu0 %947
        %s950 = sor.u32 256, 120
        %951 = vbcast.lane.b32.xlu0 %v889, %s950
        %v952 = vpop.permute.xlu0 %951
        %v953 = vlaneseq
        %v954 = vshrl.u32 %v953, 7
        %v955 = vsub.s32 5, %v954
        %v956 = vrot.slane %v340, %v955
        %958 = vbcast.lane.b32.xlu0 %v956, 256
        %v959 = vpop.permute.xlu0 %958
        %s961 = sor.u32 256, 8
        %962 = vbcast.lane.b32.xlu0 %v956, %s961
        %v963 = vpop.permute.xlu0 %962
        %s965 = sor.u32 256, 16
        %966 = vbcast.lane.b32.xlu0 %v956, %s965
        %v967 = vpop.permute.xlu0 %966
        %s969 = sor.u32 256, 24
        %970 = vbcast.lane.b32.xlu0 %v956, %s969
        %v971 = vpop.permute.xlu0 %970
        %s973 = sor.u32 256, 32
        %974 = vbcast.lane.b32.xlu0 %v956, %s973
        %v975 = vpop.permute.xlu0 %974
        %s977 = sor.u32 256, 40
        %978 = vbcast.lane.b32.xlu0 %v956, %s977
        %v979 = vpop.permute.xlu0 %978
        %s981 = sor.u32 256, 48
        %982 = vbcast.lane.b32.xlu0 %v956, %s981
        %v983 = vpop.permute.xlu0 %982
        %s985 = sor.u32 256, 56
        %986 = vbcast.lane.b32.xlu0 %v956, %s985
        %v987 = vpop.permute.xlu0 %986
        %s989 = sor.u32 256, 64
        %990 = vbcast.lane.b32.xlu0 %v956, %s989
        %v991 = vpop.permute.xlu0 %990
        %s993 = sor.u32 256, 72
        %994 = vbcast.lane.b32.xlu0 %v956, %s993
        %v995 = vpop.permute.xlu0 %994
        %s997 = sor.u32 256, 80
        %998 = vbcast.lane.b32.xlu0 %v956, %s997
        %v999 = vpop.permute.xlu0 %998
        %s1001 = sor.u32 256, 88
        %1002 = vbcast.lane.b32.xlu0 %v956, %s1001
        %v1003 = vpop.permute.xlu0 %1002
        %s1005 = sor.u32 256, 96
        %1006 = vbcast.lane.b32.xlu0 %v956, %s1005
        %v1007 = vpop.permute.xlu0 %1006
        %s1009 = sor.u32 256, 104
        %1010 = vbcast.lane.b32.xlu0 %v956, %s1009
        %v1011 = vpop.permute.xlu0 %1010
        %s1013 = sor.u32 256, 112
        %1014 = vbcast.lane.b32.xlu0 %v956, %s1013
        %v1015 = vpop.permute.xlu0 %1014
        %s1017 = sor.u32 256, 120
        %1018 = vbcast.lane.b32.xlu0 %v956, %s1017
        %v1019 = vpop.permute.xlu0 %1018
        %v1020 = vlaneseq
        %v1021 = vshrl.u32 %v1020, 7
        %v1022 = vsub.s32 6, %v1021
        %v1023 = vrot.slane %v340, %v1022
        %1025 = vbcast.lane.b32.xlu0 %v1023, 256
        %v1026 = vpop.permute.xlu0 %1025
        %s1028 = sor.u32 256, 8
        %1029 = vbcast.lane.b32.xlu0 %v1023, %s1028
        %v1030 = vpop.permute.xlu0 %1029
        %s1032 = sor.u32 256, 16
        %1033 = vbcast.lane.b32.xlu0 %v1023, %s1032
        %v1034 = vpop.permute.xlu0 %1033
        %s1036 = sor.u32 256, 24
        %1037 = vbcast.lane.b32.xlu0 %v1023, %s1036
        %v1038 = vpop.permute.xlu0 %1037
        %s1040 = sor.u32 256, 32
        %1041 = vbcast.lane.b32.xlu0 %v1023, %s1040
        %v1042 = vpop.permute.xlu0 %1041
        %s1044 = sor.u32 256, 40
        %1045 = vbcast.lane.b32.xlu0 %v1023, %s1044
        %v1046 = vpop.permute.xlu0 %1045
        %s1048 = sor.u32 256, 48
        %1049 = vbcast.lane.b32.xlu0 %v1023, %s1048
        %v1050 = vpop.permute.xlu0 %1049
        %s1052 = sor.u32 256, 56
        %1053 = vbcast.lane.b32.xlu0 %v1023, %s1052
        %v1054 = vpop.permute.xlu0 %1053
        %s1056 = sor.u32 256, 64
        %1057 = vbcast.lane.b32.xlu0 %v1023, %s1056
        %v1058 = vpop.permute.xlu0 %1057
        %s1060 = sor.u32 256, 72
        %1061 = vbcast.lane.b32.xlu0 %v1023, %s1060
        %v1062 = vpop.permute.xlu0 %1061
        %s1064 = sor.u32 256, 80
        %1065 = vbcast.lane.b32.xlu0 %v1023, %s1064
        %v1066 = vpop.permute.xlu0 %1065
        %s1068 = sor.u32 256, 88
        %1069 = vbcast.lane.b32.xlu0 %v1023, %s1068
        %v1070 = vpop.permute.xlu0 %1069
        %s1072 = sor.u32 256, 96
        %1073 = vbcast.lane.b32.xlu0 %v1023, %s1072
        %v1074 = vpop.permute.xlu0 %1073
        %s1076 = sor.u32 256, 104
        %1077 = vbcast.lane.b32.xlu0 %v1023, %s1076
        %v1078 = vpop.permute.xlu0 %1077
        %s1080 = sor.u32 256, 112
        %1081 = vbcast.lane.b32.xlu0 %v1023, %s1080
        %v1082 = vpop.permute.xlu0 %1081
        %s1084 = sor.u32 256, 120
        %1085 = vbcast.lane.b32.xlu0 %v1023, %s1084
        %v1086 = vpop.permute.xlu0 %1085
        %v1087 = vlaneseq
        %v1088 = vshrl.u32 %v1087, 7
        %v1089 = vsub.s32 7, %v1088
        %v1090 = vrot.slane %v340, %v1089
        %1092 = vbcast.lane.b32.xlu0 %v1090, 256
        %v1093 = vpop.permute.xlu0 %1092
        %s1095 = sor.u32 256, 8
        %1096 = vbcast.lane.b32.xlu0 %v1090, %s1095
        %v1097 = vpop.permute.xlu0 %1096
        %s1099 = sor.u32 256, 16
        %1100 = vbcast.lane.b32.xlu0 %v1090, %s1099
        %v1101 = vpop.permute.xlu0 %1100
        %s1103 = sor.u32 256, 24
        %1104 = vbcast.lane.b32.xlu0 %v1090, %s1103
        %v1105 = vpop.permute.xlu0 %1104
        %s1107 = sor.u32 256, 32
        %1108 = vbcast.lane.b32.xlu0 %v1090, %s1107
        %v1109 = vpop.permute.xlu0 %1108
        %s1111 = sor.u32 256, 40
        %1112 = vbcast.lane.b32.xlu0 %v1090, %s1111
        %v1113 = vpop.permute.xlu0 %1112
        %s1115 = sor.u32 256, 48
        %1116 = vbcast.lane.b32.xlu0 %v1090, %s1115
        %v1117 = vpop.permute.xlu0 %1116
        %s1119 = sor.u32 256, 56
        %1120 = vbcast.lane.b32.xlu0 %v1090, %s1119
        %v1121 = vpop.permute.xlu0 %1120
        %s1123 = sor.u32 256, 64
        %1124 = vbcast.lane.b32.xlu0 %v1090, %s1123
        %v1125 = vpop.permute.xlu0 %1124
        %s1127 = sor.u32 256, 72
        %1128 = vbcast.lane.b32.xlu0 %v1090, %s1127
        %v1129 = vpop.permute.xlu0 %1128
        %s1131 = sor.u32 256, 80
        %1132 = vbcast.lane.b32.xlu0 %v1090, %s1131
        %v1133 = vpop.permute.xlu0 %1132
        %s1135 = sor.u32 256, 88
        %1136 = vbcast.lane.b32.xlu0 %v1090, %s1135
        %v1137 = vpop.permute.xlu0 %1136
        %s1139 = sor.u32 256, 96
        %1140 = vbcast.lane.b32.xlu0 %v1090, %s1139
        %v1141 = vpop.permute.xlu0 %1140
        %s1143 = sor.u32 256, 104
        %1144 = vbcast.lane.b32.xlu0 %v1090, %s1143
        %v1145 = vpop.permute.xlu0 %1144
        %s1147 = sor.u32 256, 112
        %1148 = vbcast.lane.b32.xlu0 %v1090, %s1147
        %v1149 = vpop.permute.xlu0 %1148
        %s1151 = sor.u32 256, 120
        %1152 = vbcast.lane.b32.xlu0 %v1090, %s1151
        %v1153 = vpop.permute.xlu0 %1152
        %v1154 = vlaneseq
        %v1155 = vshrl.u32 %v1154, 7
        %v1156 = vsub.s32 0, %v1155
        %v1157 = vrot.slane %v341, %v1156
        %1159 = vbcast.lane.b32.xlu0 %v1157, 256
        %v1160 = vpop.permute.xlu0 %1159
        %s1162 = sor.u32 256, 8
        %1163 = vbcast.lane.b32.xlu0 %v1157, %s1162
        %v1164 = vpop.permute.xlu0 %1163
        %s1166 = sor.u32 256, 16
        %1167 = vbcast.lane.b32.xlu0 %v1157, %s1166
        %v1168 = vpop.permute.xlu0 %1167
        %s1170 = sor.u32 256, 24
        %1171 = vbcast.lane.b32.xlu0 %v1157, %s1170
        %v1172 = vpop.permute.xlu0 %1171
        %s1174 = sor.u32 256, 32
        %1175 = vbcast.lane.b32.xlu0 %v1157, %s1174
        %v1176 = vpop.permute.xlu0 %1175
        %s1178 = sor.u32 256, 40
        %1179 = vbcast.lane.b32.xlu0 %v1157, %s1178
        %v1180 = vpop.permute.xlu0 %1179
        %s1182 = sor.u32 256, 48
        %1183 = vbcast.lane.b32.xlu0 %v1157, %s1182
        %v1184 = vpop.permute.xlu0 %1183
        %s1186 = sor.u32 256, 56
        %1187 = vbcast.lane.b32.xlu0 %v1157, %s1186
        %v1188 = vpop.permute.xlu0 %1187
        %s1190 = sor.u32 256, 64
        %1191 = vbcast.lane.b32.xlu0 %v1157, %s1190
        %v1192 = vpop.permute.xlu0 %1191
        %s1194 = sor.u32 256, 72
        %1195 = vbcast.lane.b32.xlu0 %v1157, %s1194
        %v1196 = vpop.permute.xlu0 %1195
        %s1198 = sor.u32 256, 80
        %1199 = vbcast.lane.b32.xlu0 %v1157, %s1198
        %v1200 = vpop.permute.xlu0 %1199
        %s1202 = sor.u32 256, 88
        %1203 = vbcast.lane.b32.xlu0 %v1157, %s1202
        %v1204 = vpop.permute.xlu0 %1203
        %s1206 = sor.u32 256, 96
        %1207 = vbcast.lane.b32.xlu0 %v1157, %s1206
        %v1208 = vpop.permute.xlu0 %1207
        %s1210 = sor.u32 256, 104
        %1211 = vbcast.lane.b32.xlu0 %v1157, %s1210
        %v1212 = vpop.permute.xlu0 %1211
        %s1214 = sor.u32 256, 112
        %1215 = vbcast.lane.b32.xlu0 %v1157, %s1214
        %v1216 = vpop.permute.xlu0 %1215
        %s1218 = sor.u32 256, 120
        %1219 = vbcast.lane.b32.xlu0 %v1157, %s1218
        %v1220 = vpop.permute.xlu0 %1219
        %v1221 = vlaneseq
        %v1222 = vshrl.u32 %v1221, 7
        %v1223 = vsub.s32 1, %v1222
        %v1224 = vrot.slane %v341, %v1223
        %1226 = vbcast.lane.b32.xlu0 %v1224, 256
        %v1227 = vpop.permute.xlu0 %1226
        %s1229 = sor.u32 256, 8
        %1230 = vbcast.lane.b32.xlu0 %v1224, %s1229
        %v1231 = vpop.permute.xlu0 %1230
        %s1233 = sor.u32 256, 16
        %1234 = vbcast.lane.b32.xlu0 %v1224, %s1233
        %v1235 = vpop.permute.xlu0 %1234
        %s1237 = sor.u32 256, 24
        %1238 = vbcast.lane.b32.xlu0 %v1224, %s1237
        %v1239 = vpop.permute.xlu0 %1238
        %s1241 = sor.u32 256, 32
        %1242 = vbcast.lane.b32.xlu0 %v1224, %s1241
        %v1243 = vpop.permute.xlu0 %1242
        %s1245 = sor.u32 256, 40
        %1246 = vbcast.lane.b32.xlu0 %v1224, %s1245
        %v1247 = vpop.permute.xlu0 %1246
        %s1249 = sor.u32 256, 48
        %1250 = vbcast.lane.b32.xlu0 %v1224, %s1249
        %v1251 = vpop.permute.xlu0 %1250
        %s1253 = sor.u32 256, 56
        %1254 = vbcast.lane.b32.xlu0 %v1224, %s1253
        %v1255 = vpop.permute.xlu0 %1254
        %s1257 = sor.u32 256, 64
        %1258 = vbcast.lane.b32.xlu0 %v1224, %s1257
        %v1259 = vpop.permute.xlu0 %1258
        %s1261 = sor.u32 256, 72
        %1262 = vbcast.lane.b32.xlu0 %v1224, %s1261
        %v1263 = vpop.permute.xlu0 %1262
        %s1265 = sor.u32 256, 80
        %1266 = vbcast.lane.b32.xlu0 %v1224, %s1265
        %v1267 = vpop.permute.xlu0 %1266
        %s1269 = sor.u32 256, 88
        %1270 = vbcast.lane.b32.xlu0 %v1224, %s1269
        %v1271 = vpop.permute.xlu0 %1270
        %s1273 = sor.u32 256, 96
        %1274 = vbcast.lane.b32.xlu0 %v1224, %s1273
        %v1275 = vpop.permute.xlu0 %1274
        %s1277 = sor.u32 256, 104
        %1278 = vbcast.lane.b32.xlu0 %v1224, %s1277
        %v1279 = vpop.permute.xlu0 %1278
        %s1281 = sor.u32 256, 112
        %1282 = vbcast.lane.b32.xlu0 %v1224, %s1281
        %v1283 = vpop.permute.xlu0 %1282
        %s1285 = sor.u32 256, 120
        %1286 = vbcast.lane.b32.xlu0 %v1224, %s1285
        %v1287 = vpop.permute.xlu0 %1286
        %v1288 = vlaneseq
        %v1289 = vshrl.u32 %v1288, 7
        %v1290 = vsub.s32 2, %v1289
        %v1291 = vrot.slane %v341, %v1290
        %1293 = vbcast.lane.b32.xlu0 %v1291, 256
        %v1294 = vpop.permute.xlu0 %1293
        %s1296 = sor.u32 256, 8
        %1297 = vbcast.lane.b32.xlu0 %v1291, %s1296
        %v1298 = vpop.permute.xlu0 %1297
        %s1300 = sor.u32 256, 16
        %1301 = vbcast.lane.b32.xlu0 %v1291, %s1300
        %v1302 = vpop.permute.xlu0 %1301
        %s1304 = sor.u32 256, 24
        %1305 = vbcast.lane.b32.xlu0 %v1291, %s1304
        %v1306 = vpop.permute.xlu0 %1305
        %s1308 = sor.u32 256, 32
        %1309 = vbcast.lane.b32.xlu0 %v1291, %s1308
        %v1310 = vpop.permute.xlu0 %1309
        %s1312 = sor.u32 256, 40
        %1313 = vbcast.lane.b32.xlu0 %v1291, %s1312
        %v1314 = vpop.permute.xlu0 %1313
        %s1316 = sor.u32 256, 48
        %1317 = vbcast.lane.b32.xlu0 %v1291, %s1316
        %v1318 = vpop.permute.xlu0 %1317
        %s1320 = sor.u32 256, 56
        %1321 = vbcast.lane.b32.xlu0 %v1291, %s1320
        %v1322 = vpop.permute.xlu0 %1321
        %s1324 = sor.u32 256, 64
        %1325 = vbcast.lane.b32.xlu0 %v1291, %s1324
        %v1326 = vpop.permute.xlu0 %1325
        %s1328 = sor.u32 256, 72
        %1329 = vbcast.lane.b32.xlu0 %v1291, %s1328
        %v1330 = vpop.permute.xlu0 %1329
        %s1332 = sor.u32 256, 80
        %1333 = vbcast.lane.b32.xlu0 %v1291, %s1332
        %v1334 = vpop.permute.xlu0 %1333
        %s1336 = sor.u32 256, 88
        %1337 = vbcast.lane.b32.xlu0 %v1291, %s1336
        %v1338 = vpop.permute.xlu0 %1337
        %s1340 = sor.u32 256, 96
        %1341 = vbcast.lane.b32.xlu0 %v1291, %s1340
        %v1342 = vpop.permute.xlu0 %1341
        %s1344 = sor.u32 256, 104
        %1345 = vbcast.lane.b32.xlu0 %v1291, %s1344
        %v1346 = vpop.permute.xlu0 %1345
        %s1348 = sor.u32 256, 112
        %1349 = vbcast.lane.b32.xlu0 %v1291, %s1348
        %v1350 = vpop.permute.xlu0 %1349
        %s1352 = sor.u32 256, 120
        %1353 = vbcast.lane.b32.xlu0 %v1291, %s1352
        %v1354 = vpop.permute.xlu0 %1353
        %v1355 = vlaneseq
        %v1356 = vshrl.u32 %v1355, 7
        %v1357 = vsub.s32 3, %v1356
        %v1358 = vrot.slane %v341, %v1357
        %1360 = vbcast.lane.b32.xlu0 %v1358, 256
        %v1361 = vpop.permute.xlu0 %1360
        %s1363 = sor.u32 256, 8
        %1364 = vbcast.lane.b32.xlu0 %v1358, %s1363
        %v1365 = vpop.permute.xlu0 %1364
        %s1367 = sor.u32 256, 16
        %1368 = vbcast.lane.b32.xlu0 %v1358, %s1367
        %v1369 = vpop.permute.xlu0 %1368
        %s1371 = sor.u32 256, 24
        %1372 = vbcast.lane.b32.xlu0 %v1358, %s1371
        %v1373 = vpop.permute.xlu0 %1372
        %s1375 = sor.u32 256, 32
        %1376 = vbcast.lane.b32.xlu0 %v1358, %s1375
        %v1377 = vpop.permute.xlu0 %1376
        %s1379 = sor.u32 256, 40
        %1380 = vbcast.lane.b32.xlu0 %v1358, %s1379
        %v1381 = vpop.permute.xlu0 %1380
        %s1383 = sor.u32 256, 48
        %1384 = vbcast.lane.b32.xlu0 %v1358, %s1383
        %v1385 = vpop.permute.xlu0 %1384
        %s1387 = sor.u32 256, 56
        %1388 = vbcast.lane.b32.xlu0 %v1358, %s1387
        %v1389 = vpop.permute.xlu0 %1388
        %s1391 = sor.u32 256, 64
        %1392 = vbcast.lane.b32.xlu0 %v1358, %s1391
        %v1393 = vpop.permute.xlu0 %1392
        %s1395 = sor.u32 256, 72
        %1396 = vbcast.lane.b32.xlu0 %v1358, %s1395
        %v1397 = vpop.permute.xlu0 %1396
        %s1399 = sor.u32 256, 80
        %1400 = vbcast.lane.b32.xlu0 %v1358, %s1399
        %v1401 = vpop.permute.xlu0 %1400
        %s1403 = sor.u32 256, 88
        %1404 = vbcast.lane.b32.xlu0 %v1358, %s1403
        %v1405 = vpop.permute.xlu0 %1404
        %s1407 = sor.u32 256, 96
        %1408 = vbcast.lane.b32.xlu0 %v1358, %s1407
        %v1409 = vpop.permute.xlu0 %1408
        %s1411 = sor.u32 256, 104
        %1412 = vbcast.lane.b32.xlu0 %v1358, %s1411
        %v1413 = vpop.permute.xlu0 %1412
        %s1415 = sor.u32 256, 112
        %1416 = vbcast.lane.b32.xlu0 %v1358, %s1415
        %v1417 = vpop.permute.xlu0 %1416
        %s1419 = sor.u32 256, 120
        %1420 = vbcast.lane.b32.xlu0 %v1358, %s1419
        %v1421 = vpop.permute.xlu0 %1420
        %v1422 = vlaneseq
        %v1423 = vshrl.u32 %v1422, 7
        %v1424 = vsub.s32 4, %v1423
        %v1425 = vrot.slane %v341, %v1424
        %1427 = vbcast.lane.b32.xlu0 %v1425, 256
        %v1428 = vpop.permute.xlu0 %1427
        %s1430 = sor.u32 256, 8
        %1431 = vbcast.lane.b32.xlu0 %v1425, %s1430
        %v1432 = vpop.permute.xlu0 %1431
        %s1434 = sor.u32 256, 16
        %1435 = vbcast.lane.b32.xlu0 %v1425, %s1434
        %v1436 = vpop.permute.xlu0 %1435
        %s1438 = sor.u32 256, 24
        %1439 = vbcast.lane.b32.xlu0 %v1425, %s1438
        %v1440 = vpop.permute.xlu0 %1439
        %s1442 = sor.u32 256, 32
        %1443 = vbcast.lane.b32.xlu0 %v1425, %s1442
        %v1444 = vpop.permute.xlu0 %1443
        %s1446 = sor.u32 256, 40
        %1447 = vbcast.lane.b32.xlu0 %v1425, %s1446
        %v1448 = vpop.permute.xlu0 %1447
        %s1450 = sor.u32 256, 48
        %1451 = vbcast.lane.b32.xlu0 %v1425, %s1450
        %v1452 = vpop.permute.xlu0 %1451
        %s1454 = sor.u32 256, 56
        %1455 = vbcast.lane.b32.xlu0 %v1425, %s1454
        %v1456 = vpop.permute.xlu0 %1455
        %s1458 = sor.u32 256, 64
        %1459 = vbcast.lane.b32.xlu0 %v1425, %s1458
        %v1460 = vpop.permute.xlu0 %1459
        %s1462 = sor.u32 256, 72
        %1463 = vbcast.lane.b32.xlu0 %v1425, %s1462
        %v1464 = vpop.permute.xlu0 %1463
        %s1466 = sor.u32 256, 80
        %1467 = vbcast.lane.b32.xlu0 %v1425, %s1466
        %v1468 = vpop.permute.xlu0 %1467
        %s1470 = sor.u32 256, 88
        %1471 = vbcast.lane.b32.xlu0 %v1425, %s1470
        %v1472 = vpop.permute.xlu0 %1471
        %s1474 = sor.u32 256, 96
        %1475 = vbcast.lane.b32.xlu0 %v1425, %s1474
        %v1476 = vpop.permute.xlu0 %1475
        %s1478 = sor.u32 256, 104
        %1479 = vbcast.lane.b32.xlu0 %v1425, %s1478
        %v1480 = vpop.permute.xlu0 %1479
        %s1482 = sor.u32 256, 112
        %1483 = vbcast.lane.b32.xlu0 %v1425, %s1482
        %v1484 = vpop.permute.xlu0 %1483
        %s1486 = sor.u32 256, 120
        %1487 = vbcast.lane.b32.xlu0 %v1425, %s1486
        %v1488 = vpop.permute.xlu0 %1487
        %v1489 = vlaneseq
        %v1490 = vshrl.u32 %v1489, 7
        %v1491 = vsub.s32 5, %v1490
        %v1492 = vrot.slane %v341, %v1491
        %1494 = vbcast.lane.b32.xlu0 %v1492, 256
        %v1495 = vpop.permute.xlu0 %1494
        %s1497 = sor.u32 256, 8
        %1498 = vbcast.lane.b32.xlu0 %v1492, %s1497
        %v1499 = vpop.permute.xlu0 %1498
        %s1501 = sor.u32 256, 16
        %1502 = vbcast.lane.b32.xlu0 %v1492, %s1501
        %v1503 = vpop.permute.xlu0 %1502
        %s1505 = sor.u32 256, 24
        %1506 = vbcast.lane.b32.xlu0 %v1492, %s1505
        %v1507 = vpop.permute.xlu0 %1506
        %s1509 = sor.u32 256, 32
        %1510 = vbcast.lane.b32.xlu0 %v1492, %s1509
        %v1511 = vpop.permute.xlu0 %1510
        %s1513 = sor.u32 256, 40
        %1514 = vbcast.lane.b32.xlu0 %v1492, %s1513
        %v1515 = vpop.permute.xlu0 %1514
        %s1517 = sor.u32 256, 48
        %1518 = vbcast.lane.b32.xlu0 %v1492, %s1517
        %v1519 = vpop.permute.xlu0 %1518
        %s1521 = sor.u32 256, 56
        %1522 = vbcast.lane.b32.xlu0 %v1492, %s1521
        %v1523 = vpop.permute.xlu0 %1522
        %s1525 = sor.u32 256, 64
        %1526 = vbcast.lane.b32.xlu0 %v1492, %s1525
        %v1527 = vpop.permute.xlu0 %1526
        %s1529 = sor.u32 256, 72
        %1530 = vbcast.lane.b32.xlu0 %v1492, %s1529
        %v1531 = vpop.permute.xlu0 %1530
        %s1533 = sor.u32 256, 80
        %1534 = vbcast.lane.b32.xlu0 %v1492, %s1533
        %v1535 = vpop.permute.xlu0 %1534
        %s1537 = sor.u32 256, 88
        %1538 = vbcast.lane.b32.xlu0 %v1492, %s1537
        %v1539 = vpop.permute.xlu0 %1538
        %s1541 = sor.u32 256, 96
        %1542 = vbcast.lane.b32.xlu0 %v1492, %s1541
        %v1543 = vpop.permute.xlu0 %1542
        %s1545 = sor.u32 256, 104
        %1546 = vbcast.lane.b32.xlu0 %v1492, %s1545
        %v1547 = vpop.permute.xlu0 %1546
        %s1549 = sor.u32 256, 112
        %1550 = vbcast.lane.b32.xlu0 %v1492, %s1549
        %v1551 = vpop.permute.xlu0 %1550
        %s1553 = sor.u32 256, 120
        %1554 = vbcast.lane.b32.xlu0 %v1492, %s1553
        %v1555 = vpop.permute.xlu0 %1554
        %v1556 = vlaneseq
        %v1557 = vshrl.u32 %v1556, 7
        %v1558 = vsub.s32 6, %v1557
        %v1559 = vrot.slane %v341, %v1558
        %1561 = vbcast.lane.b32.xlu0 %v1559, 256
        %v1562 = vpop.permute.xlu0 %1561
        %s1564 = sor.u32 256, 8
        %1565 = vbcast.lane.b32.xlu0 %v1559, %s1564
        %v1566 = vpop.permute.xlu0 %1565
        %s1568 = sor.u32 256, 16
        %1569 = vbcast.lane.b32.xlu0 %v1559, %s1568
        %v1570 = vpop.permute.xlu0 %1569
        %s1572 = sor.u32 256, 24
        %1573 = vbcast.lane.b32.xlu0 %v1559, %s1572
        %v1574 = vpop.permute.xlu0 %1573
        %s1576 = sor.u32 256, 32
        %1577 = vbcast.lane.b32.xlu0 %v1559, %s1576
        %v1578 = vpop.permute.xlu0 %1577
        %s1580 = sor.u32 256, 40
        %1581 = vbcast.lane.b32.xlu0 %v1559, %s1580
        %v1582 = vpop.permute.xlu0 %1581
        %s1584 = sor.u32 256, 48
        %1585 = vbcast.lane.b32.xlu0 %v1559, %s1584
        %v1586 = vpop.permute.xlu0 %1585
        %s1588 = sor.u32 256, 56
        %1589 = vbcast.lane.b32.xlu0 %v1559, %s1588
        %v1590 = vpop.permute.xlu0 %1589
        %s1592 = sor.u32 256, 64
        %1593 = vbcast.lane.b32.xlu0 %v1559, %s1592
        %v1594 = vpop.permute.xlu0 %1593
        %s1596 = sor.u32 256, 72
        %1597 = vbcast.lane.b32.xlu0 %v1559, %s1596
        %v1598 = vpop.permute.xlu0 %1597
        %s1600 = sor.u32 256, 80
        %1601 = vbcast.lane.b32.xlu0 %v1559, %s1600
        %v1602 = vpop.permute.xlu0 %1601
        %s1604 = sor.u32 256, 88
        %1605 = vbcast.lane.b32.xlu0 %v1559, %s1604
        %v1606 = vpop.permute.xlu0 %1605
        %s1608 = sor.u32 256, 96
        %1609 = vbcast.lane.b32.xlu0 %v1559, %s1608
        %v1610 = vpop.permute.xlu0 %1609
        %s1612 = sor.u32 256, 104
        %1613 = vbcast.lane.b32.xlu0 %v1559, %s1612
        %v1614 = vpop.permute.xlu0 %1613
        %s1616 = sor.u32 256, 112
        %1617 = vbcast.lane.b32.xlu0 %v1559, %s1616
        %v1618 = vpop.permute.xlu0 %1617
        %s1620 = sor.u32 256, 120
        %1621 = vbcast.lane.b32.xlu0 %v1559, %s1620
        %v1622 = vpop.permute.xlu0 %1621
        %v1623 = vlaneseq
        %v1624 = vshrl.u32 %v1623, 7
        %v1625 = vsub.s32 7, %v1624
        %v1626 = vrot.slane %v341, %v1625
        %1628 = vbcast.lane.b32.xlu0 %v1626, 256
        %v1629 = vpop.permute.xlu0 %1628
        %s1631 = sor.u32 256, 8
        %1632 = vbcast.lane.b32.xlu0 %v1626, %s1631
        %v1633 = vpop.permute.xlu0 %1632
        %s1635 = sor.u32 256, 16
        %1636 = vbcast.lane.b32.xlu0 %v1626, %s1635
        %v1637 = vpop.permute.xlu0 %1636
        %s1639 = sor.u32 256, 24
        %1640 = vbcast.lane.b32.xlu0 %v1626, %s1639
        %v1641 = vpop.permute.xlu0 %1640
        %s1643 = sor.u32 256, 32
        %1644 = vbcast.lane.b32.xlu0 %v1626, %s1643
        %v1645 = vpop.permute.xlu0 %1644
        %s1647 = sor.u32 256, 40
        %1648 = vbcast.lane.b32.xlu0 %v1626, %s1647
        %v1649 = vpop.permute.xlu0 %1648
        %s1651 = sor.u32 256, 48
        %1652 = vbcast.lane.b32.xlu0 %v1626, %s1651
        %v1653 = vpop.permute.xlu0 %1652
        %s1655 = sor.u32 256, 56
        %1656 = vbcast.lane.b32.xlu0 %v1626, %s1655
        %v1657 = vpop.permute.xlu0 %1656
        %s1659 = sor.u32 256, 64
        %1660 = vbcast.lane.b32.xlu0 %v1626, %s1659
        %v1661 = vpop.permute.xlu0 %1660
        %s1663 = sor.u32 256, 72
        %1664 = vbcast.lane.b32.xlu0 %v1626, %s1663
        %v1665 = vpop.permute.xlu0 %1664
        %s1667 = sor.u32 256, 80
        %1668 = vbcast.lane.b32.xlu0 %v1626, %s1667
        %v1669 = vpop.permute.xlu0 %1668
        %s1671 = sor.u32 256, 88
        %1672 = vbcast.lane.b32.xlu0 %v1626, %s1671
        %v1673 = vpop.permute.xlu0 %1672
        %s1675 = sor.u32 256, 96
        %1676 = vbcast.lane.b32.xlu0 %v1626, %s1675
        %v1677 = vpop.permute.xlu0 %1676
        %s1679 = sor.u32 256, 104
        %1680 = vbcast.lane.b32.xlu0 %v1626, %s1679
        %v1681 = vpop.permute.xlu0 %1680
        %s1683 = sor.u32 256, 112
        %1684 = vbcast.lane.b32.xlu0 %v1626, %s1683
        %v1685 = vpop.permute.xlu0 %1684
        %s1687 = sor.u32 256, 120
        %1688 = vbcast.lane.b32.xlu0 %v1626, %s1687
        %v1689 = vpop.permute.xlu0 %1688
        %v1690 = vsub.f32 %v346, %v624
        %v1691 = vsub.f32 %v347, %v628
        %v1692 = vsub.f32 %v348, %v632
        %v1693 = vsub.f32 %v349, %v636
        %v1694 = vsub.f32 %v350, %v640
        %v1695 = vsub.f32 %v351, %v644
        %v1696 = vsub.f32 %v352, %v648
        %v1697 = vsub.f32 %v353, %v652
        %v1698 = vsub.f32 %v354, %v656
        %v1699 = vsub.f32 %v355, %v660
        %v1700 = vsub.f32 %v356, %v664
        %v1701 = vsub.f32 %v357, %v668
        %v1702 = vsub.f32 %v358, %v672
        %v1703 = vsub.f32 %v359, %v676
        %v1704 = vsub.f32 %v360, %v680
        %v1705 = vsub.f32 %v361, %v684
        %v1706 = vsub.f32 %v362, %v691
        %v1707 = vsub.f32 %v363, %v695
        %v1708 = vsub.f32 %v364, %v699
        %v1709 = vsub.f32 %v365, %v703
        %v1710 = vsub.f32 %v366, %v707
        %v1711 = vsub.f32 %v367, %v711
        %v1712 = vsub.f32 %v368, %v715
        %v1713 = vsub.f32 %v369, %v719
        %v1714 = vsub.f32 %v370, %v723
        %v1715 = vsub.f32 %v371, %v727
        %v1716 = vsub.f32 %v372, %v731
        %v1717 = vsub.f32 %v373, %v735
        %v1718 = vsub.f32 %v374, %v739
        %v1719 = vsub.f32 %v375, %v743
        %v1720 = vsub.f32 %v376, %v747
        %v1721 = vsub.f32 %v377, %v751
        %v1722 = vsub.f32 %v378, %v758
        %v1723 = vsub.f32 %v379, %v762
        %v1724 = vsub.f32 %v380, %v766
        %v1725 = vsub.f32 %v381, %v770
        %v1726 = vsub.f32 %v382, %v774
        %v1727 = vsub.f32 %v383, %v778
        %v1728 = vsub.f32 %v384, %v782
        %v1729 = vsub.f32 %v385, %v786
        %v1730 = vsub.f32 %v386, %v790
        %v1731 = vsub.f32 %v387, %v794
        %v1732 = vsub.f32 %v388, %v798
        %v1733 = vsub.f32 %v389, %v802
        %v1734 = vsub.f32 %v390, %v806
        %v1735 = vsub.f32 %v391, %v810
        %v1736 = vsub.f32 %v392, %v814
        %v1737 = vsub.f32 %v393, %v818
        %v1738 = vsub.f32 %v394, %v825
        %v1739 = vsub.f32 %v395, %v829
        %v1740 = vsub.f32 %v396, %v833
        %v1741 = vsub.f32 %v397, %v837
        %v1742 = vsub.f32 %v398, %v841
        %v1743 = vsub.f32 %v399, %v845
        %v1744 = vsub.f32 %v400, %v849
        %v1745 = vsub.f32 %v401, %v853
        %v1746 = vsub.f32 %v402, %v857
        %v1747 = vsub.f32 %v403, %v861
        %v1748 = vsub.f32 %v404, %v865
        %v1749 = vsub.f32 %v405, %v869
        %v1750 = vsub.f32 %v406, %v873
        %v1751 = vsub.f32 %v407, %v877
        %v1752 = vsub.f32 %v408, %v881
        %v1753 = vsub.f32 %v409, %v885
        %v1754 = vsub.f32 %v410, %v892
        %v1755 = vsub.f32 %v411, %v896
        %v1756 = vsub.f32 %v412, %v900
        %v1757 = vsub.f32 %v413, %v904
        %v1758 = vsub.f32 %v414, %v908
        %v1759 = vsub.f32 %v415, %v912
        %v1760 = vsub.f32 %v416, %v916
        %v1761 = vsub.f32 %v417, %v920
        %v1762 = vsub.f32 %v418, %v924
        %v1763 = vsub.f32 %v419, %v928
        %v1764 = vsub.f32 %v420, %v932
        %v1765 = vsub.f32 %v421, %v936
        %v1766 = vsub.f32 %v422, %v940
        %v1767 = vsub.f32 %v423, %v944
        %v1768 = vsub.f32 %v424, %v948
        %v1769 = vsub.f32 %v425, %v952
        %v1770 = vsub.f32 %v426, %v959
        %v1771 = vsub.f32 %v427, %v963
        %v1772 = vsub.f32 %v428, %v967
        %v1773 = vsub.f32 %v429, %v971
        %v1774 = vsub.f32 %v430, %v975
        %v1775 = vsub.f32 %v431, %v979
        %v1776 = vsub.f32 %v432, %v983
        %v1777 = vsub.f32 %v433, %v987
        %v1778 = vsub.f32 %v434, %v991
        %v1779 = vsub.f32 %v435, %v995
        %v1780 = vsub.f32 %v436, %v999
        %v1781 = vsub.f32 %v437, %v1003
        %v1782 = vsub.f32 %v438, %v1007
        %v1783 = vsub.f32 %v439, %v1011
        %v1784 = vsub.f32 %v440, %v1015
        %v1785 = vsub.f32 %v441, %v1019
        %v1786 = vsub.f32 %v442, %v1026
        %v1787 = vsub.f32 %v443, %v1030
        %v1788 = vsub.f32 %v444, %v1034
        %v1789 = vsub.f32 %v445, %v1038
        %v1790 = vsub.f32 %v446, %v1042
        %v1791 = vsub.f32 %v447, %v1046
        %v1792 = vsub.f32 %v448, %v1050
        %v1793 = vsub.f32 %v449, %v1054
        %v1794 = vsub.f32 %v450, %v1058
        %v1795 = vsub.f32 %v451, %v1062
        %v1796 = vsub.f32 %v452, %v1066
        %v1797 = vsub.f32 %v453, %v1070
        %v1798 = vsub.f32 %v454, %v1074
        %v1799 = vsub.f32 %v455, %v1078
        %v1800 = vsub.f32 %v456, %v1082
        %v1801 = vsub.f32 %v457, %v1086
        %v1802 = vsub.f32 %v458, %v1093
        %v1803 = vsub.f32 %v459, %v1097
        %v1804 = vsub.f32 %v460, %v1101
        %v1805 = vsub.f32 %v461, %v1105
        %v1806 = vsub.f32 %v462, %v1109
        %v1807 = vsub.f32 %v463, %v1113
        %v1808 = vsub.f32 %v464, %v1117
        %v1809 = vsub.f32 %v465, %v1121
        %v1810 = vsub.f32 %v466, %v1125
        %v1811 = vsub.f32 %v467, %v1129
        %v1812 = vsub.f32 %v468, %v1133
        %v1813 = vsub.f32 %v469, %v1137
        %v1814 = vsub.f32 %v470, %v1141
        %v1815 = vsub.f32 %v471, %v1145
        %v1816 = vsub.f32 %v472, %v1149
        %v1817 = vsub.f32 %v473, %v1153
        %v1818 = vsub.f32 %v474, %v1160
        %v1819 = vsub.f32 %v475, %v1164
        %v1820 = vsub.f32 %v476, %v1168
        %v1821 = vsub.f32 %v477, %v1172
        %v1822 = vsub.f32 %v478, %v1176
        %v1823 = vsub.f32 %v479, %v1180
        %v1824 = vsub.f32 %v480, %v1184
        %v1825 = vsub.f32 %v481, %v1188
        %v1826 = vsub.f32 %v482, %v1192
        %v1827 = vsub.f32 %v483, %v1196
        %v1828 = vsub.f32 %v484, %v1200
        %v1829 = vsub.f32 %v485, %v1204
        %v1830 = vsub.f32 %v486, %v1208
        %v1831 = vsub.f32 %v487, %v1212
        %v1832 = vsub.f32 %v488, %v1216
        %v1833 = vsub.f32 %v489, %v1220
        %v1834 = vsub.f32 %v490, %v1227
        %v1835 = vsub.f32 %v491, %v1231
        %v1836 = vsub.f32 %v492, %v1235
        %v1837 = vsub.f32 %v493, %v1239
        %v1838 = vsub.f32 %v494, %v1243
        %v1839 = vsub.f32 %v495, %v1247
        %v1840 = vsub.f32 %v496, %v1251
        %v1841 = vsub.f32 %v497, %v1255
        %v1842 = vsub.f32 %v498, %v1259
        %v1843 = vsub.f32 %v499, %v1263
        %v1844 = vsub.f32 %v500, %v1267
        %v1845 = vsub.f32 %v501, %v1271
        %v1846 = vsub.f32 %v502, %v1275
        %v1847 = vsub.f32 %v503, %v1279
        %v1848 = vsub.f32 %v504, %v1283
        %v1849 = vsub.f32 %v505, %v1287
        %v1850 = vsub.f32 %v506, %v1294
        %v1851 = vsub.f32 %v507, %v1298
        %v1852 = vsub.f32 %v508, %v1302
        %v1853 = vsub.f32 %v509, %v1306
        %v1854 = vsub.f32 %v510, %v1310
        %v1855 = vsub.f32 %v511, %v1314
        %v1856 = vsub.f32 %v512, %v1318
        %v1857 = vsub.f32 %v513, %v1322
        %v1858 = vsub.f32 %v514, %v1326
        %v1859 = vsub.f32 %v515, %v1330
        %v1860 = vsub.f32 %v516, %v1334
        %v1861 = vsub.f32 %v517, %v1338
        %v1862 = vsub.f32 %v518, %v1342
        %v1863 = vsub.f32 %v519, %v1346
        %v1864 = vsub.f32 %v520, %v1350
        %v1865 = vsub.f32 %v521, %v1354
        %v1866 = vsub.f32 %v522, %v1361
        %v1867 = vsub.f32 %v523, %v1365
        %v1868 = vsub.f32 %v524, %v1369
        %v1869 = vsub.f32 %v525, %v1373
        %v1870 = vsub.f32 %v526, %v1377
        %v1871 = vsub.f32 %v527, %v1381
        %v1872 = vsub.f32 %v528, %v1385
        %v1873 = vsub.f32 %v529, %v1389
        %v1874 = vsub.f32 %v530, %v1393
        %v1875 = vsub.f32 %v531, %v1397
        %v1876 = vsub.f32 %v532, %v1401
        %v1877 = vsub.f32 %v533, %v1405
        %v1878 = vsub.f32 %v534, %v1409
        %v1879 = vsub.f32 %v535, %v1413
        %v1880 = vsub.f32 %v536, %v1417
        %v1881 = vsub.f32 %v537, %v1421
        %v1882 = vsub.f32 %v538, %v1428
        %v1883 = vsub.f32 %v539, %v1432
        %v1884 = vsub.f32 %v540, %v1436
        %v1885 = vsub.f32 %v541, %v1440
        %v1886 = vsub.f32 %v542, %v1444
        %v1887 = vsub.f32 %v543, %v1448
        %v1888 = vsub.f32 %v544, %v1452
        %v1889 = vsub.f32 %v545, %v1456
        %v1890 = vsub.f32 %v546, %v1460
        %v1891 = vsub.f32 %v547, %v1464
        %v1892 = vsub.f32 %v548, %v1468
        %v1893 = vsub.f32 %v549, %v1472
        %v1894 = vsub.f32 %v550, %v1476
        %v1895 = vsub.f32 %v551, %v1480
        %v1896 = vsub.f32 %v552, %v1484
        %v1897 = vsub.f32 %v553, %v1488
        %v1898 = vsub.f32 %v554, %v1495
        %v1899 = vsub.f32 %v555, %v1499
        %v1900 = vsub.f32 %v556, %v1503
        %v1901 = vsub.f32 %v557, %v1507
        %v1902 = vsub.f32 %v558, %v1511
        %v1903 = vsub.f32 %v559, %v1515
        %v1904 = vsub.f32 %v560, %v1519
        %v1905 = vsub.f32 %v561, %v1523
        %v1906 = vsub.f32 %v562, %v1527
        %v1907 = vsub.f32 %v563, %v1531
        %v1908 = vsub.f32 %v564, %v1535
        %v1909 = vsub.f32 %v565, %v1539
        %v1910 = vsub.f32 %v566, %v1543
        %v1911 = vsub.f32 %v567, %v1547
        %v1912 = vsub.f32 %v568, %v1551
        %v1913 = vsub.f32 %v569, %v1555
        %v1914 = vsub.f32 %v570, %v1562
        %v1915 = vsub.f32 %v571, %v1566
        %v1916 = vsub.f32 %v572, %v1570
        %v1917 = vsub.f32 %v573, %v1574
        %v1918 = vsub.f32 %v574, %v1578
        %v1919 = vsub.f32 %v575, %v1582
        %v1920 = vsub.f32 %v576, %v1586
        %v1921 = vsub.f32 %v577, %v1590
        %v1922 = vsub.f32 %v578, %v1594
        %v1923 = vsub.f32 %v579, %v1598
        %v1924 = vsub.f32 %v580, %v1602
        %v1925 = vsub.f32 %v581, %v1606
        %v1926 = vsub.f32 %v582, %v1610
        %v1927 = vsub.f32 %v583, %v1614
        %v1928 = vsub.f32 %v584, %v1618
        %v1929 = vsub.f32 %v585, %v1622
        %v1930 = vsub.f32 %v586, %v1629
        %v1931 = vsub.f32 %v587, %v1633
        %v1932 = vsub.f32 %v588, %v1637
        %v1933 = vsub.f32 %v589, %v1641
        %v1934 = vsub.f32 %v590, %v1645
        %v1935 = vsub.f32 %v591, %v1649
        %v1936 = vsub.f32 %v592, %v1653
        %v1937 = vsub.f32 %v593, %v1657
        %v1938 = vsub.f32 %v594, %v1661
        %v1939 = vsub.f32 %v595, %v1665
        %v1940 = vsub.f32 %v596, %v1669
        %v1941 = vsub.f32 %v597, %v1673
        %v1942 = vsub.f32 %v598, %v1677
        %v1943 = vsub.f32 %v599, %v1681
        %v1944 = vsub.f32 %v600, %v1685
        %v1945 = vsub.f32 %v601, %v1689
        %v1946 = vmul.f32 %v1690, %v1690
        %v1947 = vmul.f32 %v1691, %v1691
        %v1948 = vmul.f32 %v1692, %v1692
        %v1949 = vmul.f32 %v1693, %v1693
        %v1950 = vmul.f32 %v1694, %v1694
        %v1951 = vmul.f32 %v1695, %v1695
        %v1952 = vmul.f32 %v1696, %v1696
        %v1953 = vmul.f32 %v1697, %v1697
        %v1954 = vmul.f32 %v1698, %v1698
        %v1955 = vmul.f32 %v1699, %v1699
        %v1956 = vmul.f32 %v1700, %v1700
        %v1957 = vmul.f32 %v1701, %v1701
        %v1958 = vmul.f32 %v1702, %v1702
        %v1959 = vmul.f32 %v1703, %v1703
        %v1960 = vmul.f32 %v1704, %v1704
        %v1961 = vmul.f32 %v1705, %v1705
        %v1962 = vmul.f32 %v1706, %v1706
        %v1963 = vmul.f32 %v1707, %v1707
        %v1964 = vmul.f32 %v1708, %v1708
        %v1965 = vmul.f32 %v1709, %v1709
        %v1966 = vmul.f32 %v1710, %v1710
        %v1967 = vmul.f32 %v1711, %v1711
        %v1968 = vmul.f32 %v1712, %v1712
        %v1969 = vmul.f32 %v1713, %v1713
        %v1970 = vmul.f32 %v1714, %v1714
        %v1971 = vmul.f32 %v1715, %v1715
        %v1972 = vmul.f32 %v1716, %v1716
        %v1973 = vmul.f32 %v1717, %v1717
        %v1974 = vmul.f32 %v1718, %v1718
        %v1975 = vmul.f32 %v1719, %v1719
        %v1976 = vmul.f32 %v1720, %v1720
        %v1977 = vmul.f32 %v1721, %v1721
        %v1978 = vmul.f32 %v1722, %v1722
        %v1979 = vmul.f32 %v1723, %v1723
        %v1980 = vmul.f32 %v1724, %v1724
        %v1981 = vmul.f32 %v1725, %v1725
        %v1982 = vmul.f32 %v1726, %v1726
        %v1983 = vmul.f32 %v1727, %v1727
        %v1984 = vmul.f32 %v1728, %v1728
        %v1985 = vmul.f32 %v1729, %v1729
        %v1986 = vmul.f32 %v1730, %v1730
        %v1987 = vmul.f32 %v1731, %v1731
        %v1988 = vmul.f32 %v1732, %v1732
        %v1989 = vmul.f32 %v1733, %v1733
        %v1990 = vmul.f32 %v1734, %v1734
        %v1991 = vmul.f32 %v1735, %v1735
        %v1992 = vmul.f32 %v1736, %v1736
        %v1993 = vmul.f32 %v1737, %v1737
        %v1994 = vmul.f32 %v1738, %v1738
        %v1995 = vmul.f32 %v1739, %v1739
        %v1996 = vmul.f32 %v1740, %v1740
        %v1997 = vmul.f32 %v1741, %v1741
        %v1998 = vmul.f32 %v1742, %v1742
        %v1999 = vmul.f32 %v1743, %v1743
        %v2000 = vmul.f32 %v1744, %v1744
        %v2001 = vmul.f32 %v1745, %v1745
        %v2002 = vmul.f32 %v1746, %v1746
        %v2003 = vmul.f32 %v1747, %v1747
        %v2004 = vmul.f32 %v1748, %v1748
        %v2005 = vmul.f32 %v1749, %v1749
        %v2006 = vmul.f32 %v1750, %v1750
        %v2007 = vmul.f32 %v1751, %v1751
        %v2008 = vmul.f32 %v1752, %v1752
        %v2009 = vmul.f32 %v1753, %v1753
        %v2010 = vmul.f32 %v1754, %v1754
        %v2011 = vmul.f32 %v1755, %v1755
        %v2012 = vmul.f32 %v1756, %v1756
        %v2013 = vmul.f32 %v1757, %v1757
        %v2014 = vmul.f32 %v1758, %v1758
        %v2015 = vmul.f32 %v1759, %v1759
        %v2016 = vmul.f32 %v1760, %v1760
        %v2017 = vmul.f32 %v1761, %v1761
        %v2018 = vmul.f32 %v1762, %v1762
        %v2019 = vmul.f32 %v1763, %v1763
        %v2020 = vmul.f32 %v1764, %v1764
        %v2021 = vmul.f32 %v1765, %v1765
        %v2022 = vmul.f32 %v1766, %v1766
        %v2023 = vmul.f32 %v1767, %v1767
        %v2024 = vmul.f32 %v1768, %v1768
        %v2025 = vmul.f32 %v1769, %v1769
        %v2026 = vmul.f32 %v1770, %v1770
        %v2027 = vmul.f32 %v1771, %v1771
        %v2028 = vmul.f32 %v1772, %v1772
        %v2029 = vmul.f32 %v1773, %v1773
        %v2030 = vmul.f32 %v1774, %v1774
        %v2031 = vmul.f32 %v1775, %v1775
        %v2032 = vmul.f32 %v1776, %v1776
        %v2033 = vmul.f32 %v1777, %v1777
        %v2034 = vmul.f32 %v1778, %v1778
        %v2035 = vmul.f32 %v1779, %v1779
        %v2036 = vmul.f32 %v1780, %v1780
        %v2037 = vmul.f32 %v1781, %v1781
        %v2038 = vmul.f32 %v1782, %v1782
        %v2039 = vmul.f32 %v1783, %v1783
        %v2040 = vmul.f32 %v1784, %v1784
        %v2041 = vmul.f32 %v1785, %v1785
        %v2042 = vmul.f32 %v1786, %v1786
        %v2043 = vmul.f32 %v1787, %v1787
        %v2044 = vmul.f32 %v1788, %v1788
        %v2045 = vmul.f32 %v1789, %v1789
        %v2046 = vmul.f32 %v1790, %v1790
        %v2047 = vmul.f32 %v1791, %v1791
        %v2048 = vmul.f32 %v1792, %v1792
        %v2049 = vmul.f32 %v1793, %v1793
        %v2050 = vmul.f32 %v1794, %v1794
        %v2051 = vmul.f32 %v1795, %v1795
        %v2052 = vmul.f32 %v1796, %v1796
        %v2053 = vmul.f32 %v1797, %v1797
        %v2054 = vmul.f32 %v1798, %v1798
        %v2055 = vmul.f32 %v1799, %v1799
        %v2056 = vmul.f32 %v1800, %v1800
        %v2057 = vmul.f32 %v1801, %v1801
        %v2058 = vmul.f32 %v1802, %v1802
        %v2059 = vmul.f32 %v1803, %v1803
        %v2060 = vmul.f32 %v1804, %v1804
        %v2061 = vmul.f32 %v1805, %v1805
        %v2062 = vmul.f32 %v1806, %v1806
        %v2063 = vmul.f32 %v1807, %v1807
        %v2064 = vmul.f32 %v1808, %v1808
        %v2065 = vmul.f32 %v1809, %v1809
        %v2066 = vmul.f32 %v1810, %v1810
        %v2067 = vmul.f32 %v1811, %v1811
        %v2068 = vmul.f32 %v1812, %v1812
        %v2069 = vmul.f32 %v1813, %v1813
        %v2070 = vmul.f32 %v1814, %v1814
        %v2071 = vmul.f32 %v1815, %v1815
        %v2072 = vmul.f32 %v1816, %v1816
        %v2073 = vmul.f32 %v1817, %v1817
        %v2074 = vmul.f32 %v1818, %v1818
        %v2075 = vmul.f32 %v1819, %v1819
        %v2076 = vmul.f32 %v1820, %v1820
        %v2077 = vmul.f32 %v1821, %v1821
        %v2078 = vmul.f32 %v1822, %v1822
        %v2079 = vmul.f32 %v1823, %v1823
        %v2080 = vmul.f32 %v1824, %v1824
        %v2081 = vmul.f32 %v1825, %v1825
        %v2082 = vmul.f32 %v1826, %v1826
        %v2083 = vmul.f32 %v1827, %v1827
        %v2084 = vmul.f32 %v1828, %v1828
        %v2085 = vmul.f32 %v1829, %v1829
        %v2086 = vmul.f32 %v1830, %v1830
        %v2087 = vmul.f32 %v1831, %v1831
        %v2088 = vmul.f32 %v1832, %v1832
        %v2089 = vmul.f32 %v1833, %v1833
        %v2090 = vmul.f32 %v1834, %v1834
        %v2091 = vmul.f32 %v1835, %v1835
        %v2092 = vmul.f32 %v1836, %v1836
        %v2093 = vmul.f32 %v1837, %v1837
        %v2094 = vmul.f32 %v1838, %v1838
        %v2095 = vmul.f32 %v1839, %v1839
        %v2096 = vmul.f32 %v1840, %v1840
        %v2097 = vmul.f32 %v1841, %v1841
        %v2098 = vmul.f32 %v1842, %v1842
        %v2099 = vmul.f32 %v1843, %v1843
        %v2100 = vmul.f32 %v1844, %v1844
        %v2101 = vmul.f32 %v1845, %v1845
        %v2102 = vmul.f32 %v1846, %v1846
        %v2103 = vmul.f32 %v1847, %v1847
        %v2104 = vmul.f32 %v1848, %v1848
        %v2105 = vmul.f32 %v1849, %v1849
        %v2106 = vmul.f32 %v1850, %v1850
        %v2107 = vmul.f32 %v1851, %v1851
        %v2108 = vmul.f32 %v1852, %v1852
        %v2109 = vmul.f32 %v1853, %v1853
        %v2110 = vmul.f32 %v1854, %v1854
        %v2111 = vmul.f32 %v1855, %v1855
        %v2112 = vmul.f32 %v1856, %v1856
        %v2113 = vmul.f32 %v1857, %v1857
        %v2114 = vmul.f32 %v1858, %v1858
        %v2115 = vmul.f32 %v1859, %v1859
        %v2116 = vmul.f32 %v1860, %v1860
        %v2117 = vmul.f32 %v1861, %v1861
        %v2118 = vmul.f32 %v1862, %v1862
        %v2119 = vmul.f32 %v1863, %v1863
        %v2120 = vmul.f32 %v1864, %v1864
        %v2121 = vmul.f32 %v1865, %v1865
        %v2122 = vmul.f32 %v1866, %v1866
        %v2123 = vmul.f32 %v1867, %v1867
        %v2124 = vmul.f32 %v1868, %v1868
        %v2125 = vmul.f32 %v1869, %v1869
        %v2126 = vmul.f32 %v1870, %v1870
        %v2127 = vmul.f32 %v1871, %v1871
        %v2128 = vmul.f32 %v1872, %v1872
        %v2129 = vmul.f32 %v1873, %v1873
        %v2130 = vmul.f32 %v1874, %v1874
        %v2131 = vmul.f32 %v1875, %v1875
        %v2132 = vmul.f32 %v1876, %v1876
        %v2133 = vmul.f32 %v1877, %v1877
        %v2134 = vmul.f32 %v1878, %v1878
        %v2135 = vmul.f32 %v1879, %v1879
        %v2136 = vmul.f32 %v1880, %v1880
        %v2137 = vmul.f32 %v1881, %v1881
        %v2138 = vmul.f32 %v1882, %v1882
        %v2139 = vmul.f32 %v1883, %v1883
        %v2140 = vmul.f32 %v1884, %v1884
        %v2141 = vmul.f32 %v1885, %v1885
        %v2142 = vmul.f32 %v1886, %v1886
        %v2143 = vmul.f32 %v1887, %v1887
        %v2144 = vmul.f32 %v1888, %v1888
        %v2145 = vmul.f32 %v1889, %v1889
        %v2146 = vmul.f32 %v1890, %v1890
        %v2147 = vmul.f32 %v1891, %v1891
        %v2148 = vmul.f32 %v1892, %v1892
        %v2149 = vmul.f32 %v1893, %v1893
        %v2150 = vmul.f32 %v1894, %v1894
        %v2151 = vmul.f32 %v1895, %v1895
        %v2152 = vmul.f32 %v1896, %v1896
        %v2153 = vmul.f32 %v1897, %v1897
        %v2154 = vmul.f32 %v1898, %v1898
        %v2155 = vmul.f32 %v1899, %v1899
        %v2156 = vmul.f32 %v1900, %v1900
        %v2157 = vmul.f32 %v1901, %v1901
        %v2158 = vmul.f32 %v1902, %v1902
        %v2159 = vmul.f32 %v1903, %v1903
        %v2160 = vmul.f32 %v1904, %v1904
        %v2161 = vmul.f32 %v1905, %v1905
        %v2162 = vmul.f32 %v1906, %v1906
        %v2163 = vmul.f32 %v1907, %v1907
        %v2164 = vmul.f32 %v1908, %v1908
        %v2165 = vmul.f32 %v1909, %v1909
        %v2166 = vmul.f32 %v1910, %v1910
        %v2167 = vmul.f32 %v1911, %v1911
        %v2168 = vmul.f32 %v1912, %v1912
        %v2169 = vmul.f32 %v1913, %v1913
        %v2170 = vmul.f32 %v1914, %v1914
        %v2171 = vmul.f32 %v1915, %v1915
        %v2172 = vmul.f32 %v1916, %v1916
        %v2173 = vmul.f32 %v1917, %v1917
        %v2174 = vmul.f32 %v1918, %v1918
        %v2175 = vmul.f32 %v1919, %v1919
        %v2176 = vmul.f32 %v1920, %v1920
        %v2177 = vmul.f32 %v1921, %v1921
        %v2178 = vmul.f32 %v1922, %v1922
        %v2179 = vmul.f32 %v1923, %v1923
        %v2180 = vmul.f32 %v1924, %v1924
        %v2181 = vmul.f32 %v1925, %v1925
        %v2182 = vmul.f32 %v1926, %v1926
        %v2183 = vmul.f32 %v1927, %v1927
        %v2184 = vmul.f32 %v1928, %v1928
        %v2185 = vmul.f32 %v1929, %v1929
        %v2186 = vmul.f32 %v1930, %v1930
        %v2187 = vmul.f32 %v1931, %v1931
        %v2188 = vmul.f32 %v1932, %v1932
        %v2189 = vmul.f32 %v1933, %v1933
        %v2190 = vmul.f32 %v1934, %v1934
        %v2191 = vmul.f32 %v1935, %v1935
        %v2192 = vmul.f32 %v1936, %v1936
        %v2193 = vmul.f32 %v1937, %v1937
        %v2194 = vmul.f32 %v1938, %v1938
        %v2195 = vmul.f32 %v1939, %v1939
        %v2196 = vmul.f32 %v1940, %v1940
        %v2197 = vmul.f32 %v1941, %v1941
        %v2198 = vmul.f32 %v1942, %v1942
        %v2199 = vmul.f32 %v1943, %v1943
        %v2200 = vmul.f32 %v1944, %v1944
        %v2201 = vmul.f32 %v1945, %v1945
        %v2202 = vlaneseq
        %v2203 = vshrl.u32 %v2202, 7
        %v2204 = vsub.s32 0, %v2203
        %v2205 = vrot.slane %v607, %v2204
        %2207 = vbcast.lane.b32.xlu0 %v2205, 256
        %v2208 = vpop.permute.xlu0 %2207
        %s2210 = sor.u32 256, 8
        %2211 = vbcast.lane.b32.xlu0 %v2205, %s2210
        %v2212 = vpop.permute.xlu0 %2211
        %s2214 = sor.u32 256, 16
        %2215 = vbcast.lane.b32.xlu0 %v2205, %s2214
        %v2216 = vpop.permute.xlu0 %2215
        %s2218 = sor.u32 256, 24
        %2219 = vbcast.lane.b32.xlu0 %v2205, %s2218
        %v2220 = vpop.permute.xlu0 %2219
        %s2222 = sor.u32 256, 32
        %2223 = vbcast.lane.b32.xlu0 %v2205, %s2222
        %v2224 = vpop.permute.xlu0 %2223
        %s2226 = sor.u32 256, 40
        %2227 = vbcast.lane.b32.xlu0 %v2205, %s2226
        %v2228 = vpop.permute.xlu0 %2227
        %s2230 = sor.u32 256, 48
        %2231 = vbcast.lane.b32.xlu0 %v2205, %s2230
        %v2232 = vpop.permute.xlu0 %2231
        %s2234 = sor.u32 256, 56
        %2235 = vbcast.lane.b32.xlu0 %v2205, %s2234
        %v2236 = vpop.permute.xlu0 %2235
        %s2238 = sor.u32 256, 64
        %2239 = vbcast.lane.b32.xlu0 %v2205, %s2238
        %v2240 = vpop.permute.xlu0 %2239
        %s2242 = sor.u32 256, 72
        %2243 = vbcast.lane.b32.xlu0 %v2205, %s2242
        %v2244 = vpop.permute.xlu0 %2243
        %s2246 = sor.u32 256, 80
        %2247 = vbcast.lane.b32.xlu0 %v2205, %s2246
        %v2248 = vpop.permute.xlu0 %2247
        %s2250 = sor.u32 256, 88
        %2251 = vbcast.lane.b32.xlu0 %v2205, %s2250
        %v2252 = vpop.permute.xlu0 %2251
        %s2254 = sor.u32 256, 96
        %2255 = vbcast.lane.b32.xlu0 %v2205, %s2254
        %v2256 = vpop.permute.xlu0 %2255
        %s2258 = sor.u32 256, 104
        %2259 = vbcast.lane.b32.xlu0 %v2205, %s2258
        %v2260 = vpop.permute.xlu0 %2259
        %s2262 = sor.u32 256, 112
        %2263 = vbcast.lane.b32.xlu0 %v2205, %s2262
        %v2264 = vpop.permute.xlu0 %2263
        %s2266 = sor.u32 256, 120
        %2267 = vbcast.lane.b32.xlu0 %v2205, %s2266
        %v2268 = vpop.permute.xlu0 %2267
        %v2269 = vlaneseq
        %v2270 = vshrl.u32 %v2269, 7
        %v2271 = vsub.s32 1, %v2270
        %v2272 = vrot.slane %v607, %v2271
        %2274 = vbcast.lane.b32.xlu0 %v2272, 256
        %v2275 = vpop.permute.xlu0 %2274
        %s2277 = sor.u32 256, 8
        %2278 = vbcast.lane.b32.xlu0 %v2272, %s2277
        %v2279 = vpop.permute.xlu0 %2278
        %s2281 = sor.u32 256, 16
        %2282 = vbcast.lane.b32.xlu0 %v2272, %s2281
        %v2283 = vpop.permute.xlu0 %2282
        %s2285 = sor.u32 256, 24
        %2286 = vbcast.lane.b32.xlu0 %v2272, %s2285
        %v2287 = vpop.permute.xlu0 %2286
        %s2289 = sor.u32 256, 32
        %2290 = vbcast.lane.b32.xlu0 %v2272, %s2289
        %v2291 = vpop.permute.xlu0 %2290
        %s2293 = sor.u32 256, 40
        %2294 = vbcast.lane.b32.xlu0 %v2272, %s2293
        %v2295 = vpop.permute.xlu0 %2294
        %s2297 = sor.u32 256, 48
        %2298 = vbcast.lane.b32.xlu0 %v2272, %s2297
        %v2299 = vpop.permute.xlu0 %2298
        %s2301 = sor.u32 256, 56
        %2302 = vbcast.lane.b32.xlu0 %v2272, %s2301
        %v2303 = vpop.permute.xlu0 %2302
        %s2305 = sor.u32 256, 64
        %2306 = vbcast.lane.b32.xlu0 %v2272, %s2305
        %v2307 = vpop.permute.xlu0 %2306
        %s2309 = sor.u32 256, 72
        %2310 = vbcast.lane.b32.xlu0 %v2272, %s2309
        %v2311 = vpop.permute.xlu0 %2310
        %s2313 = sor.u32 256, 80
        %2314 = vbcast.lane.b32.xlu0 %v2272, %s2313
        %v2315 = vpop.permute.xlu0 %2314
        %s2317 = sor.u32 256, 88
        %2318 = vbcast.lane.b32.xlu0 %v2272, %s2317
        %v2319 = vpop.permute.xlu0 %2318
        %s2321 = sor.u32 256, 96
        %2322 = vbcast.lane.b32.xlu0 %v2272, %s2321
        %v2323 = vpop.permute.xlu0 %2322
        %s2325 = sor.u32 256, 104
        %2326 = vbcast.lane.b32.xlu0 %v2272, %s2325
        %v2327 = vpop.permute.xlu0 %2326
        %s2329 = sor.u32 256, 112
        %2330 = vbcast.lane.b32.xlu0 %v2272, %s2329
        %v2331 = vpop.permute.xlu0 %2330
        %s2333 = sor.u32 256, 120
        %2334 = vbcast.lane.b32.xlu0 %v2272, %s2333
        %v2335 = vpop.permute.xlu0 %2334
        %v2336 = vlaneseq
        %v2337 = vshrl.u32 %v2336, 7
        %v2338 = vsub.s32 2, %v2337
        %v2339 = vrot.slane %v607, %v2338
        %2341 = vbcast.lane.b32.xlu0 %v2339, 256
        %v2342 = vpop.permute.xlu0 %2341
        %s2344 = sor.u32 256, 8
        %2345 = vbcast.lane.b32.xlu0 %v2339, %s2344
        %v2346 = vpop.permute.xlu0 %2345
        %s2348 = sor.u32 256, 16
        %2349 = vbcast.lane.b32.xlu0 %v2339, %s2348
        %v2350 = vpop.permute.xlu0 %2349
        %s2352 = sor.u32 256, 24
        %2353 = vbcast.lane.b32.xlu0 %v2339, %s2352
        %v2354 = vpop.permute.xlu0 %2353
        %s2356 = sor.u32 256, 32
        %2357 = vbcast.lane.b32.xlu0 %v2339, %s2356
        %v2358 = vpop.permute.xlu0 %2357
        %s2360 = sor.u32 256, 40
        %2361 = vbcast.lane.b32.xlu0 %v2339, %s2360
        %v2362 = vpop.permute.xlu0 %2361
        %s2364 = sor.u32 256, 48
        %2365 = vbcast.lane.b32.xlu0 %v2339, %s2364
        %v2366 = vpop.permute.xlu0 %2365
        %s2368 = sor.u32 256, 56
        %2369 = vbcast.lane.b32.xlu0 %v2339, %s2368
        %v2370 = vpop.permute.xlu0 %2369
        %s2372 = sor.u32 256, 64
        %2373 = vbcast.lane.b32.xlu0 %v2339, %s2372
        %v2374 = vpop.permute.xlu0 %2373
        %s2376 = sor.u32 256, 72
        %2377 = vbcast.lane.b32.xlu0 %v2339, %s2376
        %v2378 = vpop.permute.xlu0 %2377
        %s2380 = sor.u32 256, 80
        %2381 = vbcast.lane.b32.xlu0 %v2339, %s2380
        %v2382 = vpop.permute.xlu0 %2381
        %s2384 = sor.u32 256, 88
        %2385 = vbcast.lane.b32.xlu0 %v2339, %s2384
        %v2386 = vpop.permute.xlu0 %2385
        %s2388 = sor.u32 256, 96
        %2389 = vbcast.lane.b32.xlu0 %v2339, %s2388
        %v2390 = vpop.permute.xlu0 %2389
        %s2392 = sor.u32 256, 104
        %2393 = vbcast.lane.b32.xlu0 %v2339, %s2392
        %v2394 = vpop.permute.xlu0 %2393
        %s2396 = sor.u32 256, 112
        %2397 = vbcast.lane.b32.xlu0 %v2339, %s2396
        %v2398 = vpop.permute.xlu0 %2397
        %s2400 = sor.u32 256, 120
        %2401 = vbcast.lane.b32.xlu0 %v2339, %s2400
        %v2402 = vpop.permute.xlu0 %2401
        %v2403 = vlaneseq
        %v2404 = vshrl.u32 %v2403, 7
        %v2405 = vsub.s32 3, %v2404
        %v2406 = vrot.slane %v607, %v2405
        %2408 = vbcast.lane.b32.xlu0 %v2406, 256
        %v2409 = vpop.permute.xlu0 %2408
        %s2411 = sor.u32 256, 8
        %2412 = vbcast.lane.b32.xlu0 %v2406, %s2411
        %v2413 = vpop.permute.xlu0 %2412
        %s2415 = sor.u32 256, 16
        %2416 = vbcast.lane.b32.xlu0 %v2406, %s2415
        %v2417 = vpop.permute.xlu0 %2416
        %s2419 = sor.u32 256, 24
        %2420 = vbcast.lane.b32.xlu0 %v2406, %s2419
        %v2421 = vpop.permute.xlu0 %2420
        %s2423 = sor.u32 256, 32
        %2424 = vbcast.lane.b32.xlu0 %v2406, %s2423
        %v2425 = vpop.permute.xlu0 %2424
        %s2427 = sor.u32 256, 40
        %2428 = vbcast.lane.b32.xlu0 %v2406, %s2427
        %v2429 = vpop.permute.xlu0 %2428
        %s2431 = sor.u32 256, 48
        %2432 = vbcast.lane.b32.xlu0 %v2406, %s2431
        %v2433 = vpop.permute.xlu0 %2432
        %s2435 = sor.u32 256, 56
        %2436 = vbcast.lane.b32.xlu0 %v2406, %s2435
        %v2437 = vpop.permute.xlu0 %2436
        %s2439 = sor.u32 256, 64
        %2440 = vbcast.lane.b32.xlu0 %v2406, %s2439
        %v2441 = vpop.permute.xlu0 %2440
        %s2443 = sor.u32 256, 72
        %2444 = vbcast.lane.b32.xlu0 %v2406, %s2443
        %v2445 = vpop.permute.xlu0 %2444
        %s2447 = sor.u32 256, 80
        %2448 = vbcast.lane.b32.xlu0 %v2406, %s2447
        %v2449 = vpop.permute.xlu0 %2448
        %s2451 = sor.u32 256, 88
        %2452 = vbcast.lane.b32.xlu0 %v2406, %s2451
        %v2453 = vpop.permute.xlu0 %2452
        %s2455 = sor.u32 256, 96
        %2456 = vbcast.lane.b32.xlu0 %v2406, %s2455
        %v2457 = vpop.permute.xlu0 %2456
        %s2459 = sor.u32 256, 104
        %2460 = vbcast.lane.b32.xlu0 %v2406, %s2459
        %v2461 = vpop.permute.xlu0 %2460
        %s2463 = sor.u32 256, 112
        %2464 = vbcast.lane.b32.xlu0 %v2406, %s2463
        %v2465 = vpop.permute.xlu0 %2464
        %s2467 = sor.u32 256, 120
        %2468 = vbcast.lane.b32.xlu0 %v2406, %s2467
        %v2469 = vpop.permute.xlu0 %2468
        %v2470 = vlaneseq
        %v2471 = vshrl.u32 %v2470, 7
        %v2472 = vsub.s32 4, %v2471
        %v2473 = vrot.slane %v607, %v2472
        %2475 = vbcast.lane.b32.xlu0 %v2473, 256
        %v2476 = vpop.permute.xlu0 %2475
        %s2478 = sor.u32 256, 8
        %2479 = vbcast.lane.b32.xlu0 %v2473, %s2478
        %v2480 = vpop.permute.xlu0 %2479
        %s2482 = sor.u32 256, 16
        %2483 = vbcast.lane.b32.xlu0 %v2473, %s2482
        %v2484 = vpop.permute.xlu0 %2483
        %s2486 = sor.u32 256, 24
        %2487 = vbcast.lane.b32.xlu0 %v2473, %s2486
        %v2488 = vpop.permute.xlu0 %2487
        %s2490 = sor.u32 256, 32
        %2491 = vbcast.lane.b32.xlu0 %v2473, %s2490
        %v2492 = vpop.permute.xlu0 %2491
        %s2494 = sor.u32 256, 40
        %2495 = vbcast.lane.b32.xlu0 %v2473, %s2494
        %v2496 = vpop.permute.xlu0 %2495
        %s2498 = sor.u32 256, 48
        %2499 = vbcast.lane.b32.xlu0 %v2473, %s2498
        %v2500 = vpop.permute.xlu0 %2499
        %s2502 = sor.u32 256, 56
        %2503 = vbcast.lane.b32.xlu0 %v2473, %s2502
        %v2504 = vpop.permute.xlu0 %2503
        %s2506 = sor.u32 256, 64
        %2507 = vbcast.lane.b32.xlu0 %v2473, %s2506
        %v2508 = vpop.permute.xlu0 %2507
        %s2510 = sor.u32 256, 72
        %2511 = vbcast.lane.b32.xlu0 %v2473, %s2510
        %v2512 = vpop.permute.xlu0 %2511
        %s2514 = sor.u32 256, 80
        %2515 = vbcast.lane.b32.xlu0 %v2473, %s2514
        %v2516 = vpop.permute.xlu0 %2515
        %s2518 = sor.u32 256, 88
        %2519 = vbcast.lane.b32.xlu0 %v2473, %s2518
        %v2520 = vpop.permute.xlu0 %2519
        %s2522 = sor.u32 256, 96
        %2523 = vbcast.lane.b32.xlu0 %v2473, %s2522
        %v2524 = vpop.permute.xlu0 %2523
        %s2526 = sor.u32 256, 104
        %2527 = vbcast.lane.b32.xlu0 %v2473, %s2526
        %v2528 = vpop.permute.xlu0 %2527
        %s2530 = sor.u32 256, 112
        %2531 = vbcast.lane.b32.xlu0 %v2473, %s2530
        %v2532 = vpop.permute.xlu0 %2531
        %s2534 = sor.u32 256, 120
        %2535 = vbcast.lane.b32.xlu0 %v2473, %s2534
        %v2536 = vpop.permute.xlu0 %2535
        %v2537 = vlaneseq
        %v2538 = vshrl.u32 %v2537, 7
        %v2539 = vsub.s32 5, %v2538
        %v2540 = vrot.slane %v607, %v2539
        %2542 = vbcast.lane.b32.xlu0 %v2540, 256
        %v2543 = vpop.permute.xlu0 %2542
        %s2545 = sor.u32 256, 8
        %2546 = vbcast.lane.b32.xlu0 %v2540, %s2545
        %v2547 = vpop.permute.xlu0 %2546
        %s2549 = sor.u32 256, 16
        %2550 = vbcast.lane.b32.xlu0 %v2540, %s2549
        %v2551 = vpop.permute.xlu0 %2550
        %s2553 = sor.u32 256, 24
        %2554 = vbcast.lane.b32.xlu0 %v2540, %s2553
        %v2555 = vpop.permute.xlu0 %2554
        %s2557 = sor.u32 256, 32
        %2558 = vbcast.lane.b32.xlu0 %v2540, %s2557
        %v2559 = vpop.permute.xlu0 %2558
        %s2561 = sor.u32 256, 40
        %2562 = vbcast.lane.b32.xlu0 %v2540, %s2561
        %v2563 = vpop.permute.xlu0 %2562
        %s2565 = sor.u32 256, 48
        %2566 = vbcast.lane.b32.xlu0 %v2540, %s2565
        %v2567 = vpop.permute.xlu0 %2566
        %s2569 = sor.u32 256, 56
        %2570 = vbcast.lane.b32.xlu0 %v2540, %s2569
        %v2571 = vpop.permute.xlu0 %2570
        %s2573 = sor.u32 256, 64
        %2574 = vbcast.lane.b32.xlu0 %v2540, %s2573
        %v2575 = vpop.permute.xlu0 %2574
        %s2577 = sor.u32 256, 72
        %2578 = vbcast.lane.b32.xlu0 %v2540, %s2577
        %v2579 = vpop.permute.xlu0 %2578
        %s2581 = sor.u32 256, 80
        %2582 = vbcast.lane.b32.xlu0 %v2540, %s2581
        %v2583 = vpop.permute.xlu0 %2582
        %s2585 = sor.u32 256, 88
        %2586 = vbcast.lane.b32.xlu0 %v2540, %s2585
        %v2587 = vpop.permute.xlu0 %2586
        %s2589 = sor.u32 256, 96
        %2590 = vbcast.lane.b32.xlu0 %v2540, %s2589
        %v2591 = vpop.permute.xlu0 %2590
        %s2593 = sor.u32 256, 104
        %2594 = vbcast.lane.b32.xlu0 %v2540, %s2593
        %v2595 = vpop.permute.xlu0 %2594
        %s2597 = sor.u32 256, 112
        %2598 = vbcast.lane.b32.xlu0 %v2540, %s2597
        %v2599 = vpop.permute.xlu0 %2598
        %s2601 = sor.u32 256, 120
        %2602 = vbcast.lane.b32.xlu0 %v2540, %s2601
        %v2603 = vpop.permute.xlu0 %2602
        %v2604 = vlaneseq
        %v2605 = vshrl.u32 %v2604, 7
        %v2606 = vsub.s32 6, %v2605
        %v2607 = vrot.slane %v607, %v2606
        %2609 = vbcast.lane.b32.xlu0 %v2607, 256
        %v2610 = vpop.permute.xlu0 %2609
        %s2612 = sor.u32 256, 8
        %2613 = vbcast.lane.b32.xlu0 %v2607, %s2612
        %v2614 = vpop.permute.xlu0 %2613
        %s2616 = sor.u32 256, 16
        %2617 = vbcast.lane.b32.xlu0 %v2607, %s2616
        %v2618 = vpop.permute.xlu0 %2617
        %s2620 = sor.u32 256, 24
        %2621 = vbcast.lane.b32.xlu0 %v2607, %s2620
        %v2622 = vpop.permute.xlu0 %2621
        %s2624 = sor.u32 256, 32
        %2625 = vbcast.lane.b32.xlu0 %v2607, %s2624
        %v2626 = vpop.permute.xlu0 %2625
        %s2628 = sor.u32 256, 40
        %2629 = vbcast.lane.b32.xlu0 %v2607, %s2628
        %v2630 = vpop.permute.xlu0 %2629
        %s2632 = sor.u32 256, 48
        %2633 = vbcast.lane.b32.xlu0 %v2607, %s2632
        %v2634 = vpop.permute.xlu0 %2633
        %s2636 = sor.u32 256, 56
        %2637 = vbcast.lane.b32.xlu0 %v2607, %s2636
        %v2638 = vpop.permute.xlu0 %2637
        %s2640 = sor.u32 256, 64
        %2641 = vbcast.lane.b32.xlu0 %v2607, %s2640
        %v2642 = vpop.permute.xlu0 %2641
        %s2644 = sor.u32 256, 72
        %2645 = vbcast.lane.b32.xlu0 %v2607, %s2644
        %v2646 = vpop.permute.xlu0 %2645
        %s2648 = sor.u32 256, 80
        %2649 = vbcast.lane.b32.xlu0 %v2607, %s2648
        %v2650 = vpop.permute.xlu0 %2649
        %s2652 = sor.u32 256, 88
        %2653 = vbcast.lane.b32.xlu0 %v2607, %s2652
        %v2654 = vpop.permute.xlu0 %2653
        %s2656 = sor.u32 256, 96
        %2657 = vbcast.lane.b32.xlu0 %v2607, %s2656
        %v2658 = vpop.permute.xlu0 %2657
        %s2660 = sor.u32 256, 104
        %2661 = vbcast.lane.b32.xlu0 %v2607, %s2660
        %v2662 = vpop.permute.xlu0 %2661
        %s2664 = sor.u32 256, 112
        %2665 = vbcast.lane.b32.xlu0 %v2607, %s2664
        %v2666 = vpop.permute.xlu0 %2665
        %s2668 = sor.u32 256, 120
        %2669 = vbcast.lane.b32.xlu0 %v2607, %s2668
        %v2670 = vpop.permute.xlu0 %2669
        %v2671 = vlaneseq
        %v2672 = vshrl.u32 %v2671, 7
        %v2673 = vsub.s32 7, %v2672
        %v2674 = vrot.slane %v607, %v2673
        %2676 = vbcast.lane.b32.xlu0 %v2674, 256
        %v2677 = vpop.permute.xlu0 %2676
        %s2679 = sor.u32 256, 8
        %2680 = vbcast.lane.b32.xlu0 %v2674, %s2679
        %v2681 = vpop.permute.xlu0 %2680
        %s2683 = sor.u32 256, 16
        %2684 = vbcast.lane.b32.xlu0 %v2674, %s2683
        %v2685 = vpop.permute.xlu0 %2684
        %s2687 = sor.u32 256, 24
        %2688 = vbcast.lane.b32.xlu0 %v2674, %s2687
        %v2689 = vpop.permute.xlu0 %2688
        %s2691 = sor.u32 256, 32
        %2692 = vbcast.lane.b32.xlu0 %v2674, %s2691
        %v2693 = vpop.permute.xlu0 %2692
        %s2695 = sor.u32 256, 40
        %2696 = vbcast.lane.b32.xlu0 %v2674, %s2695
        %v2697 = vpop.permute.xlu0 %2696
        %s2699 = sor.u32 256, 48
        %2700 = vbcast.lane.b32.xlu0 %v2674, %s2699
        %v2701 = vpop.permute.xlu0 %2700
        %s2703 = sor.u32 256, 56
        %2704 = vbcast.lane.b32.xlu0 %v2674, %s2703
        %v2705 = vpop.permute.xlu0 %2704
        %s2707 = sor.u32 256, 64
        %2708 = vbcast.lane.b32.xlu0 %v2674, %s2707
        %v2709 = vpop.permute.xlu0 %2708
        %s2711 = sor.u32 256, 72
        %2712 = vbcast.lane.b32.xlu0 %v2674, %s2711
        %v2713 = vpop.permute.xlu0 %2712
        %s2715 = sor.u32 256, 80
        %2716 = vbcast.lane.b32.xlu0 %v2674, %s2715
        %v2717 = vpop.permute.xlu0 %2716
        %s2719 = sor.u32 256, 88
        %2720 = vbcast.lane.b32.xlu0 %v2674, %s2719
        %v2721 = vpop.permute.xlu0 %2720
        %s2723 = sor.u32 256, 96
        %2724 = vbcast.lane.b32.xlu0 %v2674, %s2723
        %v2725 = vpop.permute.xlu0 %2724
        %s2727 = sor.u32 256, 104
        %2728 = vbcast.lane.b32.xlu0 %v2674, %s2727
        %v2729 = vpop.permute.xlu0 %2728
        %s2731 = sor.u32 256, 112
        %2732 = vbcast.lane.b32.xlu0 %v2674, %s2731
        %v2733 = vpop.permute.xlu0 %2732
        %s2735 = sor.u32 256, 120
        %2736 = vbcast.lane.b32.xlu0 %v2674, %s2735
        %v2737 = vpop.permute.xlu0 %2736
        %v2738 = vlaneseq
        %v2739 = vshrl.u32 %v2738, 7
        %v2740 = vsub.s32 0, %v2739
        %v2741 = vrot.slane %v609, %v2740
        %2743 = vbcast.lane.b32.xlu0 %v2741, 256
        %v2744 = vpop.permute.xlu0 %2743
        %s2746 = sor.u32 256, 8
        %2747 = vbcast.lane.b32.xlu0 %v2741, %s2746
        %v2748 = vpop.permute.xlu0 %2747
        %s2750 = sor.u32 256, 16
        %2751 = vbcast.lane.b32.xlu0 %v2741, %s2750
        %v2752 = vpop.permute.xlu0 %2751
        %s2754 = sor.u32 256, 24
        %2755 = vbcast.lane.b32.xlu0 %v2741, %s2754
        %v2756 = vpop.permute.xlu0 %2755
        %s2758 = sor.u32 256, 32
        %2759 = vbcast.lane.b32.xlu0 %v2741, %s2758
        %v2760 = vpop.permute.xlu0 %2759
        %s2762 = sor.u32 256, 40
        %2763 = vbcast.lane.b32.xlu0 %v2741, %s2762
        %v2764 = vpop.permute.xlu0 %2763
        %s2766 = sor.u32 256, 48
        %2767 = vbcast.lane.b32.xlu0 %v2741, %s2766
        %v2768 = vpop.permute.xlu0 %2767
        %s2770 = sor.u32 256, 56
        %2771 = vbcast.lane.b32.xlu0 %v2741, %s2770
        %v2772 = vpop.permute.xlu0 %2771
        %s2774 = sor.u32 256, 64
        %2775 = vbcast.lane.b32.xlu0 %v2741, %s2774
        %v2776 = vpop.permute.xlu0 %2775
        %s2778 = sor.u32 256, 72
        %2779 = vbcast.lane.b32.xlu0 %v2741, %s2778
        %v2780 = vpop.permute.xlu0 %2779
        %s2782 = sor.u32 256, 80
        %2783 = vbcast.lane.b32.xlu0 %v2741, %s2782
        %v2784 = vpop.permute.xlu0 %2783
        %s2786 = sor.u32 256, 88
        %2787 = vbcast.lane.b32.xlu0 %v2741, %s2786
        %v2788 = vpop.permute.xlu0 %2787
        %s2790 = sor.u32 256, 96
        %2791 = vbcast.lane.b32.xlu0 %v2741, %s2790
        %v2792 = vpop.permute.xlu0 %2791
        %s2794 = sor.u32 256, 104
        %2795 = vbcast.lane.b32.xlu0 %v2741, %s2794
        %v2796 = vpop.permute.xlu0 %2795
        %s2798 = sor.u32 256, 112
        %2799 = vbcast.lane.b32.xlu0 %v2741, %s2798
        %v2800 = vpop.permute.xlu0 %2799
        %s2802 = sor.u32 256, 120
        %2803 = vbcast.lane.b32.xlu0 %v2741, %s2802
        %v2804 = vpop.permute.xlu0 %2803
        %v2805 = vlaneseq
        %v2806 = vshrl.u32 %v2805, 7
        %v2807 = vsub.s32 1, %v2806
        %v2808 = vrot.slane %v609, %v2807
        %2810 = vbcast.lane.b32.xlu0 %v2808, 256
        %v2811 = vpop.permute.xlu0 %2810
        %s2813 = sor.u32 256, 8
        %2814 = vbcast.lane.b32.xlu0 %v2808, %s2813
        %v2815 = vpop.permute.xlu0 %2814
        %s2817 = sor.u32 256, 16
        %2818 = vbcast.lane.b32.xlu0 %v2808, %s2817
        %v2819 = vpop.permute.xlu0 %2818
        %s2821 = sor.u32 256, 24
        %2822 = vbcast.lane.b32.xlu0 %v2808, %s2821
        %v2823 = vpop.permute.xlu0 %2822
        %s2825 = sor.u32 256, 32
        %2826 = vbcast.lane.b32.xlu0 %v2808, %s2825
        %v2827 = vpop.permute.xlu0 %2826
        %s2829 = sor.u32 256, 40
        %2830 = vbcast.lane.b32.xlu0 %v2808, %s2829
        %v2831 = vpop.permute.xlu0 %2830
        %s2833 = sor.u32 256, 48
        %2834 = vbcast.lane.b32.xlu0 %v2808, %s2833
        %v2835 = vpop.permute.xlu0 %2834
        %s2837 = sor.u32 256, 56
        %2838 = vbcast.lane.b32.xlu0 %v2808, %s2837
        %v2839 = vpop.permute.xlu0 %2838
        %s2841 = sor.u32 256, 64
        %2842 = vbcast.lane.b32.xlu0 %v2808, %s2841
        %v2843 = vpop.permute.xlu0 %2842
        %s2845 = sor.u32 256, 72
        %2846 = vbcast.lane.b32.xlu0 %v2808, %s2845
        %v2847 = vpop.permute.xlu0 %2846
        %s2849 = sor.u32 256, 80
        %2850 = vbcast.lane.b32.xlu0 %v2808, %s2849
        %v2851 = vpop.permute.xlu0 %2850
        %s2853 = sor.u32 256, 88
        %2854 = vbcast.lane.b32.xlu0 %v2808, %s2853
        %v2855 = vpop.permute.xlu0 %2854
        %s2857 = sor.u32 256, 96
        %2858 = vbcast.lane.b32.xlu0 %v2808, %s2857
        %v2859 = vpop.permute.xlu0 %2858
        %s2861 = sor.u32 256, 104
        %2862 = vbcast.lane.b32.xlu0 %v2808, %s2861
        %v2863 = vpop.permute.xlu0 %2862
        %s2865 = sor.u32 256, 112
        %2866 = vbcast.lane.b32.xlu0 %v2808, %s2865
        %v2867 = vpop.permute.xlu0 %2866
        %s2869 = sor.u32 256, 120
        %2870 = vbcast.lane.b32.xlu0 %v2808, %s2869
        %v2871 = vpop.permute.xlu0 %2870
        %v2872 = vlaneseq
        %v2873 = vshrl.u32 %v2872, 7
        %v2874 = vsub.s32 2, %v2873
        %v2875 = vrot.slane %v609, %v2874
        %2877 = vbcast.lane.b32.xlu0 %v2875, 256
        %v2878 = vpop.permute.xlu0 %2877
        %s2880 = sor.u32 256, 8
        %2881 = vbcast.lane.b32.xlu0 %v2875, %s2880
        %v2882 = vpop.permute.xlu0 %2881
        %s2884 = sor.u32 256, 16
        %2885 = vbcast.lane.b32.xlu0 %v2875, %s2884
        %v2886 = vpop.permute.xlu0 %2885
        %s2888 = sor.u32 256, 24
        %2889 = vbcast.lane.b32.xlu0 %v2875, %s2888
        %v2890 = vpop.permute.xlu0 %2889
        %s2892 = sor.u32 256, 32
        %2893 = vbcast.lane.b32.xlu0 %v2875, %s2892
        %v2894 = vpop.permute.xlu0 %2893
        %s2896 = sor.u32 256, 40
        %2897 = vbcast.lane.b32.xlu0 %v2875, %s2896
        %v2898 = vpop.permute.xlu0 %2897
        %s2900 = sor.u32 256, 48
        %2901 = vbcast.lane.b32.xlu0 %v2875, %s2900
        %v2902 = vpop.permute.xlu0 %2901
        %s2904 = sor.u32 256, 56
        %2905 = vbcast.lane.b32.xlu0 %v2875, %s2904
        %v2906 = vpop.permute.xlu0 %2905
        %s2908 = sor.u32 256, 64
        %2909 = vbcast.lane.b32.xlu0 %v2875, %s2908
        %v2910 = vpop.permute.xlu0 %2909
        %s2912 = sor.u32 256, 72
        %2913 = vbcast.lane.b32.xlu0 %v2875, %s2912
        %v2914 = vpop.permute.xlu0 %2913
        %s2916 = sor.u32 256, 80
        %2917 = vbcast.lane.b32.xlu0 %v2875, %s2916
        %v2918 = vpop.permute.xlu0 %2917
        %s2920 = sor.u32 256, 88
        %2921 = vbcast.lane.b32.xlu0 %v2875, %s2920
        %v2922 = vpop.permute.xlu0 %2921
        %s2924 = sor.u32 256, 96
        %2925 = vbcast.lane.b32.xlu0 %v2875, %s2924
        %v2926 = vpop.permute.xlu0 %2925
        %s2928 = sor.u32 256, 104
        %2929 = vbcast.lane.b32.xlu0 %v2875, %s2928
        %v2930 = vpop.permute.xlu0 %2929
        %s2932 = sor.u32 256, 112
        %2933 = vbcast.lane.b32.xlu0 %v2875, %s2932
        %v2934 = vpop.permute.xlu0 %2933
        %s2936 = sor.u32 256, 120
        %2937 = vbcast.lane.b32.xlu0 %v2875, %s2936
        %v2938 = vpop.permute.xlu0 %2937
        %v2939 = vlaneseq
        %v2940 = vshrl.u32 %v2939, 7
        %v2941 = vsub.s32 3, %v2940
        %v2942 = vrot.slane %v609, %v2941
        %2944 = vbcast.lane.b32.xlu0 %v2942, 256
        %v2945 = vpop.permute.xlu0 %2944
        %s2947 = sor.u32 256, 8
        %2948 = vbcast.lane.b32.xlu0 %v2942, %s2947
        %v2949 = vpop.permute.xlu0 %2948
        %s2951 = sor.u32 256, 16
        %2952 = vbcast.lane.b32.xlu0 %v2942, %s2951
        %v2953 = vpop.permute.xlu0 %2952
        %s2955 = sor.u32 256, 24
        %2956 = vbcast.lane.b32.xlu0 %v2942, %s2955
        %v2957 = vpop.permute.xlu0 %2956
        %s2959 = sor.u32 256, 32
        %2960 = vbcast.lane.b32.xlu0 %v2942, %s2959
        %v2961 = vpop.permute.xlu0 %2960
        %s2963 = sor.u32 256, 40
        %2964 = vbcast.lane.b32.xlu0 %v2942, %s2963
        %v2965 = vpop.permute.xlu0 %2964
        %s2967 = sor.u32 256, 48
        %2968 = vbcast.lane.b32.xlu0 %v2942, %s2967
        %v2969 = vpop.permute.xlu0 %2968
        %s2971 = sor.u32 256, 56
        %2972 = vbcast.lane.b32.xlu0 %v2942, %s2971
        %v2973 = vpop.permute.xlu0 %2972
        %s2975 = sor.u32 256, 64
        %2976 = vbcast.lane.b32.xlu0 %v2942, %s2975
        %v2977 = vpop.permute.xlu0 %2976
        %s2979 = sor.u32 256, 72
        %2980 = vbcast.lane.b32.xlu0 %v2942, %s2979
        %v2981 = vpop.permute.xlu0 %2980
        %s2983 = sor.u32 256, 80
        %2984 = vbcast.lane.b32.xlu0 %v2942, %s2983
        %v2985 = vpop.permute.xlu0 %2984
        %s2987 = sor.u32 256, 88
        %2988 = vbcast.lane.b32.xlu0 %v2942, %s2987
        %v2989 = vpop.permute.xlu0 %2988
        %s2991 = sor.u32 256, 96
        %2992 = vbcast.lane.b32.xlu0 %v2942, %s2991
        %v2993 = vpop.permute.xlu0 %2992
        %s2995 = sor.u32 256, 104
        %2996 = vbcast.lane.b32.xlu0 %v2942, %s2995
        %v2997 = vpop.permute.xlu0 %2996
        %s2999 = sor.u32 256, 112
        %3000 = vbcast.lane.b32.xlu0 %v2942, %s2999
        %v3001 = vpop.permute.xlu0 %3000
        %s3003 = sor.u32 256, 120
        %3004 = vbcast.lane.b32.xlu0 %v2942, %s3003
        %v3005 = vpop.permute.xlu0 %3004
        %v3006 = vlaneseq
        %v3007 = vshrl.u32 %v3006, 7
        %v3008 = vsub.s32 4, %v3007
        %v3009 = vrot.slane %v609, %v3008
        %3011 = vbcast.lane.b32.xlu0 %v3009, 256
        %v3012 = vpop.permute.xlu0 %3011
        %s3014 = sor.u32 256, 8
        %3015 = vbcast.lane.b32.xlu0 %v3009, %s3014
        %v3016 = vpop.permute.xlu0 %3015
        %s3018 = sor.u32 256, 16
        %3019 = vbcast.lane.b32.xlu0 %v3009, %s3018
        %v3020 = vpop.permute.xlu0 %3019
        %s3022 = sor.u32 256, 24
        %3023 = vbcast.lane.b32.xlu0 %v3009, %s3022
        %v3024 = vpop.permute.xlu0 %3023
        %s3026 = sor.u32 256, 32
        %3027 = vbcast.lane.b32.xlu0 %v3009, %s3026
        %v3028 = vpop.permute.xlu0 %3027
        %s3030 = sor.u32 256, 40
        %3031 = vbcast.lane.b32.xlu0 %v3009, %s3030
        %v3032 = vpop.permute.xlu0 %3031
        %s3034 = sor.u32 256, 48
        %3035 = vbcast.lane.b32.xlu0 %v3009, %s3034
        %v3036 = vpop.permute.xlu0 %3035
        %s3038 = sor.u32 256, 56
        %3039 = vbcast.lane.b32.xlu0 %v3009, %s3038
        %v3040 = vpop.permute.xlu0 %3039
        %s3042 = sor.u32 256, 64
        %3043 = vbcast.lane.b32.xlu0 %v3009, %s3042
        %v3044 = vpop.permute.xlu0 %3043
        %s3046 = sor.u32 256, 72
        %3047 = vbcast.lane.b32.xlu0 %v3009, %s3046
        %v3048 = vpop.permute.xlu0 %3047
        %s3050 = sor.u32 256, 80
        %3051 = vbcast.lane.b32.xlu0 %v3009, %s3050
        %v3052 = vpop.permute.xlu0 %3051
        %s3054 = sor.u32 256, 88
        %3055 = vbcast.lane.b32.xlu0 %v3009, %s3054
        %v3056 = vpop.permute.xlu0 %3055
        %s3058 = sor.u32 256, 96
        %3059 = vbcast.lane.b32.xlu0 %v3009, %s3058
        %v3060 = vpop.permute.xlu0 %3059
        %s3062 = sor.u32 256, 104
        %3063 = vbcast.lane.b32.xlu0 %v3009, %s3062
        %v3064 = vpop.permute.xlu0 %3063
        %s3066 = sor.u32 256, 112
        %3067 = vbcast.lane.b32.xlu0 %v3009, %s3066
        %v3068 = vpop.permute.xlu0 %3067
        %s3070 = sor.u32 256, 120
        %3071 = vbcast.lane.b32.xlu0 %v3009, %s3070
        %v3072 = vpop.permute.xlu0 %3071
        %v3073 = vlaneseq
        %v3074 = vshrl.u32 %v3073, 7
        %v3075 = vsub.s32 5, %v3074
        %v3076 = vrot.slane %v609, %v3075
        %3078 = vbcast.lane.b32.xlu0 %v3076, 256
        %v3079 = vpop.permute.xlu0 %3078
        %s3081 = sor.u32 256, 8
        %3082 = vbcast.lane.b32.xlu0 %v3076, %s3081
        %v3083 = vpop.permute.xlu0 %3082
        %s3085 = sor.u32 256, 16
        %3086 = vbcast.lane.b32.xlu0 %v3076, %s3085
        %v3087 = vpop.permute.xlu0 %3086
        %s3089 = sor.u32 256, 24
        %3090 = vbcast.lane.b32.xlu0 %v3076, %s3089
        %v3091 = vpop.permute.xlu0 %3090
        %s3093 = sor.u32 256, 32
        %3094 = vbcast.lane.b32.xlu0 %v3076, %s3093
        %v3095 = vpop.permute.xlu0 %3094
        %s3097 = sor.u32 256, 40
        %3098 = vbcast.lane.b32.xlu0 %v3076, %s3097
        %v3099 = vpop.permute.xlu0 %3098
        %s3101 = sor.u32 256, 48
        %3102 = vbcast.lane.b32.xlu0 %v3076, %s3101
        %v3103 = vpop.permute.xlu0 %3102
        %s3105 = sor.u32 256, 56
        %3106 = vbcast.lane.b32.xlu0 %v3076, %s3105
        %v3107 = vpop.permute.xlu0 %3106
        %s3109 = sor.u32 256, 64
        %3110 = vbcast.lane.b32.xlu0 %v3076, %s3109
        %v3111 = vpop.permute.xlu0 %3110
        %s3113 = sor.u32 256, 72
        %3114 = vbcast.lane.b32.xlu0 %v3076, %s3113
        %v3115 = vpop.permute.xlu0 %3114
        %s3117 = sor.u32 256, 80
        %3118 = vbcast.lane.b32.xlu0 %v3076, %s3117
        %v3119 = vpop.permute.xlu0 %3118
        %s3121 = sor.u32 256, 88
        %3122 = vbcast.lane.b32.xlu0 %v3076, %s3121
        %v3123 = vpop.permute.xlu0 %3122
        %s3125 = sor.u32 256, 96
        %3126 = vbcast.lane.b32.xlu0 %v3076, %s3125
        %v3127 = vpop.permute.xlu0 %3126
        %s3129 = sor.u32 256, 104
        %3130 = vbcast.lane.b32.xlu0 %v3076, %s3129
        %v3131 = vpop.permute.xlu0 %3130
        %s3133 = sor.u32 256, 112
        %3134 = vbcast.lane.b32.xlu0 %v3076, %s3133
        %v3135 = vpop.permute.xlu0 %3134
        %s3137 = sor.u32 256, 120
        %3138 = vbcast.lane.b32.xlu0 %v3076, %s3137
        %v3139 = vpop.permute.xlu0 %3138
        %v3140 = vlaneseq
        %v3141 = vshrl.u32 %v3140, 7
        %v3142 = vsub.s32 6, %v3141
        %v3143 = vrot.slane %v609, %v3142
        %3145 = vbcast.lane.b32.xlu0 %v3143, 256
        %v3146 = vpop.permute.xlu0 %3145
        %s3148 = sor.u32 256, 8
        %3149 = vbcast.lane.b32.xlu0 %v3143, %s3148
        %v3150 = vpop.permute.xlu0 %3149
        %s3152 = sor.u32 256, 16
        %3153 = vbcast.lane.b32.xlu0 %v3143, %s3152
        %v3154 = vpop.permute.xlu0 %3153
        %s3156 = sor.u32 256, 24
        %3157 = vbcast.lane.b32.xlu0 %v3143, %s3156
        %v3158 = vpop.permute.xlu0 %3157
        %s3160 = sor.u32 256, 32
        %3161 = vbcast.lane.b32.xlu0 %v3143, %s3160
        %v3162 = vpop.permute.xlu0 %3161
        %s3164 = sor.u32 256, 40
        %3165 = vbcast.lane.b32.xlu0 %v3143, %s3164
        %v3166 = vpop.permute.xlu0 %3165
        %s3168 = sor.u32 256, 48
        %3169 = vbcast.lane.b32.xlu0 %v3143, %s3168
        %v3170 = vpop.permute.xlu0 %3169
        %s3172 = sor.u32 256, 56
        %3173 = vbcast.lane.b32.xlu0 %v3143, %s3172
        %v3174 = vpop.permute.xlu0 %3173
        %s3176 = sor.u32 256, 64
        %3177 = vbcast.lane.b32.xlu0 %v3143, %s3176
        %v3178 = vpop.permute.xlu0 %3177
        %s3180 = sor.u32 256, 72
        %3181 = vbcast.lane.b32.xlu0 %v3143, %s3180
        %v3182 = vpop.permute.xlu0 %3181
        %s3184 = sor.u32 256, 80
        %3185 = vbcast.lane.b32.xlu0 %v3143, %s3184
        %v3186 = vpop.permute.xlu0 %3185
        %s3188 = sor.u32 256, 88
        %3189 = vbcast.lane.b32.xlu0 %v3143, %s3188
        %v3190 = vpop.permute.xlu0 %3189
        %s3192 = sor.u32 256, 96
        %3193 = vbcast.lane.b32.xlu0 %v3143, %s3192
        %v3194 = vpop.permute.xlu0 %3193
        %s3196 = sor.u32 256, 104
        %3197 = vbcast.lane.b32.xlu0 %v3143, %s3196
        %v3198 = vpop.permute.xlu0 %3197
        %s3200 = sor.u32 256, 112
        %3201 = vbcast.lane.b32.xlu0 %v3143, %s3200
        %v3202 = vpop.permute.xlu0 %3201
        %s3204 = sor.u32 256, 120
        %3205 = vbcast.lane.b32.xlu0 %v3143, %s3204
        %v3206 = vpop.permute.xlu0 %3205
        %v3207 = vlaneseq
        %v3208 = vshrl.u32 %v3207, 7
        %v3209 = vsub.s32 7, %v3208
        %v3210 = vrot.slane %v609, %v3209
        %3212 = vbcast.lane.b32.xlu0 %v3210, 256
        %v3213 = vpop.permute.xlu0 %3212
        %s3215 = sor.u32 256, 8
        %3216 = vbcast.lane.b32.xlu0 %v3210, %s3215
        %v3217 = vpop.permute.xlu0 %3216
        %s3219 = sor.u32 256, 16
        %3220 = vbcast.lane.b32.xlu0 %v3210, %s3219
        %v3221 = vpop.permute.xlu0 %3220
        %s3223 = sor.u32 256, 24
        %3224 = vbcast.lane.b32.xlu0 %v3210, %s3223
        %v3225 = vpop.permute.xlu0 %3224
        %s3227 = sor.u32 256, 32
        %3228 = vbcast.lane.b32.xlu0 %v3210, %s3227
        %v3229 = vpop.permute.xlu0 %3228
        %s3231 = sor.u32 256, 40
        %3232 = vbcast.lane.b32.xlu0 %v3210, %s3231
        %v3233 = vpop.permute.xlu0 %3232
        %s3235 = sor.u32 256, 48
        %3236 = vbcast.lane.b32.xlu0 %v3210, %s3235
        %v3237 = vpop.permute.xlu0 %3236
        %s3239 = sor.u32 256, 56
        %3240 = vbcast.lane.b32.xlu0 %v3210, %s3239
        %v3241 = vpop.permute.xlu0 %3240
        %s3243 = sor.u32 256, 64
        %3244 = vbcast.lane.b32.xlu0 %v3210, %s3243
        %v3245 = vpop.permute.xlu0 %3244
        %s3247 = sor.u32 256, 72
        %3248 = vbcast.lane.b32.xlu0 %v3210, %s3247
        %v3249 = vpop.permute.xlu0 %3248
        %s3251 = sor.u32 256, 80
        %3252 = vbcast.lane.b32.xlu0 %v3210, %s3251
        %v3253 = vpop.permute.xlu0 %3252
        %s3255 = sor.u32 256, 88
        %3256 = vbcast.lane.b32.xlu0 %v3210, %s3255
        %v3257 = vpop.permute.xlu0 %3256
        %s3259 = sor.u32 256, 96
        %3260 = vbcast.lane.b32.xlu0 %v3210, %s3259
        %v3261 = vpop.permute.xlu0 %3260
        %s3263 = sor.u32 256, 104
        %3264 = vbcast.lane.b32.xlu0 %v3210, %s3263
        %v3265 = vpop.permute.xlu0 %3264
        %s3267 = sor.u32 256, 112
        %3268 = vbcast.lane.b32.xlu0 %v3210, %s3267
        %v3269 = vpop.permute.xlu0 %3268
        %s3271 = sor.u32 256, 120
        %3272 = vbcast.lane.b32.xlu0 %v3210, %s3271
        %v3273 = vpop.permute.xlu0 %3272
        %v3274 = vmul.f32 %v1946, %v2208
        %v3275 = vmul.f32 %v1947, %v2212
        %v3276 = vmul.f32 %v1948, %v2216
        %v3277 = vmul.f32 %v1949, %v2220
        %v3278 = vmul.f32 %v1950, %v2224
        %v3279 = vmul.f32 %v1951, %v2228
        %v3280 = vmul.f32 %v1952, %v2232
        %v3281 = vmul.f32 %v1953, %v2236
        %v3282 = vmul.f32 %v1954, %v2240
        %v3283 = vmul.f32 %v1955, %v2244
        %v3284 = vmul.f32 %v1956, %v2248
        %v3285 = vmul.f32 %v1957, %v2252
        %v3286 = vmul.f32 %v1958, %v2256
        %v3287 = vmul.f32 %v1959, %v2260
        %v3288 = vmul.f32 %v1960, %v2264
        %v3289 = vmul.f32 %v1961, %v2268
        %v3290 = vmul.f32 %v1962, %v2275
        %v3291 = vmul.f32 %v1963, %v2279
        %v3292 = vmul.f32 %v1964, %v2283
        %v3293 = vmul.f32 %v1965, %v2287
        %v3294 = vmul.f32 %v1966, %v2291
        %v3295 = vmul.f32 %v1967, %v2295
        %v3296 = vmul.f32 %v1968, %v2299
        %v3297 = vmul.f32 %v1969, %v2303
        %v3298 = vmul.f32 %v1970, %v2307
        %v3299 = vmul.f32 %v1971, %v2311
        %v3300 = vmul.f32 %v1972, %v2315
        %v3301 = vmul.f32 %v1973, %v2319
        %v3302 = vmul.f32 %v1974, %v2323
        %v3303 = vmul.f32 %v1975, %v2327
        %v3304 = vmul.f32 %v1976, %v2331
        %v3305 = vmul.f32 %v1977, %v2335
        %v3306 = vmul.f32 %v1978, %v2342
        %v3307 = vmul.f32 %v1979, %v2346
        %v3308 = vmul.f32 %v1980, %v2350
        %v3309 = vmul.f32 %v1981, %v2354
        %v3310 = vmul.f32 %v1982, %v2358
        %v3311 = vmul.f32 %v1983, %v2362
        %v3312 = vmul.f32 %v1984, %v2366
        %v3313 = vmul.f32 %v1985, %v2370
        %v3314 = vmul.f32 %v1986, %v2374
        %v3315 = vmul.f32 %v1987, %v2378
        %v3316 = vmul.f32 %v1988, %v2382
        %v3317 = vmul.f32 %v1989, %v2386
        %v3318 = vmul.f32 %v1990, %v2390
        %v3319 = vmul.f32 %v1991, %v2394
        %v3320 = vmul.f32 %v1992, %v2398
        %v3321 = vmul.f32 %v1993, %v2402
        %v3322 = vmul.f32 %v1994, %v2409
        %v3323 = vmul.f32 %v1995, %v2413
        %v3324 = vmul.f32 %v1996, %v2417
        %v3325 = vmul.f32 %v1997, %v2421
        %v3326 = vmul.f32 %v1998, %v2425
        %v3327 = vmul.f32 %v1999, %v2429
        %v3328 = vmul.f32 %v2000, %v2433
        %v3329 = vmul.f32 %v2001, %v2437
        %v3330 = vmul.f32 %v2002, %v2441
        %v3331 = vmul.f32 %v2003, %v2445
        %v3332 = vmul.f32 %v2004, %v2449
        %v3333 = vmul.f32 %v2005, %v2453
        %v3334 = vmul.f32 %v2006, %v2457
        %v3335 = vmul.f32 %v2007, %v2461
        %v3336 = vmul.f32 %v2008, %v2465
        %v3337 = vmul.f32 %v2009, %v2469
        %v3338 = vmul.f32 %v2010, %v2476
        %v3339 = vmul.f32 %v2011, %v2480
        %v3340 = vmul.f32 %v2012, %v2484
        %v3341 = vmul.f32 %v2013, %v2488
        %v3342 = vmul.f32 %v2014, %v2492
        %v3343 = vmul.f32 %v2015, %v2496
        %v3344 = vmul.f32 %v2016, %v2500
        %v3345 = vmul.f32 %v2017, %v2504
        %v3346 = vmul.f32 %v2018, %v2508
        %v3347 = vmul.f32 %v2019, %v2512
        %v3348 = vmul.f32 %v2020, %v2516
        %v3349 = vmul.f32 %v2021, %v2520
        %v3350 = vmul.f32 %v2022, %v2524
        %v3351 = vmul.f32 %v2023, %v2528
        %v3352 = vmul.f32 %v2024, %v2532
        %v3353 = vmul.f32 %v2025, %v2536
        %v3354 = vmul.f32 %v2026, %v2543
        %v3355 = vmul.f32 %v2027, %v2547
        %v3356 = vmul.f32 %v2028, %v2551
        %v3357 = vmul.f32 %v2029, %v2555
        %v3358 = vmul.f32 %v2030, %v2559
        %v3359 = vmul.f32 %v2031, %v2563
        %v3360 = vmul.f32 %v2032, %v2567
        %v3361 = vmul.f32 %v2033, %v2571
        %v3362 = vmul.f32 %v2034, %v2575
        %v3363 = vmul.f32 %v2035, %v2579
        %v3364 = vmul.f32 %v2036, %v2583
        %v3365 = vmul.f32 %v2037, %v2587
        %v3366 = vmul.f32 %v2038, %v2591
        %v3367 = vmul.f32 %v2039, %v2595
        %v3368 = vmul.f32 %v2040, %v2599
        %v3369 = vmul.f32 %v2041, %v2603
        %v3370 = vmul.f32 %v2042, %v2610
        %v3371 = vmul.f32 %v2043, %v2614
        %v3372 = vmul.f32 %v2044, %v2618
        %v3373 = vmul.f32 %v2045, %v2622
        %v3374 = vmul.f32 %v2046, %v2626
        %v3375 = vmul.f32 %v2047, %v2630
        %v3376 = vmul.f32 %v2048, %v2634
        %v3377 = vmul.f32 %v2049, %v2638
        %v3378 = vmul.f32 %v2050, %v2642
        %v3379 = vmul.f32 %v2051, %v2646
        %v3380 = vmul.f32 %v2052, %v2650
        %v3381 = vmul.f32 %v2053, %v2654
        %v3382 = vmul.f32 %v2054, %v2658
        %v3383 = vmul.f32 %v2055, %v2662
        %v3384 = vmul.f32 %v2056, %v2666
        %v3385 = vmul.f32 %v2057, %v2670
        %v3386 = vmul.f32 %v2058, %v2677
        %v3387 = vmul.f32 %v2059, %v2681
        %v3388 = vmul.f32 %v2060, %v2685
        %v3389 = vmul.f32 %v2061, %v2689
        %v3390 = vmul.f32 %v2062, %v2693
        %v3391 = vmul.f32 %v2063, %v2697
        %v3392 = vmul.f32 %v2064, %v2701
        %v3393 = vmul.f32 %v2065, %v2705
        %v3394 = vmul.f32 %v2066, %v2709
        %v3395 = vmul.f32 %v2067, %v2713
        %v3396 = vmul.f32 %v2068, %v2717
        %v3397 = vmul.f32 %v2069, %v2721
        %v3398 = vmul.f32 %v2070, %v2725
        %v3399 = vmul.f32 %v2071, %v2729
        %v3400 = vmul.f32 %v2072, %v2733
        %v3401 = vmul.f32 %v2073, %v2737
        %v3402 = vmul.f32 %v2074, %v2744
        %v3403 = vmul.f32 %v2075, %v2748
        %v3404 = vmul.f32 %v2076, %v2752
        %v3405 = vmul.f32 %v2077, %v2756
        %v3406 = vmul.f32 %v2078, %v2760
        %v3407 = vmul.f32 %v2079, %v2764
        %v3408 = vmul.f32 %v2080, %v2768
        %v3409 = vmul.f32 %v2081, %v2772
        %v3410 = vmul.f32 %v2082, %v2776
        %v3411 = vmul.f32 %v2083, %v2780
        %v3412 = vmul.f32 %v2084, %v2784
        %v3413 = vmul.f32 %v2085, %v2788
        %v3414 = vmul.f32 %v2086, %v2792
        %v3415 = vmul.f32 %v2087, %v2796
        %v3416 = vmul.f32 %v2088, %v2800
        %v3417 = vmul.f32 %v2089, %v2804
        %v3418 = vmul.f32 %v2090, %v2811
        %v3419 = vmul.f32 %v2091, %v2815
        %v3420 = vmul.f32 %v2092, %v2819
        %v3421 = vmul.f32 %v2093, %v2823
        %v3422 = vmul.f32 %v2094, %v2827
        %v3423 = vmul.f32 %v2095, %v2831
        %v3424 = vmul.f32 %v2096, %v2835
        %v3425 = vmul.f32 %v2097, %v2839
        %v3426 = vmul.f32 %v2098, %v2843
        %v3427 = vmul.f32 %v2099, %v2847
        %v3428 = vmul.f32 %v2100, %v2851
        %v3429 = vmul.f32 %v2101, %v2855
        %v3430 = vmul.f32 %v2102, %v2859
        %v3431 = vmul.f32 %v2103, %v2863
        %v3432 = vmul.f32 %v2104, %v2867
        %v3433 = vmul.f32 %v2105, %v2871
        %v3434 = vmul.f32 %v2106, %v2878
        %v3435 = vmul.f32 %v2107, %v2882
        %v3436 = vmul.f32 %v2108, %v2886
        %v3437 = vmul.f32 %v2109, %v2890
        %v3438 = vmul.f32 %v2110, %v2894
        %v3439 = vmul.f32 %v2111, %v2898
        %v3440 = vmul.f32 %v2112, %v2902
        %v3441 = vmul.f32 %v2113, %v2906
        %v3442 = vmul.f32 %v2114, %v2910
        %v3443 = vmul.f32 %v2115, %v2914
        %v3444 = vmul.f32 %v2116, %v2918
        %v3445 = vmul.f32 %v2117, %v2922
        %v3446 = vmul.f32 %v2118, %v2926
        %v3447 = vmul.f32 %v2119, %v2930
        %v3448 = vmul.f32 %v2120, %v2934
        %v3449 = vmul.f32 %v2121, %v2938
        %v3450 = vmul.f32 %v2122, %v2945
        %v3451 = vmul.f32 %v2123, %v2949
        %v3452 = vmul.f32 %v2124, %v2953
        %v3453 = vmul.f32 %v2125, %v2957
        %v3454 = vmul.f32 %v2126, %v2961
        %v3455 = vmul.f32 %v2127, %v2965
        %v3456 = vmul.f32 %v2128, %v2969
        %v3457 = vmul.f32 %v2129, %v2973
        %v3458 = vmul.f32 %v2130, %v2977
        %v3459 = vmul.f32 %v2131, %v2981
        %v3460 = vmul.f32 %v2132, %v2985
        %v3461 = vmul.f32 %v2133, %v2989
        %v3462 = vmul.f32 %v2134, %v2993
        %v3463 = vmul.f32 %v2135, %v2997
        %v3464 = vmul.f32 %v2136, %v3001
        %v3465 = vmul.f32 %v2137, %v3005
        %v3466 = vmul.f32 %v2138, %v3012
        %v3467 = vmul.f32 %v2139, %v3016
        %v3468 = vmul.f32 %v2140, %v3020
        %v3469 = vmul.f32 %v2141, %v3024
        %v3470 = vmul.f32 %v2142, %v3028
        %v3471 = vmul.f32 %v2143, %v3032
        %v3472 = vmul.f32 %v2144, %v3036
        %v3473 = vmul.f32 %v2145, %v3040
        %v3474 = vmul.f32 %v2146, %v3044
        %v3475 = vmul.f32 %v2147, %v3048
        %v3476 = vmul.f32 %v2148, %v3052
        %v3477 = vmul.f32 %v2149, %v3056
        %v3478 = vmul.f32 %v2150, %v3060
        %v3479 = vmul.f32 %v2151, %v3064
        %v3480 = vmul.f32 %v2152, %v3068
        %v3481 = vmul.f32 %v2153, %v3072
        %v3482 = vmul.f32 %v2154, %v3079
        %v3483 = vmul.f32 %v2155, %v3083
        %v3484 = vmul.f32 %v2156, %v3087
        %v3485 = vmul.f32 %v2157, %v3091
        %v3486 = vmul.f32 %v2158, %v3095
        %v3487 = vmul.f32 %v2159, %v3099
        %v3488 = vmul.f32 %v2160, %v3103
        %v3489 = vmul.f32 %v2161, %v3107
        %v3490 = vmul.f32 %v2162, %v3111
        %v3491 = vmul.f32 %v2163, %v3115
        %v3492 = vmul.f32 %v2164, %v3119
        %v3493 = vmul.f32 %v2165, %v3123
        %v3494 = vmul.f32 %v2166, %v3127
        %v3495 = vmul.f32 %v2167, %v3131
        %v3496 = vmul.f32 %v2168, %v3135
        %v3497 = vmul.f32 %v2169, %v3139
        %v3498 = vmul.f32 %v2170, %v3146
        %v3499 = vmul.f32 %v2171, %v3150
        %v3500 = vmul.f32 %v2172, %v3154
        %v3501 = vmul.f32 %v2173, %v3158
        %v3502 = vmul.f32 %v2174, %v3162
        %v3503 = vmul.f32 %v2175, %v3166
        %v3504 = vmul.f32 %v2176, %v3170
        %v3505 = vmul.f32 %v2177, %v3174
        %v3506 = vmul.f32 %v2178, %v3178
        %v3507 = vmul.f32 %v2179, %v3182
        %v3508 = vmul.f32 %v2180, %v3186
        %v3509 = vmul.f32 %v2181, %v3190
        %v3510 = vmul.f32 %v2182, %v3194
        %v3511 = vmul.f32 %v2183, %v3198
        %v3512 = vmul.f32 %v2184, %v3202
        %v3513 = vmul.f32 %v2185, %v3206
        %v3514 = vmul.f32 %v2186, %v3213
        %v3515 = vmul.f32 %v2187, %v3217
        %v3516 = vmul.f32 %v2188, %v3221
        %v3517 = vmul.f32 %v2189, %v3225
        %v3518 = vmul.f32 %v2190, %v3229
        %v3519 = vmul.f32 %v2191, %v3233
        %v3520 = vmul.f32 %v2192, %v3237
        %v3521 = vmul.f32 %v2193, %v3241
        %v3522 = vmul.f32 %v2194, %v3245
        %v3523 = vmul.f32 %v2195, %v3249
        %v3524 = vmul.f32 %v2196, %v3253
        %v3525 = vmul.f32 %v2197, %v3257
        %v3526 = vmul.f32 %v2198, %v3261
        %v3527 = vmul.f32 %v2199, %v3265
        %v3528 = vmul.f32 %v2200, %v3269
        %v3529 = vmul.f32 %v2201, %v3273
        %v3530 = vld [vmem:[#allocation2] sm:$0xff]
        %v3531 = vld [vmem:[#allocation2 + $0x8] sm:$0xff]
        %v3532 = vld [vmem:[#allocation2 + $0x10] sm:$0xff]
        %v3533 = vld [vmem:[#allocation2 + $0x18] sm:$0xff]
        %v3534 = vld [vmem:[#allocation2 + $0x20] sm:$0xff]
        %v3535 = vld [vmem:[#allocation2 + $0x28] sm:$0xff]
        %v3536 = vld [vmem:[#allocation2 + $0x30] sm:$0xff]
        %v3537 = vld [vmem:[#allocation2 + $0x38] sm:$0xff]
        %v3538 = vld [vmem:[#allocation2 + $0x40] sm:$0xff]
        %v3539 = vld [vmem:[#allocation2 + $0x48] sm:$0xff]
        %v3540 = vld [vmem:[#allocation2 + $0x50] sm:$0xff]
        %v3541 = vld [vmem:[#allocation2 + $0x58] sm:$0xff]
        %v3542 = vld [vmem:[#allocation2 + $0x60] sm:$0xff]
        %v3543 = vld [vmem:[#allocation2 + $0x68] sm:$0xff]
        %v3544 = vld [vmem:[#allocation2 + $0x70] sm:$0xff]
        %v3545 = vld [vmem:[#allocation2 + $0x78] sm:$0xff]
        %v3546 = vadd.f32 %v3274, %v3290
        %v3547 = vadd.f32 %v3546, %v3306
        %v3548 = vadd.f32 %v3547, %v3322
        %v3549 = vadd.f32 %v3548, %v3338
        %v3550 = vadd.f32 %v3549, %v3354
        %v3551 = vadd.f32 %v3550, %v3370
        %v3552 = vadd.f32 %v3551, %v3386
        %v3553 = vadd.f32 %v3552, %v3402
        %v3554 = vadd.f32 %v3553, %v3418
        %v3555 = vadd.f32 %v3554, %v3434
        %v3556 = vadd.f32 %v3555, %v3450
        %v3557 = vadd.f32 %v3556, %v3466
        %v3558 = vadd.f32 %v3557, %v3482
        %v3559 = vadd.f32 %v3558, %v3498
        %v3560 = vadd.f32 %v3559, %v3514
        %v3561 = vadd.f32 %v3275, %v3291
        %v3562 = vadd.f32 %v3561, %v3307
        %v3563 = vadd.f32 %v3562, %v3323
        %v3564 = vadd.f32 %v3563, %v3339
        %v3565 = vadd.f32 %v3564, %v3355
        %v3566 = vadd.f32 %v3565, %v3371
        %v3567 = vadd.f32 %v3566, %v3387
        %v3568 = vadd.f32 %v3567, %v3403
        %v3569 = vadd.f32 %v3568, %v3419
        %v3570 = vadd.f32 %v3569, %v3435
        %v3571 = vadd.f32 %v3570, %v3451
        %v3572 = vadd.f32 %v3571, %v3467
        %v3573 = vadd.f32 %v3572, %v3483
        %v3574 = vadd.f32 %v3573, %v3499
        %v3575 = vadd.f32 %v3574, %v3515
        %v3576 = vadd.f32 %v3276, %v3292
        %v3577 = vadd.f32 %v3576, %v3308
        %v3578 = vadd.f32 %v3577, %v3324
        %v3579 = vadd.f32 %v3578, %v3340
        %v3580 = vadd.f32 %v3579, %v3356
        %v3581 = vadd.f32 %v3580, %v3372
        %v3582 = vadd.f32 %v3581, %v3388
        %v3583 = vadd.f32 %v3582, %v3404
        %v3584 = vadd.f32 %v3583, %v3420
        %v3585 = vadd.f32 %v3584, %v3436
        %v3586 = vadd.f32 %v3585, %v3452
        %v3587 = vadd.f32 %v3586, %v3468
        %v3588 = vadd.f32 %v3587, %v3484
        %v3589 = vadd.f32 %v3588, %v3500
        %v3590 = vadd.f32 %v3589, %v3516
        %v3591 = vadd.f32 %v3277, %v3293
        %v3592 = vadd.f32 %v3591, %v3309
        %v3593 = vadd.f32 %v3592, %v3325
        %v3594 = vadd.f32 %v3593, %v3341
        %v3595 = vadd.f32 %v3594, %v3357
        %v3596 = vadd.f32 %v3595, %v3373
        %v3597 = vadd.f32 %v3596, %v3389
        %v3598 = vadd.f32 %v3597, %v3405
        %v3599 = vadd.f32 %v3598, %v3421
        %v3600 = vadd.f32 %v3599, %v3437
        %v3601 = vadd.f32 %v3600, %v3453
        %v3602 = vadd.f32 %v3601, %v3469
        %v3603 = vadd.f32 %v3602, %v3485
        %v3604 = vadd.f32 %v3603, %v3501
        %v3605 = vadd.f32 %v3604, %v3517
        %v3606 = vadd.f32 %v3278, %v3294
        %v3607 = vadd.f32 %v3606, %v3310
        %v3608 = vadd.f32 %v3607, %v3326
        %v3609 = vadd.f32 %v3608, %v3342
        %v3610 = vadd.f32 %v3609, %v3358
        %v3611 = vadd.f32 %v3610, %v3374
        %v3612 = vadd.f32 %v3611, %v3390
        %v3613 = vadd.f32 %v3612, %v3406
        %v3614 = vadd.f32 %v3613, %v3422
        %v3615 = vadd.f32 %v3614, %v3438
        %v3616 = vadd.f32 %v3615, %v3454
        %v3617 = vadd.f32 %v3616, %v3470
        %v3618 = vadd.f32 %v3617, %v3486
        %v3619 = vadd.f32 %v3618, %v3502
        %v3620 = vadd.f32 %v3619, %v3518
        %v3621 = vadd.f32 %v3279, %v3295
        %v3622 = vadd.f32 %v3621, %v3311
        %v3623 = vadd.f32 %v3622, %v3327
        %v3624 = vadd.f32 %v3623, %v3343
        %v3625 = vadd.f32 %v3624, %v3359
        %v3626 = vadd.f32 %v3625, %v3375
        %v3627 = vadd.f32 %v3626, %v3391
        %v3628 = vadd.f32 %v3627, %v3407
        %v3629 = vadd.f32 %v3628, %v3423
        %v3630 = vadd.f32 %v3629, %v3439
        %v3631 = vadd.f32 %v3630, %v3455
        %v3632 = vadd.f32 %v3631, %v3471
        %v3633 = vadd.f32 %v3632, %v3487
        %v3634 = vadd.f32 %v3633, %v3503
        %v3635 = vadd.f32 %v3634, %v3519
        %v3636 = vadd.f32 %v3280, %v3296
        %v3637 = vadd.f32 %v3636, %v3312
        %v3638 = vadd.f32 %v3637, %v3328
        %v3639 = vadd.f32 %v3638, %v3344
        %v3640 = vadd.f32 %v3639, %v3360
        %v3641 = vadd.f32 %v3640, %v3376
        %v3642 = vadd.f32 %v3641, %v3392
        %v3643 = vadd.f32 %v3642, %v3408
        %v3644 = vadd.f32 %v3643, %v3424
        %v3645 = vadd.f32 %v3644, %v3440
        %v3646 = vadd.f32 %v3645, %v3456
        %v3647 = vadd.f32 %v3646, %v3472
        %v3648 = vadd.f32 %v3647, %v3488
        %v3649 = vadd.f32 %v3648, %v3504
        %v3650 = vadd.f32 %v3649, %v3520
        %v3651 = vadd.f32 %v3281, %v3297
        %v3652 = vadd.f32 %v3651, %v3313
        %v3653 = vadd.f32 %v3652, %v3329
        %v3654 = vadd.f32 %v3653, %v3345
        %v3655 = vadd.f32 %v3654, %v3361
        %v3656 = vadd.f32 %v3655, %v3377
        %v3657 = vadd.f32 %v3656, %v3393
        %v3658 = vadd.f32 %v3657, %v3409
        %v3659 = vadd.f32 %v3658, %v3425
        %v3660 = vadd.f32 %v3659, %v3441
        %v3661 = vadd.f32 %v3660, %v3457
        %v3662 = vadd.f32 %v3661, %v3473
        %v3663 = vadd.f32 %v3662, %v3489
        %v3664 = vadd.f32 %v3663, %v3505
        %v3665 = vadd.f32 %v3664, %v3521
        %v3666 = vadd.f32 %v3282, %v3298
        %v3667 = vadd.f32 %v3666, %v3314
        %v3668 = vadd.f32 %v3667, %v3330
        %v3669 = vadd.f32 %v3668, %v3346
        %v3670 = vadd.f32 %v3669, %v3362
        %v3671 = vadd.f32 %v3670, %v3378
        %v3672 = vadd.f32 %v3671, %v3394
        %v3673 = vadd.f32 %v3672, %v3410
        %v3674 = vadd.f32 %v3673, %v3426
        %v3675 = vadd.f32 %v3674, %v3442
        %v3676 = vadd.f32 %v3675, %v3458
        %v3677 = vadd.f32 %v3676, %v3474
        %v3678 = vadd.f32 %v3677, %v3490
        %v3679 = vadd.f32 %v3678, %v3506
        %v3680 = vadd.f32 %v3679, %v3522
        %v3681 = vadd.f32 %v3283, %v3299
        %v3682 = vadd.f32 %v3681, %v3315
        %v3683 = vadd.f32 %v3682, %v3331
        %v3684 = vadd.f32 %v3683, %v3347
        %v3685 = vadd.f32 %v3684, %v3363
        %v3686 = vadd.f32 %v3685, %v3379
        %v3687 = vadd.f32 %v3686, %v3395
        %v3688 = vadd.f32 %v3687, %v3411
        %v3689 = vadd.f32 %v3688, %v3427
        %v3690 = vadd.f32 %v3689, %v3443
        %v3691 = vadd.f32 %v3690, %v3459
        %v3692 = vadd.f32 %v3691, %v3475
        %v3693 = vadd.f32 %v3692, %v3491
        %v3694 = vadd.f32 %v3693, %v3507
        %v3695 = vadd.f32 %v3694, %v3523
        %v3696 = vadd.f32 %v3284, %v3300
        %v3697 = vadd.f32 %v3696, %v3316
        %v3698 = vadd.f32 %v3697, %v3332
        %v3699 = vadd.f32 %v3698, %v3348
        %v3700 = vadd.f32 %v3699, %v3364
        %v3701 = vadd.f32 %v3700, %v3380
        %v3702 = vadd.f32 %v3701, %v3396
        %v3703 = vadd.f32 %v3702, %v3412
        %v3704 = vadd.f32 %v3703, %v3428
        %v3705 = vadd.f32 %v3704, %v3444
        %v3706 = vadd.f32 %v3705, %v3460
        %v3707 = vadd.f32 %v3706, %v3476
        %v3708 = vadd.f32 %v3707, %v3492
        %v3709 = vadd.f32 %v3708, %v3508
        %v3710 = vadd.f32 %v3709, %v3524
        %v3711 = vadd.f32 %v3285, %v3301
        %v3712 = vadd.f32 %v3711, %v3317
        %v3713 = vadd.f32 %v3712, %v3333
        %v3714 = vadd.f32 %v3713, %v3349
        %v3715 = vadd.f32 %v3714, %v3365
        %v3716 = vadd.f32 %v3715, %v3381
        %v3717 = vadd.f32 %v3716, %v3397
        %v3718 = vadd.f32 %v3717, %v3413
        %v3719 = vadd.f32 %v3718, %v3429
        %v3720 = vadd.f32 %v3719, %v3445
        %v3721 = vadd.f32 %v3720, %v3461
        %v3722 = vadd.f32 %v3721, %v3477
        %v3723 = vadd.f32 %v3722, %v3493
        %v3724 = vadd.f32 %v3723, %v3509
        %v3725 = vadd.f32 %v3724, %v3525
        %v3726 = vadd.f32 %v3286, %v3302
        %v3727 = vadd.f32 %v3726, %v3318
        %v3728 = vadd.f32 %v3727, %v3334
        %v3729 = vadd.f32 %v3728, %v3350
        %v3730 = vadd.f32 %v3729, %v3366
        %v3731 = vadd.f32 %v3730, %v3382
        %v3732 = vadd.f32 %v3731, %v3398
        %v3733 = vadd.f32 %v3732, %v3414
        %v3734 = vadd.f32 %v3733, %v3430
        %v3735 = vadd.f32 %v3734, %v3446
        %v3736 = vadd.f32 %v3735, %v3462
        %v3737 = vadd.f32 %v3736, %v3478
        %v3738 = vadd.f32 %v3737, %v3494
        %v3739 = vadd.f32 %v3738, %v3510
        %v3740 = vadd.f32 %v3739, %v3526
        %v3741 = vadd.f32 %v3287, %v3303
        %v3742 = vadd.f32 %v3741, %v3319
        %v3743 = vadd.f32 %v3742, %v3335
        %v3744 = vadd.f32 %v3743, %v3351
        %v3745 = vadd.f32 %v3744, %v3367
        %v3746 = vadd.f32 %v3745, %v3383
        %v3747 = vadd.f32 %v3746, %v3399
        %v3748 = vadd.f32 %v3747, %v3415
        %v3749 = vadd.f32 %v3748, %v3431
        %v3750 = vadd.f32 %v3749, %v3447
        %v3751 = vadd.f32 %v3750, %v3463
        %v3752 = vadd.f32 %v3751, %v3479
        %v3753 = vadd.f32 %v3752, %v3495
        %v3754 = vadd.f32 %v3753, %v3511
        %v3755 = vadd.f32 %v3754, %v3527
        %v3756 = vadd.f32 %v3288, %v3304
        %v3757 = vadd.f32 %v3756, %v3320
        %v3758 = vadd.f32 %v3757, %v3336
        %v3759 = vadd.f32 %v3758, %v3352
        %v3760 = vadd.f32 %v3759, %v3368
        %v3761 = vadd.f32 %v3760, %v3384
        %v3762 = vadd.f32 %v3761, %v3400
        %v3763 = vadd.f32 %v3762, %v3416
        %v3764 = vadd.f32 %v3763, %v3432
        %v3765 = vadd.f32 %v3764, %v3448
        %v3766 = vadd.f32 %v3765, %v3464
        %v3767 = vadd.f32 %v3766, %v3480
        %v3768 = vadd.f32 %v3767, %v3496
        %v3769 = vadd.f32 %v3768, %v3512
        %v3770 = vadd.f32 %v3769, %v3528
        %v3771 = vadd.f32 %v3289, %v3305
        %v3772 = vadd.f32 %v3771, %v3321
        %v3773 = vadd.f32 %v3772, %v3337
        %v3774 = vadd.f32 %v3773, %v3353
        %v3775 = vadd.f32 %v3774, %v3369
        %v3776 = vadd.f32 %v3775, %v3385
        %v3777 = vadd.f32 %v3776, %v3401
        %v3778 = vadd.f32 %v3777, %v3417
        %v3779 = vadd.f32 %v3778, %v3433
        %v3780 = vadd.f32 %v3779, %v3449
        %v3781 = vadd.f32 %v3780, %v3465
        %v3782 = vadd.f32 %v3781, %v3481
        %v3783 = vadd.f32 %v3782, %v3497
        %v3784 = vadd.f32 %v3783, %v3513
        %v3785 = vadd.f32 %v3784, %v3529
        %v3786 = vadd.f32 %v3530, %v3560
        %v3787 = vadd.f32 %v3531, %v3575
        %v3788 = vadd.f32 %v3532, %v3590
        %v3789 = vadd.f32 %v3533, %v3605
        %v3790 = vadd.f32 %v3534, %v3620
        %v3791 = vadd.f32 %v3535, %v3635
        %v3792 = vadd.f32 %v3536, %v3650
        %v3793 = vadd.f32 %v3537, %v3665
        %v3794 = vadd.f32 %v3538, %v3680
        %v3795 = vadd.f32 %v3539, %v3695
        %v3796 = vadd.f32 %v3540, %v3710
        %v3797 = vadd.f32 %v3541, %v3725
        %v3798 = vadd.f32 %v3542, %v3740
        %v3799 = vadd.f32 %v3543, %v3755
        %v3800 = vadd.f32 %v3544, %v3770
        %v3801 = vadd.f32 %v3545, %v3785
        %3802 = vst [vmem:[#allocation2] sm:$0xff] %v3786
        %3803 = vst [vmem:[#allocation2 + $0x8] sm:$0xff] %v3787
        %3804 = vst [vmem:[#allocation2 + $0x10] sm:$0xff] %v3788
        %3805 = vst [vmem:[#allocation2 + $0x18] sm:$0xff] %v3789
        %3806 = vst [vmem:[#allocation2 + $0x20] sm:$0xff] %v3790
        %3807 = vst [vmem:[#allocation2 + $0x28] sm:$0xff] %v3791
        %3808 = vst [vmem:[#allocation2 + $0x30] sm:$0xff] %v3792
        %3809 = vst [vmem:[#allocation2 + $0x38] sm:$0xff] %v3793
        %3810 = vst [vmem:[#allocation2 + $0x40] sm:$0xff] %v3794
        %3811 = vst [vmem:[#allocation2 + $0x48] sm:$0xff] %v3795
        %3812 = vst [vmem:[#allocation2 + $0x50] sm:$0xff] %v3796
        %3813 = vst [vmem:[#allocation2 + $0x58] sm:$0xff] %v3797
        %3814 = vst [vmem:[#allocation2 + $0x60] sm:$0xff] %v3798
        %3815 = vst [vmem:[#allocation2 + $0x68] sm:$0xff] %v3799
        %3816 = vst [vmem:[#allocation2 + $0x70] sm:$0xff] %v3800
        %3817 = vst [vmem:[#allocation2 + $0x78] sm:$0xff] %v3801
        %v3818 = vld [vmem:[#allocation3] sm:$0x1]
        %v3819 = vadd.f32 %v616, %v617
        %v3820 = vrot.slane %v3819, 4
        %v3821 = vadd.f32 %v3819, %v3820
        %v3822 = vrot.slane %v3821, 2
        %v3823 = vadd.f32 %v3821, %v3822
        %v3824 = vrot.slane %v3823, 1
        %v3825 = vadd.f32 %v3823, %v3824
        %v3826 = vadd.f32 %v3818, %v3825
        %3827 = vst [vmem:[#allocation3] sm:$0x1] %v3826
        // Predicated region
        $region49: #{tpu_custom_call.1} parent=31 // pred_check
          %p3828 = pneg %p319
        $region50: #{tpu_custom_call.1} parent=31 // pred_check_branch
          %3830 = sbr.rel (%p3828) target = $region52
        $region51: #{tpu_custom_call.1} parent=31 // pred_region
          %v3831 = vld [vmem:[#allocation2] sm:$0xff]
          %v3832 = vld [vmem:[#allocation2 + $0x8] sm:$0xff]
          %v3833 = vld [vmem:[#allocation2 + $0x10] sm:$0xff]
          %v3834 = vld [vmem:[#allocation2 + $0x18] sm:$0xff]
          %v3835 = vld [vmem:[#allocation2 + $0x20] sm:$0xff]
          %v3836 = vld [vmem:[#allocation2 + $0x28] sm:$0xff]
          %v3837 = vld [vmem:[#allocation2 + $0x30] sm:$0xff]
          %v3838 = vld [vmem:[#allocation2 + $0x38] sm:$0xff]
          %v3839 = vld [vmem:[#allocation2 + $0x40] sm:$0xff]
          %v3840 = vld [vmem:[#allocation2 + $0x48] sm:$0xff]
          %v3841 = vld [vmem:[#allocation2 + $0x50] sm:$0xff]
          %v3842 = vld [vmem:[#allocation2 + $0x58] sm:$0xff]
          %v3843 = vld [vmem:[#allocation2 + $0x60] sm:$0xff]
          %v3844 = vld [vmem:[#allocation2 + $0x68] sm:$0xff]
          %v3845 = vld [vmem:[#allocation2 + $0x70] sm:$0xff]
          %v3846 = vld [vmem:[#allocation2 + $0x78] sm:$0xff]
          %3847 = vadd.xlane.f32.xlu0 %v3831
          %v3848 = vpop.xlane.xlu0 %3847
          %3849 = vadd.xlane.f32.xlu0 %v3832
          %v3850 = vpop.xlane.xlu0 %3849
          %3851 = vadd.xlane.f32.xlu0 %v3833
          %v3852 = vpop.xlane.xlu0 %3851
          %3853 = vadd.xlane.f32.xlu0 %v3834
          %v3854 = vpop.xlane.xlu0 %3853
          %3855 = vadd.xlane.f32.xlu0 %v3835
          %v3856 = vpop.xlane.xlu0 %3855
          %3857 = vadd.xlane.f32.xlu0 %v3836
          %v3858 = vpop.xlane.xlu0 %3857
          %3859 = vadd.xlane.f32.xlu0 %v3837
          %v3860 = vpop.xlane.xlu0 %3859
          %3861 = vadd.xlane.f32.xlu0 %v3838
          %v3862 = vpop.xlane.xlu0 %3861
          %3863 = vadd.xlane.f32.xlu0 %v3839
          %v3864 = vpop.xlane.xlu0 %3863
          %3865 = vadd.xlane.f32.xlu0 %v3840
          %v3866 = vpop.xlane.xlu0 %3865
          %3867 = vadd.xlane.f32.xlu0 %v3841
          %v3868 = vpop.xlane.xlu0 %3867
          %3869 = vadd.xlane.f32.xlu0 %v3842
          %v3870 = vpop.xlane.xlu0 %3869
          %3871 = vadd.xlane.f32.xlu0 %v3843
          %v3872 = vpop.xlane.xlu0 %3871
          %3873 = vadd.xlane.f32.xlu0 %v3844
          %v3874 = vpop.xlane.xlu0 %3873
          %3875 = vadd.xlane.f32.xlu0 %v3845
          %v3876 = vpop.xlane.xlu0 %3875
          %3877 = vadd.xlane.f32.xlu0 %v3846
          %v3878 = vpop.xlane.xlu0 %3877
          %v3879 = vld [vmem:[#allocation3] sm:$0x1]
          %v3881 = vlaneseq
          %v3882 = vshrl.u32 %v3881, 7
          %v3883 = vsub.s32 0, %v3882
          %v3884 = vrot.slane %v3879, %v3883
          %3886 = vbcast.lane.b32.xlu0 %v3884, 256
          %v3887 = vpop.permute.xlu0 %3886
          %s3889 = sor.u32 256, 8
          %3890 = vbcast.lane.b32.xlu0 %v3884, %s3889
          %v3891 = vpop.permute.xlu0 %3890
          %s3893 = sor.u32 256, 16
          %3894 = vbcast.lane.b32.xlu0 %v3884, %s3893
          %v3895 = vpop.permute.xlu0 %3894
          %s3897 = sor.u32 256, 24
          %3898 = vbcast.lane.b32.xlu0 %v3884, %s3897
          %v3899 = vpop.permute.xlu0 %3898
          %s3901 = sor.u32 256, 32
          %3902 = vbcast.lane.b32.xlu0 %v3884, %s3901
          %v3903 = vpop.permute.xlu0 %3902
          %s3905 = sor.u32 256, 40
          %3906 = vbcast.lane.b32.xlu0 %v3884, %s3905
          %v3907 = vpop.permute.xlu0 %3906
          %s3909 = sor.u32 256, 48
          %3910 = vbcast.lane.b32.xlu0 %v3884, %s3909
          %v3911 = vpop.permute.xlu0 %3910
          %s3913 = sor.u32 256, 56
          %3914 = vbcast.lane.b32.xlu0 %v3884, %s3913
          %v3915 = vpop.permute.xlu0 %3914
          %s3917 = sor.u32 256, 64
          %3918 = vbcast.lane.b32.xlu0 %v3884, %s3917
          %v3919 = vpop.permute.xlu0 %3918
          %s3921 = sor.u32 256, 72
          %3922 = vbcast.lane.b32.xlu0 %v3884, %s3921
          %v3923 = vpop.permute.xlu0 %3922
          %s3925 = sor.u32 256, 80
          %3926 = vbcast.lane.b32.xlu0 %v3884, %s3925
          %v3927 = vpop.permute.xlu0 %3926
          %s3929 = sor.u32 256, 88
          %3930 = vbcast.lane.b32.xlu0 %v3884, %s3929
          %v3931 = vpop.permute.xlu0 %3930
          %s3933 = sor.u32 256, 96
          %3934 = vbcast.lane.b32.xlu0 %v3884, %s3933
          %v3935 = vpop.permute.xlu0 %3934
          %s3937 = sor.u32 256, 104
          %3938 = vbcast.lane.b32.xlu0 %v3884, %s3937
          %v3939 = vpop.permute.xlu0 %3938
          %s3941 = sor.u32 256, 112
          %3942 = vbcast.lane.b32.xlu0 %v3884, %s3941
          %v3943 = vpop.permute.xlu0 %3942
          %s3945 = sor.u32 256, 120
          %3946 = vbcast.lane.b32.xlu0 %v3884, %s3945
          %v3947 = vpop.permute.xlu0 %3946
          %v3964 = vadd.f32 %v3848, %v3887
          %v3965 = vadd.f32 %v3850, %v3891
          %v3966 = vadd.f32 %v3852, %v3895
          %v3967 = vadd.f32 %v3854, %v3899
          %v3968 = vadd.f32 %v3856, %v3903
          %v3969 = vadd.f32 %v3858, %v3907
          %v3970 = vadd.f32 %v3860, %v3911
          %v3971 = vadd.f32 %v3862, %v3915
          %v3972 = vadd.f32 %v3864, %v3919
          %v3973 = vadd.f32 %v3866, %v3923
          %v3974 = vadd.f32 %v3868, %v3927
          %v3975 = vadd.f32 %v3870, %v3931
          %v3976 = vadd.f32 %v3872, %v3935
          %v3977 = vadd.f32 %v3874, %v3939
          %v3978 = vadd.f32 %v3876, %v3943
          %v3979 = vadd.f32 %v3878, %v3947
          %v3980 = vmul.f32 %v3964, 0.00048828125
          %v3981 = vmul.f32 %v3965, 0.00048828125
          %v3982 = vmul.f32 %v3966, 0.00048828125
          %v3983 = vmul.f32 %v3967, 0.00048828125
          %v3984 = vmul.f32 %v3968, 0.00048828125
          %v3985 = vmul.f32 %v3969, 0.00048828125
          %v3986 = vmul.f32 %v3970, 0.00048828125
          %v3987 = vmul.f32 %v3971, 0.00048828125
          %v3988 = vmul.f32 %v3972, 0.00048828125
          %v3989 = vmul.f32 %v3973, 0.00048828125
          %v3990 = vmul.f32 %v3974, 0.00048828125
          %v3991 = vmul.f32 %v3975, 0.00048828125
          %v3992 = vmul.f32 %v3976, 0.00048828125
          %v3993 = vmul.f32 %v3977, 0.00048828125
          %v3994 = vmul.f32 %v3978, 0.00048828125
          %v3995 = vmul.f32 %v3979, 0.00048828125
          %4012 = vset.pattern.permute.xlu0 0
          %4013 = vperm.xlu0 %4012, %v3980
          %v4014 = vpop.permute.xlu0 %4013
          %4015 = vset.pattern.permute.xlu0 0
          %4016 = vperm.xlu0 %4015, %v3981
          %v4017 = vpop.permute.xlu0 %4016
          %4018 = vset.pattern.permute.xlu0 0
          %4019 = vperm.xlu0 %4018, %v3982
          %v4020 = vpop.permute.xlu0 %4019
          %4021 = vset.pattern.permute.xlu0 0
          %4022 = vperm.xlu0 %4021, %v3983
          %v4023 = vpop.permute.xlu0 %4022
          %4024 = vset.pattern.permute.xlu0 0
          %4025 = vperm.xlu0 %4024, %v3984
          %v4026 = vpop.permute.xlu0 %4025
          %4027 = vset.pattern.permute.xlu0 0
          %4028 = vperm.xlu0 %4027, %v3985
          %v4029 = vpop.permute.xlu0 %4028
          %4030 = vset.pattern.permute.xlu0 0
          %4031 = vperm.xlu0 %4030, %v3986
          %v4032 = vpop.permute.xlu0 %4031
          %4033 = vset.pattern.permute.xlu0 0
          %4034 = vperm.xlu0 %4033, %v3987
          %v4035 = vpop.permute.xlu0 %4034
          %4036 = vset.pattern.permute.xlu0 0
          %4037 = vperm.xlu0 %4036, %v3988
          %v4038 = vpop.permute.xlu0 %4037
          %4039 = vset.pattern.permute.xlu0 0
          %4040 = vperm.xlu0 %4039, %v3989
          %v4041 = vpop.permute.xlu0 %4040
          %4042 = vset.pattern.permute.xlu0 0
          %4043 = vperm.xlu0 %4042, %v3990
          %v4044 = vpop.permute.xlu0 %4043
          %4045 = vset.pattern.permute.xlu0 0
          %4046 = vperm.xlu0 %4045, %v3991
          %v4047 = vpop.permute.xlu0 %4046
          %4048 = vset.pattern.permute.xlu0 0
          %4049 = vperm.xlu0 %4048, %v3992
          %v4050 = vpop.permute.xlu0 %4049
          %4051 = vset.pattern.permute.xlu0 0
          %4052 = vperm.xlu0 %4051, %v3993
          %v4053 = vpop.permute.xlu0 %4052
          %4054 = vset.pattern.permute.xlu0 0
          %4055 = vperm.xlu0 %4054, %v3994
          %v4056 = vpop.permute.xlu0 %4055
          %4057 = vset.pattern.permute.xlu0 0
          %4058 = vperm.xlu0 %4057, %v3995
          %v4059 = vpop.permute.xlu0 %4058
          %v4060 = vlaneseq
          %v4061 = vand.u32 %v4060, 127
          %v4062 = vlaneseq
          %v4063 = vshrl.u32 %v4062, 7
          %v4064 = vsub.s32 %v4061, %v4063
          %v4065 = vrot.slane %v4014, %v4064
          %v4066 = vadd.s32 %v4061, 4294967288
          %v4067 = vlaneseq
          %v4068 = vshrl.u32 %v4067, 7
          %v4069 = vsub.s32 %v4066, %v4068
          %v4070 = vrot.slane %v4017, %v4069
          %vm4071 = vcmask 130112
          %v4072 = vsel %vm4071, %v4070, %v4065
          %v4073 = vadd.s32 %v4061, 4294967280
          %v4074 = vlaneseq
          %v4075 = vshrl.u32 %v4074, 7
          %v4076 = vsub.s32 %v4073, %v4075
          %v4077 = vrot.slane %v4020, %v4076
          %vm4078 = vcmask 195712
          %v4079 = vsel %vm4078, %v4077, %v4072
          %v4080 = vadd.s32 %v4061, 4294967272
          %v4081 = vlaneseq
          %v4082 = vshrl.u32 %v4081, 7
          %v4083 = vsub.s32 %v4080, %v4082
          %v4084 = vrot.slane %v4023, %v4083
          %vm4085 = vcmask 261312
          %v4086 = vsel %vm4085, %v4084, %v4079
          %v4087 = vadd.s32 %v4061, 4294967264
          %v4088 = vlaneseq
          %v4089 = vshrl.u32 %v4088, 7
          %v4090 = vsub.s32 %v4087, %v4089
          %v4091 = vrot.slane %v4026, %v4090
          %vm4092 = vcmask 326912
          %v4093 = vsel %vm4092, %v4091, %v4086
          %v4094 = vadd.s32 %v4061, 4294967256
          %v4095 = vlaneseq
          %v4096 = vshrl.u32 %v4095, 7
          %v4097 = vsub.s32 %v4094, %v4096
          %v4098 = vrot.slane %v4029, %v4097
          %vm4099 = vcmask 392512
          %v4100 = vsel %vm4099, %v4098, %v4093
          %v4101 = vadd.s32 %v4061, 4294967248
          %v4102 = vlaneseq
          %v4103 = vshrl.u32 %v4102, 7
          %v4104 = vsub.s32 %v4101, %v4103
          %v4105 = vrot.slane %v4032, %v4104
          %vm4106 = vcmask 458112
          %v4107 = vsel %vm4106, %v4105, %v4100
          %v4108 = vadd.s32 %v4061, 4294967240
          %v4109 = vlaneseq
          %v4110 = vshrl.u32 %v4109, 7
          %v4111 = vsub.s32 %v4108, %v4110
          %v4112 = vrot.slane %v4035, %v4111
          %vm4113 = vcmask 523712
          %v4114 = vsel %vm4113, %v4112, %v4107
          %v4115 = vadd.s32 %v4061, 4294967232
          %v4116 = vlaneseq
          %v4117 = vshrl.u32 %v4116, 7
          %v4118 = vsub.s32 %v4115, %v4117
          %v4119 = vrot.slane %v4038, %v4118
          %vm4120 = vcmask 589312
          %v4121 = vsel %vm4120, %v4119, %v4114
          %v4122 = vadd.s32 %v4061, 4294967224
          %v4123 = vlaneseq
          %v4124 = vshrl.u32 %v4123, 7
          %v4125 = vsub.s32 %v4122, %v4124
          %v4126 = vrot.slane %v4041, %v4125
          %vm4127 = vcmask 654912
          %v4128 = vsel %vm4127, %v4126, %v4121
          %v4129 = vadd.s32 %v4061, 4294967216
          %v4130 = vlaneseq
          %v4131 = vshrl.u32 %v4130, 7
          %v4132 = vsub.s32 %v4129, %v4131
          %v4133 = vrot.slane %v4044, %v4132
          %vm4134 = vcmask 720512
          %v4135 = vsel %vm4134, %v4133, %v4128
          %v4136 = vadd.s32 %v4061, 4294967208
          %v4137 = vlaneseq
          %v4138 = vshrl.u32 %v4137, 7
          %v4139 = vsub.s32 %v4136, %v4138
          %v4140 = vrot.slane %v4047, %v4139
          %vm4141 = vcmask 786112
          %v4142 = vsel %vm4141, %v4140, %v4135
          %v4143 = vadd.s32 %v4061, 4294967200
          %v4144 = vlaneseq
          %v4145 = vshrl.u32 %v4144, 7
          %v4146 = vsub.s32 %v4143, %v4145
          %v4147 = vrot.slane %v4050, %v4146
          %vm4148 = vcmask 851712
          %v4149 = vsel %vm4148, %v4147, %v4142
          %v4150 = vadd.s32 %v4061, 4294967192
          %v4151 = vlaneseq
          %v4152 = vshrl.u32 %v4151, 7
          %v4153 = vsub.s32 %v4150, %v4152
          %v4154 = vrot.slane %v4053, %v4153
          %vm4155 = vcmask 917312
          %v4156 = vsel %vm4155, %v4154, %v4149
          %v4157 = vadd.s32 %v4061, 4294967184
          %v4158 = vlaneseq
          %v4159 = vshrl.u32 %v4158, 7
          %v4160 = vsub.s32 %v4157, %v4159
          %v4161 = vrot.slane %v4056, %v4160
          %vm4162 = vcmask 982912
          %v4163 = vsel %vm4162, %v4161, %v4156
          %v4164 = vadd.s32 %v4061, 4294967176
          %v4165 = vlaneseq
          %v4166 = vshrl.u32 %v4165, 7
          %v4167 = vsub.s32 %v4164, %v4166
          %v4168 = vrot.slane %v4059, %v4167
          %vm4169 = vcmask 1048512
          %v4170 = vsel %vm4169, %v4168, %v4163
          %4172 = vst [vmem:[%s314] sm:$0x1] %v4170
        $region52: #{tpu_custom_call.1} parent=31 // pred_fallthru
          _
        %s4173 = sand.u32 %s127, 1
        %s4174 = scalar_lea.sflag [#allocation6], %s4173
        %s4175 = sand.u32 %s127, 1
        %s4176 = scalar_lea.vmem [#allocation10], %s4175
        // Predicated region
        $region53: #{tpu_custom_call.1} parent=31 // pred_check
          %p4177 = pneg %p137
        $region54: #{tpu_custom_call.1} parent=31 // pred_check_branch
          %4179 = sbr.rel (%p4177) target = $region56
        $region55: #{tpu_custom_call.1} parent=31 // pred_region
          %s4181 = ssub.s32 16, 16
          %4182 = vsyncadd %s4174, %s4181
          %s4183 = smul.addr %s27, 16
          %s4184 = scalar_lea.hbm %s3, %s4183
          %s4186 = sshll.u32 %s4176, 4
          %s4187 = int_to_ptr.vmem [resolvable:$true] %s4186
          %4189 = dma.vmem_to_hbm [thread:$0]  %s4187, 16, %s4184, %s4174
        $region56: #{tpu_custom_call.1} parent=31 // pred_fallthru
          _
      $region32: #{tpu_custom_call.1} parent=5 // pred_fallthru
        _
      %p4190 = scmp.le.s32.totalorder 2, %s18
      // Predicated region
      $region57: #{tpu_custom_call.1} parent=5 // pred_check
        %p4191 = pneg %p4190
      $region58: #{tpu_custom_call.1} parent=5 // pred_check_branch
        %4193 = sbr.rel (%p4191) target = $region60
      $region59: #{tpu_custom_call.1} parent=5 // pred_region
        %s4194 = ssub.s32 %s18, 2
        // Predicated region
        $region61: #{tpu_custom_call.1} parent=59 // pred_check
          %p4195 = pneg %p143
        $region62: #{tpu_custom_call.1} parent=59 // pred_check_branch
          %4197 = sbr.rel (%p4195) target = $region64
        $region63: #{tpu_custom_call.1} parent=59 // pred_region
          %s4198 = sand.u32 %s128, 1
          %s4199 = scalar_lea.sflag [#allocation6], %s4198
          %s4200 = sand.u32 %s128, 1
          %s4201 = scalar_lea.vmem [#allocation10], %s4200
          %4202 = dma.done %s4199, 16
        $region64: #{tpu_custom_call.1} parent=59 // pred_fallthru
          _
      $region60: #{tpu_custom_call.1} parent=5 // pred_fallthru
        _
    $region6: #{tpu_custom_call.1} parent=1 // loop_footer
      %s22 = sadd.s32 1, %s18
    $region7: #{tpu_custom_call.1} parent=1 // loop_footer_branch
      %17 = sbr.rel target = $region3
    $region8: #{tpu_custom_call.1} parent=1 // loop_exit
      _
    %4203 = vsyncpa [#allocation5], 1
    %s4204 = scalar_lea.sflag [#allocation5], 1
    %4205 = vsyncpa %s4204, 1
    %4206 = vsyncpa [#allocation8], 1
    %s4207 = scalar_lea.sflag [#allocation8], 1
    %4208 = vsyncpa %s4207, 1
    %4209 = vsyncpa [#allocation6], 1
    %s4210 = scalar_lea.sflag [#allocation6], 1
    %4211 = vsyncpa %s4210, 1

</llo_original>
